<compile_context>
chip_gen: v7x
topology: tpu7x:2x2x1
jax: 0.10.0
libtpu: 0.0.40
codegen_flags: <defaults>
</compile_context>

<pallas_src>
import functools
import math

import jax
import jax.numpy as jnp
import numpy as np
from jax import lax
from jax.experimental import pallas as pl
from jax.experimental.pallas import tpu as pltpu

MASK_VALUE = float(np.finfo(np.float32).min)   # torch.finfo(float32).min


# --------------------------------------------------------------------------
# Host-side (trace-time, numpy) deterministic helpers.
# --------------------------------------------------------------------------
def rope_tables_np(seq_len, dim, base=10000.0):
    """RotaryEmbedding cos/sin caches, numpy float64, shape (S, dim) each."""
    inv_freq = 1.0 / (base ** (np.arange(0, dim, 2, dtype=np.float64) / dim))
    t = np.arange(seq_len, dtype=np.float64)
    freqs = np.outer(t, inv_freq)
    emb = np.concatenate([freqs, freqs], axis=-1)
    return np.cos(emb), np.sin(emb)


def entropy_scale_np(seq_len, max_position_embeddings):
    """clip(log(1..S)/log(max_pos), min=1), numpy float64, shape (S,)."""
    s = np.log(np.arange(seq_len, dtype=np.float64) + 1.0)
    s = s / np.log(float(max_position_embeddings))
    return np.clip(s, 1.0, None)


def alibi_slopes(num_heads):
    """AlibiPositionalBias slopes, numpy float32, shape (H,)."""
    def pow2_slopes(n):
        start = 2 ** (-(2 ** (-(math.log2(n) - 3))))
        return [start * (start ** i) for i in range(n)]

    if math.log2(num_heads).is_integer():
        sl = pow2_slopes(num_heads)
    else:
        closest = 2 ** math.floor(math.log2(num_heads))
        sl = (pow2_slopes(closest)
              + pow2_slopes(2 * closest)[0::2][: num_heads - closest])
    return np.asarray(sl, np.float32)


def alibi_bias(num_heads, seq_len):
    """Dense ALiBi bias (reference only), shape (1, H, S, S) f32."""
    slopes = alibi_slopes(num_heads)
    j = np.arange(seq_len)
    dist = -np.abs(j[None, :] - j[:, None]).astype(np.float32)      # (S, S)
    bias = dist[None, :, :] * slopes[:, None, None]                 # (H, S, S)
    return jnp.asarray(bias[None], jnp.float32)                     # (1, H, S, S)


def _pick_tile(n, cap):
    """Largest divisor of n that is <= cap and a multiple of 8 (or n itself)."""
    cap = min(cap, n)
    for t in range(cap, 0, -1):
        if n % t == 0 and (t % 8 == 0 or t == n):
            return t
    return n


# --------------------------------------------------------------------------
# Kernel 1: fused QKV projection — lane-dense 2-D MXU matmul, bf16 output.
# --------------------------------------------------------------------------
def _qkv_proj_kernel(x_ref, w_ref, b_ref, o_ref):
    acc = jnp.dot(x_ref[...], w_ref[...], preferred_element_type=jnp.float32)
    o_ref[...] = (acc + b_ref[...]).astype(o_ref.dtype)


def qkv_projection(x2d_bf16, w_qkv_bf16, b_qkv_f32):
    m, d = x2d_bf16.shape
    n = w_qkv_bf16.shape[1]
    block_rows = _pick_tile(m, 512)
    return pl.pallas_call(
        _qkv_proj_kernel,
        out_shape=jax.ShapeDtypeStruct((m, n), jnp.bfloat16),
        grid=(m // block_rows,),
        in_specs=[
            pl.BlockSpec((block_rows, d), lambda i: (i, 0)),
            pl.BlockSpec((d, n), lambda i: (0, 0)),
            pl.BlockSpec((1, n), lambda i: (0, 0)),
        ],
        out_specs=pl.BlockSpec((block_rows, n), lambda i: (i, 0)),
        compiler_params=pltpu.CompilerParams(dimension_semantics=("parallel",)),
    )(x2d_bf16, w_qkv_bf16, b_qkv_f32)


# --------------------------------------------------------------------------
# Kernel 2: flash-style attention with fused RoPE / ALiBi / mask.
# Grid = (head, batch, q_tile, kv_tile); kv axis innermost + "arbitrary".
# --------------------------------------------------------------------------
def _attention_kernel(q_ref, k_ref, v_ref, rel_ref, rel2d_ref, mask_ref,
                      slope_ref, cosq_ref, sinq_ref, cosk_ref, sink_ref,
                      o_ref, m_scr, l_scr, acc_scr):
    tq, dh = q_ref.shape
    tk = k_ref.shape[0]
    half = dh // 2
    qi = pl.program_id(2)
    ki = pl.program_id(3)

    @pl.when(ki == 0)
    def _():
        m_scr[...] = jnp.full_like(m_scr, -jnp.inf)
        l_scr[...] = jnp.zeros_like(l_scr)
        acc_scr[...] = jnp.zeros_like(acc_scr)

    # RoPE K first (bf16 load -> f32 math -> bf16), then Q, to bound live
    # ranges before the MXU push.  Entropy/sqrt scaling and the rotate-half
    # sign are folded into the host-built cos/sin tables; the XLU roll is off
    # the VPU critical path.
    k32 = k_ref[...].astype(jnp.float32)
    kb = (k32 * cosk_ref[...]
          + pltpu.roll(k32, shift=half, axis=1) * sink_ref[...]).astype(jnp.bfloat16)
    q32 = q_ref[...].astype(jnp.float32)
    qb = (q32 * cosq_ref[...]
          + pltpu.roll(q32, shift=half, axis=1) * sinq_ref[...]).astype(jnp.bfloat16)

    scores = lax.dot_general(qb, kb, (((1,), (1,)), ((), ())),
                             preferred_element_type=jnp.float32)        # (tq, tk)

    # rel_pos + rel_2d_pos tiles (DMA'd) + ALiBi generated in-kernel from
    # iotas and the per-head slope scalar (VPU filler under MXU slack).
    qpos = qi * tq + lax.broadcasted_iota(jnp.int32, (tq, tk), 0)
    kpos = ki * tk + lax.broadcasted_iota(jnp.int32, (tq, tk), 1)
    alibi = -jnp.abs(kpos - qpos).astype(jnp.float32) * slope_ref[...]
    scores = scores + rel_ref[...] + rel2d_ref[...] + alibi

    # Key-padding mask from a (1, tk) int32 row (no dense (B,S,S) tensor).
    scores = jnp.where(mask_ref[...] > 0, MASK_VALUE, scores)

    # Online (flash-style) softmax across the kv grid axis, f32 state.
    m_prev = m_scr[...]
    m_new = jnp.maximum(m_prev, jnp.max(scores, axis=-1, keepdims=True))
    alpha = jnp.exp(m_prev - m_new)
    p = jnp.exp(scores - m_new)
    l_scr[...] = alpha * l_scr[...] + jnp.sum(p, axis=-1, keepdims=True)
    acc_scr[...] = alpha * acc_scr[...] + jnp.dot(
        p.astype(jnp.bfloat16), v_ref[...], preferred_element_type=jnp.float32)
    m_scr[...] = m_new

    @pl.when(ki == pl.num_programs(3) - 1)
    def _():
        # Deferred normalization: one EUP reciprocal instead of S^2 divides.
        o_ref[...] = (acc_scr[...]
                      * pl.reciprocal(l_scr[...], approx=True)).astype(o_ref.dtype)


# --------------------------------------------------------------------------
# Wrapper: full ErnieLayoutSelfAttention forward.
# --------------------------------------------------------------------------
def ernie_layout_self_attention(hidden_states, w_qkv, b_qkv, attention_mask,
                                rel_pos, rel_2d_pos, *, num_heads,
                                max_position_embeddings,
                                q_tile=256, kv_tile=512):
    b, s, d = hidden_states.shape
    h = num_heads
    dh = d // h
    assert dh % 128 == 0, "head_dim must be a multiple of 128 (lane-dense)"

    # ---- Kernel 1: fused QKV projection, bf16 output (B*S, 3D). ----
    x2d = hidden_states.reshape(b * s, d).astype(jnp.bfloat16)
    qkv = qkv_projection(x2d, w_qkv, b_qkv)

    # ---- Trace-time numpy tables: folded RoPE/scale, ALiBi slopes. ----
    cos_np, sin_np = rope_tables_np(s, dh)
    qscale = (entropy_scale_np(s, max_position_embeddings) / math.sqrt(dh))[:, None]
    sign = np.where(np.arange(dh) < dh // 2, -1.0, 1.0)[None, :]
    cos_q = jnp.asarray(cos_np * qscale, jnp.float32)          # (S, Dh)
    sin_q = jnp.asarray(sin_np * sign * qscale, jnp.float32)   # (S, Dh)
    cos_k = jnp.asarray(cos_np, jnp.float32)                   # (S, Dh)
    sin_k = jnp.asarray(sin_np * sign, jnp.float32)            # (S, Dh)
    slopes = jnp.asarray(alibi_slopes(h)).reshape(h, 1, 1)     # (H, 1, 1)

    # Key-padding mask: (B,1,1,S) bool -> compact (B,1,S) int32 row.
    # TODO(synk): arbitrary per-query (B,1,S,S) masks are not supported here.
    key_mask = attention_mask.reshape(b, 1, s).astype(jnp.int32)

    tq = _pick_tile(s, q_tile)
    tk = _pick_tile(s, kv_tile)
    nq, nk = s // tq, s // tk

    out = pl.pallas_call(
        _attention_kernel,
        out_shape=jax.ShapeDtypeStruct((b, s, d), jnp.float32),
        grid_spec=pltpu.PrefetchScalarGridSpec(
            num_scalar_prefetch=0,
            grid=(h, b, nq, nk),
            in_specs=[
                # q / k / v straight from the 2-D (B*S, 3D) qkv buffer.
                pl.BlockSpec((tq, dh), lambda hi, bi, qi, ki: (bi * nq + qi, hi)),
                pl.BlockSpec((tk, dh), lambda hi, bi, qi, ki: (bi * nk + ki, h + hi)),
                pl.BlockSpec((tk, dh), lambda hi, bi, qi, ki: (bi * nk + ki, 2 * h + hi)),
                # relative / spatial attention bias tiles.
                pl.BlockSpec((None, None, tq, tk), lambda hi, bi, qi, ki: (0, hi, qi, ki)),
                pl.BlockSpec((None, None, tq, tk), lambda hi, bi, qi, ki: (0, hi, qi, ki)),
                # compact key-padding mask row and per-head ALiBi slope.
                pl.BlockSpec((None, 1, tk), lambda hi, bi, qi, ki: (bi, 0, ki)),
                pl.BlockSpec((None, 1, 1), lambda hi, bi, qi, ki: (hi, 0, 0)),
                # folded RoPE tables.
                pl.BlockSpec((tq, dh), lambda hi, bi, qi, ki: (qi, 0)),
                pl.BlockSpec((tq, dh), lambda hi, bi, qi, ki: (qi, 0)),
                pl.BlockSpec((tk, dh), lambda hi, bi, qi, ki: (ki, 0)),
                pl.BlockSpec((tk, dh), lambda hi, bi, qi, ki: (ki, 0)),
            ],
            # Context written directly as a dh-wide column block of (B, S, D):
            # no output transpose, lane-dense stores.
            out_specs=pl.BlockSpec((None, tq, dh), lambda hi, bi, qi, ki: (bi, qi, hi)),
            scratch_shapes=[
                pltpu.VMEM((tq, 1), jnp.float32),    # running max
                pltpu.VMEM((tq, 1), jnp.float32),    # running denom
                pltpu.VMEM((tq, dh), jnp.float32),   # running context acc
            ]),
        compiler_params=pltpu.CompilerParams(
            dimension_semantics=("parallel", "parallel", "parallel", "arbitrary")),
    )(qkv, qkv, qkv, rel_pos, rel_2d_pos, key_mask, slopes,
      cos_q, sin_q, cos_k, sin_k)

    return out


# --------------------------------------------------------------------------
# Pure-JAX reference mirroring the PyTorch forward (same bf16 strategy).
# --------------------------------------------------------------------------
def reference_forward(hidden_states, params, attention_mask, rel_pos, rel_2d_pos,
                      *, num_heads, max_position_embeddings):
    b, s, d = hidden_states.shape
    h = num_heads
    dh = d // h
    wq, bq, wk, bk, wv, bv = params

    x2d = hidden_states.reshape(b * s, d).astype(jnp.bfloat16)

    def proj(w, bias):
        y = jnp.dot(x2d, w.astype(jnp.bfloat16),
                    preferred_element_type=jnp.float32) + bias
        y = y.astype(jnp.bfloat16)           # mirror the kernel's bf16 qkv buffer
        return y.astype(jnp.float32).reshape(b, s, h, dh).transpose(0, 2, 1, 3)

    q, k, v = proj(wq, bq), proj(wk, bk), proj(wv, bv)       # (B,H,S,Dh)

    cos_np, sin_np = rope_tables_np(s, dh)
    cos4 = jnp.asarray(cos_np, jnp.float32)[None, None]
    sin4 = jnp.asarray(sin_np, jnp.float32)[None, None]

    def rotate_half(x):
        return jnp.concatenate([-x[..., dh // 2:], x[..., : dh // 2]], axis=-1)

    q = q * cos4 + rotate_half(q) * sin4
    k = k * cos4 + rotate_half(k) * sin4

    ent = jnp.asarray(entropy_scale_np(s, max_position_embeddings), jnp.float32)
    q = q * ent[None, None, :, None]
    q = q / math.sqrt(dh)

    scores = jnp.einsum("bhqd,bhkd->bhqk",
                        q.astype(jnp.bfloat16), k.astype(jnp.bfloat16),
                        preferred_element_type=jnp.float32)
    scores = scores + rel_pos + rel_2d_pos + alibi_bias(h, s)
    scores = jnp.where(attention_mask, MASK_VALUE, scores)
    probs = jax.nn.softmax(scores, axis=-1)
    ctx = jnp.einsum("bhqk,bhkd->bhqd",
                     probs.astype(jnp.bfloat16), v.astype(jnp.bfloat16),
                     preferred_element_type=jnp.float32)
    return ctx.transpose(0, 2, 1, 3).reshape(b, s, d)


# --------------------------------------------------------------------------
if __name__ == "__main__":
    B, S, D, H = 2, 128, 256, 2          # hidden=256, heads=2 -> head_dim=128
    MAX_POS = 64                         # < S so the entropy scale is non-trivial

    key = jax.random.PRNGKey(0)
    ks = jax.random.split(key, 9)

    x = jax.random.normal(ks[0], (B, S, D), jnp.float32)
    wscale = 1.0 / math.sqrt(D)
    wq = jax.random.normal(ks[1], (D, D), jnp.float32) * wscale
    wk = jax.random.normal(ks[2], (D, D), jnp.float32) * wscale
    wv = jax.random.normal(ks[3], (D, D), jnp.float32) * wscale
    bq = 0.02 * jax.random.normal(ks[4], (D,), jnp.float32)
    bk = 0.02 * jax.random.normal(ks[5], (D,), jnp.float32)
    bv = 0.02 * jax.random.normal(ks[6], (D,), jnp.float32)
    params = (wq, bq, wk, bk, wv, bv)

    # Fused QKV weights built once OUTSIDE the jitted hot path.
    w_qkv = jnp.concatenate([wq, wk, wv], axis=1).astype(jnp.bfloat16)        # (D, 3D)
    b_qkv = jnp.concatenate([bq, bk, bv], axis=0).reshape(1, 3 * D)
    b_qkv = b_qkv.astype(jnp.float32)

    rel_pos = 0.1 * jax.random.normal(ks[7], (1, H, S, S), jnp.float32)
    rel_2d_pos = 0.1 * jax.random.normal(ks[8], (1, H, S, S), jnp.float32)

    # Padding-style boolean attention mask (True == masked out), (B, 1, 1, S).
    lengths = jnp.array([S, 3 * S // 4], jnp.int32)
    key_pos = jnp.arange(S)[None, None, None, :]
    attention_mask = key_pos >= lengths[:, None, None, None]

    fwd = jax.jit(functools.partial(
        ernie_layout_self_attention,
        num_heads=H, max_position_embeddings=MAX_POS))

    out = jax.block_until_ready(fwd(x, w_qkv, b_qkv, attention_mask,
                                    rel_pos, rel_2d_pos))
    assert out.shape == (B, S, D)

    ref = jax.block_until_ready(reference_forward(
        x, params, attention_mask, rel_pos, rel_2d_pos,
        num_heads=H, max_position_embeddings=MAX_POS))

    max_err = float(jnp.max(jnp.abs(out - ref)))
    if not jnp.allclose(out, ref, atol=5e-3, rtol=5e-3):
        raise AssertionError(
            f"Pallas kernel mismatch vs reference, max abs err={max_err}")

    print("KERNEL_OK")
</pallas_src>

<mosaic_0001>
module attributes {stable_mosaic.version = 11 : i64} {
  func.func @_qkv_proj_kernel(%arg0: i32, %arg1: memref<256x256xbf16, #tpu.memory_space<vmem>>, %arg2: memref<256x768xbf16, #tpu.memory_space<vmem>>, %arg3: memref<1x768xf32, #tpu.memory_space<vmem>>, %arg4: memref<256x768xbf16, #tpu.memory_space<vmem>>) attributes {dimension_semantics = [#tpu.dimension_semantics<parallel>], iteration_bounds = array<i64: 1>, scalar_prefetch = 0 : i64, scratch_operands = 0 : i64, tpu.core_type = #tpu.core_type<tc>, window_params = [{transform_indices = @transform_0, window_bounds = array<i64: 256, 256>}, {pipeline_mode = #tpu.pipeline_mode<synchronous>, transform_indices = @transform_1, window_bounds = array<i64: 256, 768>}, {pipeline_mode = #tpu.pipeline_mode<synchronous>, transform_indices = @transform_2, window_bounds = array<i64: 1, 768>}, {transform_indices = @transform_3, window_bounds = array<i64: 256, 768>}]} {
    %c0 = arith.constant 0 : index
    %c0_0 = arith.constant 0 : index
    %0 = vector.load %arg1[%c0, %c0_0] : memref<256x256xbf16, #tpu.memory_space<vmem>>, vector<256x256xbf16>
    %c0_1 = arith.constant 0 : index
    %c0_2 = arith.constant 0 : index
    %1 = vector.load %arg2[%c0_1, %c0_2] : memref<256x768xbf16, #tpu.memory_space<vmem>>, vector<256x768xbf16>
    %cst = arith.constant dense<0.000000e+00> : vector<256x768xf32>
    %2 = tpu.matmul %0, %1, %cst {dimension_numbers = #tpu.dot_dimension_numbers<[1], [0], [0], [1], [0, 0, 1, 1], [], []>} : vector<256x256xbf16>, vector<256x768xbf16>, vector<256x768xf32> -> vector<256x768xf32>
    %c0_3 = arith.constant 0 : index
    %c0_4 = arith.constant 0 : index
    %3 = vector.load %arg3[%c0_3, %c0_4] : memref<1x768xf32, #tpu.memory_space<vmem>>, vector<1x768xf32>
    %4 = vector.broadcast %3 : vector<1x768xf32> to vector<256x768xf32>
    %5 = arith.addf %2, %4 : vector<256x768xf32>
    %6 = arith.truncf %5 : vector<256x768xf32> to vector<256x768xbf16>
    %c0_5 = arith.constant 0 : index
    %c0_6 = arith.constant 0 : index
    %7 = vector.load %arg4[%c0_5, %c0_6] : memref<256x768xbf16, #tpu.memory_space<vmem>>, vector<256x768xbf16>
    tpu.vector_store %arg4[%c0_5, %c0_6], %6 {strides = array<i32>} : memref<256x768xbf16, #tpu.memory_space<vmem>>, vector<256x768xbf16>,
    return
  }
  func.func @transform_0(%arg0: i32) -> (i32, i32) {
    %c0_i32 = arith.constant 0 : i32
    %c0_i32_0 = arith.constant 0 : i32
    return %arg0, %c0_i32 : i32, i32
  }
  func.func @transform_1(%arg0: i32) -> (i32, i32) {
    %c0_i32 = arith.constant 0 : i32
    %c0_i32_0 = arith.constant 0 : i32
    %c0_i32_1 = arith.constant 0 : i32
    return %c0_i32, %c0_i32_0 : i32, i32
  }
  func.func @transform_2(%arg0: i32) -> (i32, i32) {
    %c0_i32 = arith.constant 0 : i32
    %c0_i32_0 = arith.constant 0 : i32
    %c0_i32_1 = arith.constant 0 : i32
    return %c0_i32, %c0_i32_0 : i32, i32
  }
  func.func @transform_3(%arg0: i32) -> (i32, i32) {
    %c0_i32 = arith.constant 0 : i32
    %c0_i32_0 = arith.constant 0 : i32
    return %arg0, %c0_i32 : i32, i32
  }
}

module attributes {stable_mosaic.version = 11 : i64} {
  func.func @_attention_kernel(%arg0: i32, %arg1: i32, %arg2: i32, %arg3: i32, %arg4: memref<128x128xbf16, #tpu.memory_space<vmem>>, %arg5: memref<128x128xbf16, #tpu.memory_space<vmem>>, %arg6: memref<128x128xbf16, #tpu.memory_space<vmem>>, %arg7: memref<1x1x128x128xf32, #tpu.memory_space<vmem>>, %arg8: memref<1x1x128x128xf32, #tpu.memory_space<vmem>>, %arg9: memref<1x1x128xi32, #tpu.memory_space<vmem>>, %arg10: memref<1x1x1xf32, #tpu.memory_space<vmem>>, %arg11: memref<128x128xf32, #tpu.memory_space<vmem>>, %arg12: memref<128x128xf32, #tpu.memory_space<vmem>>, %arg13: memref<128x128xf32, #tpu.memory_space<vmem>>, %arg14: memref<128x128xf32, #tpu.memory_space<vmem>>, %arg15: memref<1x128x128xf32, #tpu.memory_space<vmem>>, %arg16: memref<128x1xf32, #tpu.memory_space<vmem>>, %arg17: memref<128x1xf32, #tpu.memory_space<vmem>>, %arg18: memref<128x128xf32, #tpu.memory_space<vmem>>) attributes {dimension_semantics = [#tpu.dimension_semantics<parallel>, #tpu.dimension_semantics<parallel>, #tpu.dimension_semantics<parallel>, #tpu.dimension_semantics<arbitrary>], iteration_bounds = array<i64: 2, 2, 1, 1>, scalar_prefetch = 0 : i64, scratch_operands = 3 : i64, tpu.core_type = #tpu.core_type<tc>, window_params = [{transform_indices = @transform_0, window_bounds = array<i64: 128, 128>}, {transform_indices = @transform_1, window_bounds = array<i64: 128, 128>}, {transform_indices = @transform_2, window_bounds = array<i64: 128, 128>}, {transform_indices = @transform_3, window_bounds = array<i64: 1, 1, 128, 128>}, {transform_indices = @transform_4, window_bounds = array<i64: 1, 1, 128, 128>}, {transform_indices = @transform_5, window_bounds = array<i64: 1, 1, 128>}, {transform_indices = @transform_6, window_bounds = array<i64: 1, 1, 1>}, {transform_indices = @transform_7, window_bounds = array<i64: 128, 128>}, {transform_indices = @transform_8, window_bounds = array<i64: 128, 128>}, {transform_indices = @transform_9, window_bounds = array<i64: 128, 128>}, {transform_indices = @transform_10, window_bounds = array<i64: 128, 128>}, {transform_indices = @transform_11, window_bounds = array<i64: 1, 128, 128>}]} {
    %c0_i32 = arith.constant 0 : i32
    %0 = arith.cmpi eq, %arg3, %c0_i32 : i32
    %1 = arith.extui %0 : i1 to i32
    %c0_i32_0 = arith.constant 0 : i32
    %2 = arith.cmpi ne, %1, %c0_i32_0 : i32
    scf.if %2 {
      %cst_50 = arith.constant 0xFF800000 : f32
      %81 = vector.broadcast %cst_50 : f32 to vector<128x1xf32>
      %c0_51 = arith.constant 0 : index
      %c0_52 = arith.constant 0 : index
      %82 = vector.load %arg16[%c0_51, %c0_52] : memref<128x1xf32, #tpu.memory_space<vmem>>, vector<128x1xf32>
      tpu.vector_store %arg16[%c0_51, %c0_52], %81 {strides = array<i32>} : memref<128x1xf32, #tpu.memory_space<vmem>>, vector<128x1xf32>,
      %cst_53 = arith.constant 0.000000e+00 : f32
      %83 = vector.broadcast %cst_53 : f32 to vector<128x1xf32>
      %c0_54 = arith.constant 0 : index
      %c0_55 = arith.constant 0 : index
      %84 = vector.load %arg17[%c0_54, %c0_55] : memref<128x1xf32, #tpu.memory_space<vmem>>, vector<128x1xf32>
      tpu.vector_store %arg17[%c0_54, %c0_55], %83 {strides = array<i32>} : memref<128x1xf32, #tpu.memory_space<vmem>>, vector<128x1xf32>,
      %cst_56 = arith.constant 0.000000e+00 : f32
      %85 = vector.broadcast %cst_56 : f32 to vector<128x128xf32>
      %c0_57 = arith.constant 0 : index
      %c0_58 = arith.constant 0 : index
      %86 = vector.load %arg18[%c0_57, %c0_58] : memref<128x128xf32, #tpu.memory_space<vmem>>, vector<128x128xf32>
      tpu.vector_store %arg18[%c0_57, %c0_58], %85 {strides = array<i32>} : memref<128x128xf32, #tpu.memory_space<vmem>>, vector<128x128xf32>,
    } else {
    }
    %c0 = arith.constant 0 : index
    %c0_1 = arith.constant 0 : index
    %3 = vector.load %arg5[%c0, %c0_1] : memref<128x128xbf16, #tpu.memory_space<vmem>>, vector<128x128xbf16>
    %4 = arith.extf %3 : vector<128x128xbf16> to vector<128x128xf32>
    %c0_2 = arith.constant 0 : index
    %c0_3 = arith.constant 0 : index
    %5 = vector.load %arg13[%c0_2, %c0_3] : memref<128x128xf32, #tpu.memory_space<vmem>>, vector<128x128xf32>
    %6 = arith.mulf %4, %5 : vector<128x128xf32>
    %c64_i32 = arith.constant 64 : i32
    %7 = tpu.dynamic_rotate %4 by %c64_i32 dim 1 : vector<128x128xf32>, i32 -> vector<128x128xf32>
    %c0_4 = arith.constant 0 : index
    %c0_5 = arith.constant 0 : index
    %8 = vector.load %arg14[%c0_4, %c0_5] : memref<128x128xf32, #tpu.memory_space<vmem>>, vector<128x128xf32>
    %9 = arith.mulf %7, %8 : vector<128x128xf32>
    %10 = arith.addf %6, %9 : vector<128x128xf32>
    %11 = arith.truncf %10 : vector<128x128xf32> to vector<128x128xbf16>
    %c0_6 = arith.constant 0 : index
    %c0_7 = arith.constant 0 : index
    %12 = vector.load %arg4[%c0_6, %c0_7] : memref<128x128xbf16, #tpu.memory_space<vmem>>, vector<128x128xbf16>
    %13 = arith.extf %12 : vector<128x128xbf16> to vector<128x128xf32>
    %c0_8 = arith.constant 0 : index
    %c0_9 = arith.constant 0 : index
    %14 = vector.load %arg11[%c0_8, %c0_9] : memref<128x128xf32, #tpu.memory_space<vmem>>, vector<128x128xf32>
    %15 = arith.mulf %13, %14 : vector<128x128xf32>
    %c64_i32_10 = arith.constant 64 : i32
    %16 = tpu.dynamic_rotate %13 by %c64_i32_10 dim 1 : vector<128x128xf32>, i32 -> vector<128x128xf32>
    %c0_11 = arith.constant 0 : index
    %c0_12 = arith.constant 0 : index
    %17 = vector.load %arg12[%c0_11, %c0_12] : memref<128x128xf32, #tpu.memory_space<vmem>>, vector<128x128xf32>
    %18 = arith.mulf %16, %17 : vector<128x128xf32>
    %19 = arith.addf %15, %18 : vector<128x128xf32>
    %20 = arith.truncf %19 : vector<128x128xf32> to vector<128x128xbf16>
    %cst = arith.constant dense<0.000000e+00> : vector<128x128xf32>
    %21 = tpu.matmul %20, %11, %cst {dimension_numbers = #tpu.dot_dimension_numbers<[1], [1], [0], [0], [0, 0, 1, 0], [], []>} : vector<128x128xbf16>, vector<128x128xbf16>, vector<128x128xf32> -> vector<128x128xf32>
    %c128_i32 = arith.constant 128 : i32
    %22 = arith.muli %arg2, %c128_i32 : i32
    %23 = tpu.iota {dimensions = array<i32: 0>} : vector<128x128xi32>
    %24 = vector.broadcast %22 : i32 to vector<128x128xi32>
    %25 = arith.addi %24, %23 : vector<128x128xi32>
    %c128_i32_13 = arith.constant 128 : i32
    %26 = arith.muli %arg3, %c128_i32_13 : i32
    %27 = tpu.iota {dimensions = array<i32: 1>} : vector<128x128xi32>
    %28 = vector.broadcast %26 : i32 to vector<128x128xi32>
    %29 = arith.addi %28, %27 : vector<128x128xi32>
    %30 = arith.subi %29, %25 : vector<128x128xi32>
    %31 = math.absi %30 : vector<128x128xi32>
    %32 = arith.sitofp %31 : vector<128x128xi32> to vector<128x128xf32>
    %cst_14 = arith.constant 0.000000e+00 : f32
    %33 = vector.broadcast %cst_14 : f32 to vector<128x128xf32>
    %34 = arith.subf %33, %32 : vector<128x128xf32>
    %c0_15 = arith.constant 0 : index
    %c0_16 = arith.constant 0 : index
    %c0_17 = arith.constant 0 : index
    %35 = vector.load %arg10[%c0_15, %c0_16, %c0_17] : memref<1x1x1xf32, #tpu.memory_space<vmem>>, vector<1x1x1xf32>
    %36 = vector.shape_cast %35 : vector<1x1x1xf32> to vector<1x1xf32>
    %37 = vector.broadcast %36 : vector<1x1xf32> to vector<128x128xf32>
    %38 = arith.mulf %34, %37 : vector<128x128xf32>
    %c0_18 = arith.constant 0 : index
    %c0_19 = arith.constant 0 : index
    %c0_20 = arith.constant 0 : index
    %c0_21 = arith.constant 0 : index
    %39 = vector.load %arg7[%c0_18, %c0_19, %c0_20, %c0_21] : memref<1x1x128x128xf32, #tpu.memory_space<vmem>>, vector<1x1x128x128xf32>
    %40 = vector.shape_cast %39 : vector<1x1x128x128xf32> to vector<128x128xf32>
    %41 = arith.addf %21, %40 : vector<128x128xf32>
    %c0_22 = arith.constant 0 : index
    %c0_23 = arith.constant 0 : index
    %c0_24 = arith.constant 0 : index
    %c0_25 = arith.constant 0 : index
    %42 = vector.load %arg8[%c0_22, %c0_23, %c0_24, %c0_25] : memref<1x1x128x128xf32, #tpu.memory_space<vmem>>, vector<1x1x128x128xf32>
    %43 = vector.shape_cast %42 : vector<1x1x128x128xf32> to vector<128x128xf32>
    %44 = arith.addf %41, %43 : vector<128x128xf32>
    %45 = arith.addf %44, %38 : vector<128x128xf32>
    %c0_26 = arith.constant 0 : index
    %c0_27 = arith.constant 0 : index
    %c0_28 = arith.constant 0 : index
    %46 = vector.load %arg9[%c0_26, %c0_27, %c0_28] : memref<1x1x128xi32, #tpu.memory_space<vmem>>, vector<1x1x128xi32>
    %47 = vector.shape_cast %46 : vector<1x1x128xi32> to vector<1x128xi32>
    %c0_i32_29 = arith.constant 0 : i32
    %48 = vector.broadcast %c0_i32_29 : i32 to vector<1x128xi32>
    %49 = arith.cmpi sgt, %47, %48 : vector<1x128xi32>
    %cst_30 = arith.constant -3.40282347E+38 : f32
    %50 = vector.shape_cast %49 : vector<1x128xi1> to vector<1x128xi1>
    %51 = vector.broadcast %50 : vector<1x128xi1> to vector<128x128xi1>
    %52 = vector.broadcast %cst_30 : f32 to vector<128x128xf32>
    %53 = arith.select %51, %52, %45 : vector<128x128xi1>, vector<128x128xf32>
    %c0_31 = arith.constant 0 : index
    %c0_32 = arith.constant 0 : index
    %54 = vector.load %arg16[%c0_31, %c0_32] : memref<128x1xf32, #tpu.memory_space<vmem>>, vector<128x1xf32>
    %cst_33 = arith.constant dense<0xFF800000> : vector<128xf32>
    %55 = vector.multi_reduction <maximumf>, %53, %cst_33 [1] : vector<128x128xf32> to vector<128xf32>
    %56 = vector.shape_cast %55 : vector<128xf32> to vector<128x1xf32>
    %57 = arith.maximumf %54, %56 : vector<128x1xf32>
    %58 = arith.subf %54, %57 : vector<128x1xf32>
    %59 = math.exp %58 : vector<128x1xf32>
    %60 = vector.broadcast %57 : vector<128x1xf32> to vector<128x128xf32>
    %61 = arith.subf %53, %60 : vector<128x128xf32>
    %62 = math.exp %61 : vector<128x128xf32>
    %c0_34 = arith.constant 0 : index
    %c0_35 = arith.constant 0 : index
    %63 = vector.load %arg17[%c0_34, %c0_35] : memref<128x1xf32, #tpu.memory_space<vmem>>, vector<128x1xf32>
    %64 = arith.mulf %59, %63 : vector<128x1xf32>
    %cst_36 = arith.constant dense<0.000000e+00> : vector<128xf32>
    %65 = vector.multi_reduction <add>, %62, %cst_36 [1] : vector<128x128xf32> to vector<128xf32>
    %66 = vector.shape_cast %65 : vector<128xf32> to vector<128x1xf32>
    %67 = arith.addf %64, %66 : vector<128x1xf32>
    %c0_37 = arith.constant 0 : index
    %c0_38 = arith.constant 0 : index
    %68 = vector.load %arg17[%c0_37, %c0_38] : memref<128x1xf32, #tpu.memory_space<vmem>>, vector<128x1xf32>
    tpu.vector_store %arg17[%c0_37, %c0_38], %67 {strides = array<i32>} : memref<128x1xf32, #tpu.memory_space<vmem>>, vector<128x1xf32>,
    %c0_39 = arith.constant 0 : index
    %c0_40 = arith.constant 0 : index
    %69 = vector.load %arg18[%c0_39, %c0_40] : memref<128x128xf32, #tpu.memory_space<vmem>>, vector<128x128xf32>
    %70 = vector.broadcast %59 : vector<128x1xf32> to vector<128x128xf32>
    %71 = arith.mulf %70, %69 : vector<128x128xf32>
    %72 = arith.truncf %62 : vector<128x128xf32> to vector<128x128xbf16>
    %c0_41 = arith.constant 0 : index
    %c0_42 = arith.constant 0 : index
    %73 = vector.load %arg6[%c0_41, %c0_42] : memref<128x128xbf16, #tpu.memory_space<vmem>>, vector<128x128xbf16>
    %cst_43 = arith.constant dense<0.000000e+00> : vector<128x128xf32>
    %74 = tpu.matmul %72, %73, %cst_43 {dimension_numbers = #tpu.dot_dimension_numbers<[1], [0], [0], [1], [0, 0, 1, 1], [], []>} : vector<128x128xbf16>, vector<128x128xbf16>, vector<128x128xf32> -> vector<128x128xf32>
    %75 = arith.addf %71, %74 : vector<128x128xf32>
    %c0_44 = arith.constant 0 : index
    %c0_45 = arith.constant 0 : index
    %76 = vector.load %arg18[%c0_44, %c0_45] : memref<128x128xf32, #tpu.memory_space<vmem>>, vector<128x128xf32>
    tpu.vector_store %arg18[%c0_44, %c0_45], %75 {strides = array<i32>} : memref<128x128xf32, #tpu.memory_space<vmem>>, vector<128x128xf32>,
    %c0_46 = arith.constant 0 : index
    %c0_47 = arith.constant 0 : index
    %77 = vector.load %arg16[%c0_46, %c0_47] : memref<128x1xf32, #tpu.memory_space<vmem>>, vector<128x1xf32>
    tpu.vector_store %arg16[%c0_46, %c0_47], %57 {strides = array<i32>} : memref<128x1xf32, #tpu.memory_space<vmem>>, vector<128x1xf32>,
    %c0_i32_48 = arith.constant 0 : i32
    %78 = arith.cmpi eq, %arg3, %c0_i32_48 : i32
    %79 = arith.extui %78 : i1 to i32
    %c0_i32_49 = arith.constant 0 : i32
    %80 = arith.cmpi ne, %79, %c0_i32_49 : i32
    scf.if %80 {
      %c0_50 = arith.constant 0 : index
      %c0_51 = arith.constant 0 : index
      %81 = vector.load %arg18[%c0_50, %c0_51] : memref<128x128xf32, #tpu.memory_space<vmem>>, vector<128x128xf32>
      %c0_52 = arith.constant 0 : index
      %c0_53 = arith.constant 0 : index
      %82 = vector.load %arg17[%c0_52, %c0_53] : memref<128x1xf32, #tpu.memory_space<vmem>>, vector<128x1xf32>
      %83 = tpu.reciprocal %82 {approx = true} : vector<128x1xf32> -> vector<128x1xf32>
      %84 = vector.broadcast %83 : vector<128x1xf32> to vector<128x128xf32>
      %85 = arith.mulf %81, %84 : vector<128x128xf32>
      %c0_54 = arith.constant 0 : index
      %c0_55 = arith.constant 0 : index
      %c0_56 = arith.constant 0 : index
      %86 = vector.load %arg15[%c0_54, %c0_55, %c0_56] : memref<1x128x128xf32, #tpu.memory_space<vmem>>, vector<1x128x128xf32>
      %87 = vector.shape_cast %86 : vector<1x128x128xf32> to vector<128x128xf32>
      %88 = vector.shape_cast %85 : vector<128x128xf32> to vector<1x128x128xf32>
      tpu.vector_store %arg15[%c0_54, %c0_55, %c0_56], %88 {strides = array<i32>} : memref<1x128x128xf32, #tpu.memory_space<vmem>>, vector<1x128x128xf32>,
    } else {
    }
    return
  }
  func.func @transform_0(%arg0: i32, %arg1: i32, %arg2: i32, %arg3: i32) -> (i32, i32) {
    %c1_i32 = arith.constant 1 : i32
    %0 = arith.muli %arg1, %c1_i32 : i32
    %1 = arith.addi %0, %arg2 : i32
    %c0_i32 = arith.constant 0 : i32
    return %1, %arg0 : i32, i32
  }
  func.func @transform_1(%arg0: i32, %arg1: i32, %arg2: i32, %arg3: i32) -> (i32, i32) {
    %c1_i32 = arith.constant 1 : i32
    %0 = arith.muli %arg1, %c1_i32 : i32
    %1 = arith.addi %0, %arg3 : i32
    %c2_i32 = arith.constant 2 : i32
    %2 = arith.addi %c2_i32, %arg0 : i32
    %c0_i32 = arith.constant 0 : i32
    return %1, %2 : i32, i32
  }
  func.func @transform_2(%arg0: i32, %arg1: i32, %arg2: i32, %arg3: i32) -> (i32, i32) {
    %c1_i32 = arith.constant 1 : i32
    %0 = arith.muli %arg1, %c1_i32 : i32
    %1 = arith.addi %0, %arg3 : i32
    %c4_i32 = arith.constant 4 : i32
    %2 = arith.addi %c4_i32, %arg0 : i32
    %c0_i32 = arith.constant 0 : i32
    return %1, %2 : i32, i32
  }
  func.func @transform_3(%arg0: i32, %arg1: i32, %arg2: i32, %arg3: i32) -> (i32, i32, i32, i32) {
    %c0_i32 = arith.constant 0 : i32
    %c0_i32_0 = arith.constant 0 : i32
    return %c0_i32, %arg0, %arg2, %arg3 : i32, i32, i32, i32
  }
  func.func @transform_4(%arg0: i32, %arg1: i32, %arg2: i32, %arg3: i32) -> (i32, i32, i32, i32) {
    %c0_i32 = arith.constant 0 : i32
    %c0_i32_0 = arith.constant 0 : i32
    return %c0_i32, %arg0, %arg2, %arg3 : i32, i32, i32, i32
  }
  func.func @transform_5(%arg0: i32, %arg1: i32, %arg2: i32, %arg3: i32) -> (i32, i32, i32) {
    %c0_i32 = arith.constant 0 : i32
    %c0_i32_0 = arith.constant 0 : i32
    return %arg1, %c0_i32, %arg3 : i32, i32, i32
  }
  func.func @transform_6(%arg0: i32, %arg1: i32, %arg2: i32, %arg3: i32) -> (i32, i32, i32) {
    %c0_i32 = arith.constant 0 : i32
    %c0_i32_0 = arith.constant 0 : i32
    %c0_i32_1 = arith.constant 0 : i32
    return %arg0, %c0_i32, %c0_i32_0 : i32, i32, i32
  }
  func.func @transform_7(%arg0: i32, %arg1: i32, %arg2: i32, %arg3: i32) -> (i32, i32) {
    %c0_i32 = arith.constant 0 : i32
    %c0_i32_0 = arith.constant 0 : i32
    return %arg2, %c0_i32 : i32, i32
  }
  func.func @transform_8(%arg0: i32, %arg1: i32, %arg2: i32, %arg3: i32) -> (i32, i32) {
    %c0_i32 = arith.constant 0 : i32
    %c0_i32_0 = arith.constant 0 : i32
    return %arg2, %c0_i32 : i32, i32
  }
  func.func @transform_9(%arg0: i32, %arg1: i32, %arg2: i32, %arg3: i32) -> (i32, i32) {
    %c0_i32 = arith.constant 0 : i32
    %c0_i32_0 = arith.constant 0 : i32
    return %arg3, %c0_i32 : i32, i32
  }
  func.func @transform_10(%arg0: i32, %arg1: i32, %arg2: i32, %arg3: i32) -> (i32, i32) {
    %c0_i32 = arith.constant 0 : i32
    %c0_i32_0 = arith.constant 0 : i32
    return %arg3, %c0_i32 : i32, i32
  }
  func.func @transform_11(%arg0: i32, %arg1: i32, %arg2: i32, %arg3: i32) -> (i32, i32, i32) {
    %c0_i32 = arith.constant 0 : i32
    return %arg1, %arg2, %arg0 : i32, i32, i32
  }
}

</mosaic_0001>

<llo_original>
// kernel: ernie_layout_self_attention.3
$region0: #{ernie_layout_self_attention.3}
  #allocation0 [shape = 'u32[]', space=smem, size = 0x4, offset = 0x4, fixed_abs, tag = 'smem constant byte address 0x4 - core index']
  #allocation1 [shape = 'u32[144,128]{1,0:T(1,128)}', space=vmem, size = 0x12000, scoped, tag = 'internal scratch']
  #allocation2 [shape = 'f32[128,1]{1,0:T(8,128)}', space=vmem, size = 0x10000, scoped, tag = 'scratch operand']
  #allocation3 [shape = 'f32[128,1]{1,0:T(8,128)}', space=vmem, size = 0x10000, scoped, tag = 'scratch operand']
  #allocation4 [shape = 'f32[128,128]{1,0:T(8,128)}', space=vmem, size = 0x10000, scoped, tag = 'scratch operand']
  %s0 = inlined_call_operand.vmem [shape: bf16[256,768], index: 0, kind: input, shape index: {}, may-alias: {0,1,2}]
  %s1 = inlined_call_operand.vmem [shape: bf16[256,768], index: 1, kind: input, shape index: {}, may-alias: {0,1,2}]
  %s2 = inlined_call_operand.vmem [shape: bf16[256,768], index: 2, kind: input, shape index: {}, may-alias: {0,1,2}]
  %s3 = inlined_call_operand.vmem [shape: f32[1,2,128,128], index: 3, kind: input, shape index: {}]
  %s4 = inlined_call_operand.vmem [shape: f32[1,2,128,128], index: 4, kind: input, shape index: {}]
  %s5 = inlined_call_operand.vmem [shape: s32[2,1,128], index: 5, kind: input, shape index: {}]
  %s6 = inlined_call_operand.vmem [shape: f32[2,1,1], index: 6, kind: input, shape index: {}]
  %s7 = inlined_call_operand.vmem [shape: f32[128,128], index: 7, kind: input, shape index: {}]
  %s8 = inlined_call_operand.vmem [shape: f32[128,128], index: 8, kind: input, shape index: {}]
  %s9 = inlined_call_operand.vmem [shape: f32[128,128], index: 9, kind: input, shape index: {}]
  %s10 = inlined_call_operand.vmem [shape: f32[128,128], index: 10, kind: input, shape index: {}]
  %s11 = inlined_call_operand.hbm [shape: f32[2,128,256], index: 11, kind: output, shape index: {}]
  %s12 = sld [smem:[#allocation0]]
  $region208: #{ernie_layout_self_attention.3} parent=0
    _
  %s14 = ssub.s32 1, %s12
  %s15 = scalar_select 0, %s14, %s12
  $region1: #{ernie_layout_self_attention.3} parent=0
    #allocation5 [shape = 'u8[65536]{0}', space=vmem, size = 0x10000, scoped, tag = 'input window, operand 0']
    #allocation6 [shape = 'u8[65536]{0}', space=vmem, size = 0x10000, scoped, tag = 'input window, operand 1']
    #allocation7 [shape = 'u8[65536]{0}', space=vmem, size = 0x10000, scoped, tag = 'input window, operand 2']
    #allocation8 [shape = 'u8[131072]{0}', space=vmem, size = 0x20000, scoped, tag = 'output window, operand 0']
    #allocation9 [shape = 's32[2]{0}', space=sflag, size = 0x8, scoped, tag = 'scoped memory for ernie_layout_self_attention.3']
    %16 = vsyncpa [#allocation9], 0
    %s17 = scalar_lea.sflag [#allocation9], 1
    %18 = vsyncpa %s17, 0
    loop: start=0, step=1, limit=6
    $region2: #{ernie_layout_self_attention.3} parent=1 // loop_pre_header
      _
    $region3: #{ernie_layout_self_attention.3} parent=1 // loop_header
      %s20 = sphi 0, %s24
      %p21 = scmp.ge.s32.totalorder %s20, 6
      %s27 = sphi 0, %s53
      %s28 = sphi 0, %s49
      %s29 = sphi 0, %s45
      %s30 = sphi 0, %s41
      %s31 = sphi 0, %s27
      %s32 = sphi 0, %s28
      %s33 = sphi 0, %s29
      %s34 = sphi 0, %s30
      %s35 = sphi 0, %s31
      %s36 = sphi 0, %s32
      %s37 = sphi 0, %s33
      %s38 = sphi 0, %s34
      %s60 = sphi 0, %s62
      %s63 = sphi 0, %s60
      %s64 = sphi 0, %s63
      %s80 = sphi 0, %s64
      %s92 = sphi 0, %s94
      %s95 = sphi 0, %s92
      %s96 = sphi 0, %s95
      %s112 = sphi 0, %s96
      %s124 = sphi 0, %s126
      %s127 = sphi 0, %s124
      %s128 = sphi 0, %s127
      %s144 = sphi 0, %s128
      %s154 = sphi 0, %s156
      %s157 = sphi 0, %s154
      %s158 = sphi 0, %s157
      %s174 = sphi 0, %s158
      %s184 = sphi 0, %s186
      %s187 = sphi 0, %s184
      %s188 = sphi 0, %s187
      %s204 = sphi 0, %s188
      %s212 = sphi 0, %s214
      %s215 = sphi 0, %s212
      %s216 = sphi 0, %s215
      %s232 = sphi 0, %s216
      %s238 = sphi 0, %s240
      %s241 = sphi 0, %s238
      %s242 = sphi 0, %s241
      %s258 = sphi 0, %s242
      %s264 = sphi 0, %s266
      %s267 = sphi 0, %s264
      %s268 = sphi 0, %s267
      %s284 = sphi 0, %s268
      %s290 = sphi 0, %s292
      %s293 = sphi 0, %s290
      %s294 = sphi 0, %s293
      %s310 = sphi 0, %s294
      %s316 = sphi 0, %s318
      %s319 = sphi 0, %s316
      %s320 = sphi 0, %s319
      %s336 = sphi 0, %s320
      %s342 = sphi 0, %s344
      %s345 = sphi 0, %s342
      %s346 = sphi 0, %s345
      %s362 = sphi 0, %s346
      %s372 = sphi 0, %s374
      %s375 = sphi 0, %s372
      %s376 = sphi 0, %s375
      %s392 = sphi 0, %s376
    $region4: #{ernie_layout_self_attention.3} parent=1 // loop_header_branch
      %23 = sbr.rel (%p21) target = $region8
    $region5: #{ernie_layout_self_attention.3} parent=1 // loop_body
      %s25 = ssub.s32 %s20, 1
      %s26 = ssub.s32 %s20, 2
      %s39 = sadd.s32 1, %s30
      %p40 = scmp.ge.s32.totalorder %s39, 1
      %s41 = scalar_select %p40, 0, %s39
      %s42 = sadd.s32 1, %s29
      %s43 = scalar_select %p40, %s42, %s29
      %p44 = scmp.ge.s32.totalorder %s43, 1
      %s45 = scalar_select %p44, 0, %s43
      %s46 = sadd.s32 1, %s28
      %s47 = scalar_select %p44, %s46, %s28
      %p48 = scmp.ge.s32.totalorder %s47, 2
      %s49 = scalar_select %p48, 0, %s47
      %s50 = sadd.s32 1, %s27
      %s51 = scalar_select %p48, %s50, %s27
      %p52 = scmp.ge.s32.totalorder %s51, 2
      %s53 = scalar_select %p52, 0, %s51
      %s54 = sadd.s32 %s28, %s29
      %s55 = sadd.s32 %s49, %s45
      %s56 = ssub.s32 %s54, %s55
      %s57 = ssub.s32 %s27, %s53
      %s58 = sor.u32 %s56, %s57
      %p59 = scmp.eq.s32.totalorder %s58, 0
      %s61 = sadd.s32 %s60, 1
      %s62 = scalar_select %p59, %s60, %s61
      %p65 = pneg %p59
      %p66 = scmp.eq.s32.totalorder %s20, 3
      %p67 = por %p65, %p66
      %p68 = scmp.ne.s32.totalorder %s60, %s63
      %p69 = scmp.eq.s32.totalorder %s20, 0
      %p70 = por %p68, %p69
      %p71 = scmp.ne.s32.totalorder %s60, %s63
      %p72 = scmp.eq.s32.totalorder %s25, 3
      %p73 = por %p71, %p72
      %p74 = scmp.ne.s32.totalorder %s63, %s64
      %p75 = scmp.eq.s32.totalorder %s25, 0
      %p76 = por %p74, %p75
      %p77 = scmp.ne.s32.totalorder %s63, %s64
      %p78 = scmp.eq.s32.totalorder %s26, 3
      %p79 = por %p77, %p78
      %p81 = scmp.ne.s32.totalorder %s64, %s80
      %p82 = scmp.eq.s32.totalorder %s26, 0
      %p83 = por %p81, %p82
      %s84 = sadd.s32 %s28, %s30
      %s85 = sadd.s32 %s27, 2
      %s86 = sadd.s32 %s49, %s41
      %s87 = sadd.s32 %s53, 2
      %s88 = ssub.s32 %s84, %s86
      %s89 = ssub.s32 %s85, %s87
      %s90 = sor.u32 %s88, %s89
      %p91 = scmp.eq.s32.totalorder %s90, 0
      %s93 = sadd.s32 %s92, 1
      %s94 = scalar_select %p91, %s92, %s93
      %p97 = pneg %p91
      %p98 = scmp.eq.s32.totalorder %s20, 3
      %p99 = por %p97, %p98
      %p100 = scmp.ne.s32.totalorder %s92, %s95
      %p101 = scmp.eq.s32.totalorder %s20, 0
      %p102 = por %p100, %p101
      %p103 = scmp.ne.s32.totalorder %s92, %s95
      %p104 = scmp.eq.s32.totalorder %s25, 3
      %p105 = por %p103, %p104
      %p106 = scmp.ne.s32.totalorder %s95, %s96
      %p107 = scmp.eq.s32.totalorder %s25, 0
      %p108 = por %p106, %p107
      %p109 = scmp.ne.s32.totalorder %s95, %s96
      %p110 = scmp.eq.s32.totalorder %s26, 3
      %p111 = por %p109, %p110
      %p113 = scmp.ne.s32.totalorder %s96, %s112
      %p114 = scmp.eq.s32.totalorder %s26, 0
      %p115 = por %p113, %p114
      %s116 = sadd.s32 %s28, %s30
      %s117 = sadd.s32 %s27, 4
      %s118 = sadd.s32 %s49, %s41
      %s119 = sadd.s32 %s53, 4
      %s120 = ssub.s32 %s116, %s118
      %s121 = ssub.s32 %s117, %s119
      %s122 = sor.u32 %s120, %s121
      %p123 = scmp.eq.s32.totalorder %s122, 0
      %s125 = sadd.s32 %s124, 1
      %s126 = scalar_select %p123, %s124, %s125
      %p129 = pneg %p123
      %p130 = scmp.eq.s32.totalorder %s20, 3
      %p131 = por %p129, %p130
      %p132 = scmp.ne.s32.totalorder %s124, %s127
      %p133 = scmp.eq.s32.totalorder %s20, 0
      %p134 = por %p132, %p133
      %p135 = scmp.ne.s32.totalorder %s124, %s127
      %p136 = scmp.eq.s32.totalorder %s25, 3
      %p137 = por %p135, %p136
      %p138 = scmp.ne.s32.totalorder %s127, %s128
      %p139 = scmp.eq.s32.totalorder %s25, 0
      %p140 = por %p138, %p139
      %p141 = scmp.ne.s32.totalorder %s127, %s128
      %p142 = scmp.eq.s32.totalorder %s26, 3
      %p143 = por %p141, %p142
      %p145 = scmp.ne.s32.totalorder %s128, %s144
      %p146 = scmp.eq.s32.totalorder %s26, 0
      %p147 = por %p145, %p146
      %s148 = ssub.s32 %s27, %s53
      %s149 = ssub.s32 %s29, %s45
      %s150 = sor.u32 %s148, %s149
      %s151 = ssub.s32 %s30, %s41
      %s152 = sor.u32 %s150, %s151
      %p153 = scmp.eq.s32.totalorder %s152, 0
      %s155 = sadd.s32 %s154, 1
      %s156 = scalar_select %p153, %s154, %s155
      %p159 = pneg %p153
      %p160 = scmp.eq.s32.totalorder %s20, 3
      %p161 = por %p159, %p160
      %p162 = scmp.ne.s32.totalorder %s154, %s157
      %p163 = scmp.eq.s32.totalorder %s20, 0
      %p164 = por %p162, %p163
      %p165 = scmp.ne.s32.totalorder %s154, %s157
      %p166 = scmp.eq.s32.totalorder %s25, 3
      %p167 = por %p165, %p166
      %p168 = scmp.ne.s32.totalorder %s157, %s158
      %p169 = scmp.eq.s32.totalorder %s25, 0
      %p170 = por %p168, %p169
      %p171 = scmp.ne.s32.totalorder %s157, %s158
      %p172 = scmp.eq.s32.totalorder %s26, 3
      %p173 = por %p171, %p172
      %p175 = scmp.ne.s32.totalorder %s158, %s174
      %p176 = scmp.eq.s32.totalorder %s26, 0
      %p177 = por %p175, %p176
      %s178 = ssub.s32 %s27, %s53
      %s179 = ssub.s32 %s29, %s45
      %s180 = sor.u32 %s178, %s179
      %s181 = ssub.s32 %s30, %s41
      %s182 = sor.u32 %s180, %s181
      %p183 = scmp.eq.s32.totalorder %s182, 0
      %s185 = sadd.s32 %s184, 1
      %s186 = scalar_select %p183, %s184, %s185
      %p189 = pneg %p183
      %p190 = scmp.eq.s32.totalorder %s20, 3
      %p191 = por %p189, %p190
      %p192 = scmp.ne.s32.totalorder %s184, %s187
      %p193 = scmp.eq.s32.totalorder %s20, 0
      %p194 = por %p192, %p193
      %p195 = scmp.ne.s32.totalorder %s184, %s187
      %p196 = scmp.eq.s32.totalorder %s25, 3
      %p197 = por %p195, %p196
      %p198 = scmp.ne.s32.totalorder %s187, %s188
      %p199 = scmp.eq.s32.totalorder %s25, 0
      %p200 = por %p198, %p199
      %p201 = scmp.ne.s32.totalorder %s187, %s188
      %p202 = scmp.eq.s32.totalorder %s26, 3
      %p203 = por %p201, %p202
      %p205 = scmp.ne.s32.totalorder %s188, %s204
      %p206 = scmp.eq.s32.totalorder %s26, 0
      %p207 = por %p205, %p206
      %s208 = ssub.s32 %s28, %s49
      %s209 = ssub.s32 %s30, %s41
      %s210 = sor.u32 %s208, %s209
      %p211 = scmp.eq.s32.totalorder %s210, 0
      %s213 = sadd.s32 %s212, 1
      %s214 = scalar_select %p211, %s212, %s213
      %p217 = pneg %p211
      %p218 = scmp.eq.s32.totalorder %s20, 3
      %p219 = por %p217, %p218
      %p220 = scmp.ne.s32.totalorder %s212, %s215
      %p221 = scmp.eq.s32.totalorder %s20, 0
      %p222 = por %p220, %p221
      %p223 = scmp.ne.s32.totalorder %s212, %s215
      %p224 = scmp.eq.s32.totalorder %s25, 3
      %p225 = por %p223, %p224
      %p226 = scmp.ne.s32.totalorder %s215, %s216
      %p227 = scmp.eq.s32.totalorder %s25, 0
      %p228 = por %p226, %p227
      %p229 = scmp.ne.s32.totalorder %s215, %s216
      %p230 = scmp.eq.s32.totalorder %s26, 3
      %p231 = por %p229, %p230
      %p233 = scmp.ne.s32.totalorder %s216, %s232
      %p234 = scmp.eq.s32.totalorder %s26, 0
      %p235 = por %p233, %p234
      %s236 = ssub.s32 %s27, %s53
      %p237 = scmp.eq.s32.totalorder %s236, 0
      %s239 = sadd.s32 %s238, 1
      %s240 = scalar_select %p237, %s238, %s239
      %p243 = pneg %p237
      %p244 = scmp.eq.s32.totalorder %s20, 3
      %p245 = por %p243, %p244
      %p246 = scmp.ne.s32.totalorder %s238, %s241
      %p247 = scmp.eq.s32.totalorder %s20, 0
      %p248 = por %p246, %p247
      %p249 = scmp.ne.s32.totalorder %s238, %s241
      %p250 = scmp.eq.s32.totalorder %s25, 3
      %p251 = por %p249, %p250
      %p252 = scmp.ne.s32.totalorder %s241, %s242
      %p253 = scmp.eq.s32.totalorder %s25, 0
      %p254 = por %p252, %p253
      %p255 = scmp.ne.s32.totalorder %s241, %s242
      %p256 = scmp.eq.s32.totalorder %s26, 3
      %p257 = por %p255, %p256
      %p259 = scmp.ne.s32.totalorder %s242, %s258
      %p260 = scmp.eq.s32.totalorder %s26, 0
      %p261 = por %p259, %p260
      %s262 = ssub.s32 %s29, %s45
      %p263 = scmp.eq.s32.totalorder %s262, 0
      %s265 = sadd.s32 %s264, 1
      %s266 = scalar_select %p263, %s264, %s265
      %p269 = pneg %p263
      %p270 = scmp.eq.s32.totalorder %s20, 3
      %p271 = por %p269, %p270
      %p272 = scmp.ne.s32.totalorder %s264, %s267
      %p273 = scmp.eq.s32.totalorder %s20, 0
      %p274 = por %p272, %p273
      %p275 = scmp.ne.s32.totalorder %s264, %s267
      %p276 = scmp.eq.s32.totalorder %s25, 3
      %p277 = por %p275, %p276
      %p278 = scmp.ne.s32.totalorder %s267, %s268
      %p279 = scmp.eq.s32.totalorder %s25, 0
      %p280 = por %p278, %p279
      %p281 = scmp.ne.s32.totalorder %s267, %s268
      %p282 = scmp.eq.s32.totalorder %s26, 3
      %p283 = por %p281, %p282
      %p285 = scmp.ne.s32.totalorder %s268, %s284
      %p286 = scmp.eq.s32.totalorder %s26, 0
      %p287 = por %p285, %p286
      %s288 = ssub.s32 %s29, %s45
      %p289 = scmp.eq.s32.totalorder %s288, 0
      %s291 = sadd.s32 %s290, 1
      %s292 = scalar_select %p289, %s290, %s291
      %p295 = pneg %p289
      %p296 = scmp.eq.s32.totalorder %s20, 3
      %p297 = por %p295, %p296
      %p298 = scmp.ne.s32.totalorder %s290, %s293
      %p299 = scmp.eq.s32.totalorder %s20, 0
      %p300 = por %p298, %p299
      %p301 = scmp.ne.s32.totalorder %s290, %s293
      %p302 = scmp.eq.s32.totalorder %s25, 3
      %p303 = por %p301, %p302
      %p304 = scmp.ne.s32.totalorder %s293, %s294
      %p305 = scmp.eq.s32.totalorder %s25, 0
      %p306 = por %p304, %p305
      %p307 = scmp.ne.s32.totalorder %s293, %s294
      %p308 = scmp.eq.s32.totalorder %s26, 3
      %p309 = por %p307, %p308
      %p311 = scmp.ne.s32.totalorder %s294, %s310
      %p312 = scmp.eq.s32.totalorder %s26, 0
      %p313 = por %p311, %p312
      %s314 = ssub.s32 %s30, %s41
      %p315 = scmp.eq.s32.totalorder %s314, 0
      %s317 = sadd.s32 %s316, 1
      %s318 = scalar_select %p315, %s316, %s317
      %p321 = pneg %p315
      %p322 = scmp.eq.s32.totalorder %s20, 3
      %p323 = por %p321, %p322
      %p324 = scmp.ne.s32.totalorder %s316, %s319
      %p325 = scmp.eq.s32.totalorder %s20, 0
      %p326 = por %p324, %p325
      %p327 = scmp.ne.s32.totalorder %s316, %s319
      %p328 = scmp.eq.s32.totalorder %s25, 3
      %p329 = por %p327, %p328
      %p330 = scmp.ne.s32.totalorder %s319, %s320
      %p331 = scmp.eq.s32.totalorder %s25, 0
      %p332 = por %p330, %p331
      %p333 = scmp.ne.s32.totalorder %s319, %s320
      %p334 = scmp.eq.s32.totalorder %s26, 3
      %p335 = por %p333, %p334
      %p337 = scmp.ne.s32.totalorder %s320, %s336
      %p338 = scmp.eq.s32.totalorder %s26, 0
      %p339 = por %p337, %p338
      %s340 = ssub.s32 %s30, %s41
      %p341 = scmp.eq.s32.totalorder %s340, 0
      %s343 = sadd.s32 %s342, 1
      %s344 = scalar_select %p341, %s342, %s343
      %p347 = pneg %p341
      %p348 = scmp.eq.s32.totalorder %s20, 3
      %p349 = por %p347, %p348
      %p350 = scmp.ne.s32.totalorder %s342, %s345
      %p351 = scmp.eq.s32.totalorder %s20, 0
      %p352 = por %p350, %p351
      %p353 = scmp.ne.s32.totalorder %s342, %s345
      %p354 = scmp.eq.s32.totalorder %s25, 3
      %p355 = por %p353, %p354
      %p356 = scmp.ne.s32.totalorder %s345, %s346
      %p357 = scmp.eq.s32.totalorder %s25, 0
      %p358 = por %p356, %p357
      %p359 = scmp.ne.s32.totalorder %s345, %s346
      %p360 = scmp.eq.s32.totalorder %s26, 3
      %p361 = por %p359, %p360
      %p363 = scmp.ne.s32.totalorder %s346, %s362
      %p364 = scmp.eq.s32.totalorder %s26, 0
      %p365 = por %p363, %p364
      %s366 = ssub.s32 %s28, %s49
      %s367 = ssub.s32 %s29, %s45
      %s368 = sor.u32 %s366, %s367
      %s369 = ssub.s32 %s27, %s53
      %s370 = sor.u32 %s368, %s369
      %p371 = scmp.eq.s32.totalorder %s370, 0
      %s373 = sadd.s32 %s372, 1
      %s374 = scalar_select %p371, %s372, %s373
      %p377 = pneg %p371
      %p378 = scmp.eq.s32.totalorder %s20, 3
      %p379 = por %p377, %p378
      %p380 = scmp.ne.s32.totalorder %s372, %s375
      %p381 = scmp.eq.s32.totalorder %s20, 0
      %p382 = por %p380, %p381
      %p383 = scmp.ne.s32.totalorder %s372, %s375
      %p384 = scmp.eq.s32.totalorder %s25, 3
      %p385 = por %p383, %p384
      %p386 = scmp.ne.s32.totalorder %s375, %s376
      %p387 = scmp.eq.s32.totalorder %s25, 0
      %p388 = por %p386, %p387
      %p389 = scmp.ne.s32.totalorder %s375, %s376
      %p390 = scmp.eq.s32.totalorder %s26, 3
      %p391 = por %p389, %p390
      %p393 = scmp.ne.s32.totalorder %s376, %s392
      %p394 = scmp.eq.s32.totalorder %s26, 0
      %p395 = por %p393, %p394
      %p396 = scmp.le.s32.totalorder 1, %s20
      %p397 = scmp.lt.s32.totalorder %s20, 5
      %p398 = pnand %p396, %p397
      %p399 = pneg %p398
      // Predicated region
      $region9: #{ernie_layout_self_attention.3} parent=5 // pred_check
        _
      $region10: #{ernie_layout_self_attention.3} parent=5 // pred_check_branch
        %401 = sbr.rel (%p398) target = $region12
      $region11: #{ernie_layout_self_attention.3} parent=5 // pred_region
        %s402 = ssub.s32 %s20, 1
        // Predicated region
        $region13: #{ernie_layout_self_attention.3} parent=11 // pred_check
          %p403 = pneg %p280
        $region14: #{ernie_layout_self_attention.3} parent=11 // pred_check_branch
          %405 = sbr.rel (%p403) target = $region16
        $region15: #{ernie_layout_self_attention.3} parent=11 // pred_region
          %s406 = smul.u32 16, %s33
          %p407 = scmp.lt.s32.totalorder %s406, 15
          %s408 = scalar_select %p407, %s406, 15
          %s409 = smul.addr %s408, 8
          %s410 = scalar_lea.vmem %s7, %s409
          %s411 = smul.u32 16, %s33
        $region16: #{ernie_layout_self_attention.3} parent=11 // pred_fallthru
          _
        // Predicated region
        $region17: #{ernie_layout_self_attention.3} parent=11 // pred_check
          %p412 = pneg %p306
        $region18: #{ernie_layout_self_attention.3} parent=11 // pred_check_branch
          %414 = sbr.rel (%p412) target = $region20
        $region19: #{ernie_layout_self_attention.3} parent=11 // pred_region
          %s415 = smul.u32 16, %s33
          %p416 = scmp.lt.s32.totalorder %s415, 15
          %s417 = scalar_select %p416, %s415, 15
          %s418 = smul.addr %s417, 8
          %s419 = scalar_lea.vmem %s8, %s418
          %s420 = smul.u32 16, %s33
        $region20: #{ernie_layout_self_attention.3} parent=11 // pred_fallthru
          _
        // Predicated region
        $region21: #{ernie_layout_self_attention.3} parent=11 // pred_check
          %p421 = pneg %p332
        $region22: #{ernie_layout_self_attention.3} parent=11 // pred_check_branch
          %423 = sbr.rel (%p421) target = $region24
        $region23: #{ernie_layout_self_attention.3} parent=11 // pred_region
          %s424 = smul.u32 16, %s34
          %p425 = scmp.lt.s32.totalorder %s424, 15
          %s426 = scalar_select %p425, %s424, 15
          %s427 = smul.addr %s426, 8
          %s428 = scalar_lea.vmem %s9, %s427
          %s429 = smul.u32 16, %s34
        $region24: #{ernie_layout_self_attention.3} parent=11 // pred_fallthru
          _
        // Predicated region
        $region25: #{ernie_layout_self_attention.3} parent=11 // pred_check
          %p430 = pneg %p358
        $region26: #{ernie_layout_self_attention.3} parent=11 // pred_check_branch
          %432 = sbr.rel (%p430) target = $region28
        $region27: #{ernie_layout_self_attention.3} parent=11 // pred_region
          %s433 = smul.u32 16, %s34
          %p434 = scmp.lt.s32.totalorder %s433, 15
          %s435 = scalar_select %p434, %s433, 15
          %s436 = smul.addr %s435, 8
          %s437 = scalar_lea.vmem %s10, %s436
          %s438 = smul.u32 16, %s34
        $region28: #{ernie_layout_self_attention.3} parent=11 // pred_fallthru
          _
      $region12: #{ernie_layout_self_attention.3} parent=5 // pred_fallthru
        _
      %p439 = scmp.lt.s32.totalorder %s20, 4
      // Predicated region
      $region29: #{ernie_layout_self_attention.3} parent=5 // pred_check
        %p440 = pneg %p439
      $region30: #{ernie_layout_self_attention.3} parent=5 // pred_check_branch
        %442 = sbr.rel (%p440) target = $region32
      $region31: #{ernie_layout_self_attention.3} parent=5 // pred_region
        // Predicated region
        $region33: #{ernie_layout_self_attention.3} parent=31 // pred_check
          %p443 = pneg %p70
        $region34: #{ernie_layout_self_attention.3} parent=31 // pred_check_branch
          %445 = sbr.rel (%p443) target = $region36
        $region35: #{ernie_layout_self_attention.3} parent=31 // pred_region
          %s446 = sand.u32 %s60, 1
          %s447 = sand.u32 %s60, 1
          %s448 = smul.addr %s447, 64
          %s449 = scalar_lea.vmem [#allocation5], %s448
          %s450 = sadd.s32 %s28, %s29
          %s451 = smul.u32 16, %s450
          %s452 = smul.addr %s451, 6
          %s453 = sadd.s32 %s27, %s452
          %s454 = smul.addr %s453, 4
          %s455 = scalar_lea.vmem %s0, %s454
          // Predicated region
          $region37: #{ernie_layout_self_attention.3} parent=35 // pred_check
            _
          $region38: #{ernie_layout_self_attention.3} parent=35 // pred_check_branch
            %457 = sbr.rel (0) target = $region40
          $region39: #{ernie_layout_self_attention.3} parent=35 // pred_region
            // Predicated region
            $region41: #{ernie_layout_self_attention.3} parent=39 // pred_check
              _
            $region42: #{ernie_layout_self_attention.3} parent=39 // pred_check_branch
              %459 = sbr.rel target = $region44
            $region43: #{ernie_layout_self_attention.3} parent=39 // pred_region
              // Predicated region
              $region56: #{ernie_layout_self_attention.3} parent=43 // pred_check
                _
              $region57: #{ernie_layout_self_attention.3} parent=43 // pred_check_branch
                %504 = sbr.rel (0) target = $region59
              $region58: #{ernie_layout_self_attention.3} parent=43 // pred_region
                loop: start=0, step=1, limit=1
                $region60: #{ernie_layout_self_attention.3} parent=58 // loop_pre_header
                  _
                $region61: #{ernie_layout_self_attention.3} parent=58 // loop_header
                  %s506 = sphi 0, %s510
                  %p507 = scmp.ge.s32.totalorder %s506, 1
                  %s511 = sphi %s455, %s455
                  %s512 = sphi %s449, %s449
                $region62: #{ernie_layout_self_attention.3} parent=58 // loop_header_branch
                  %509 = sbr.rel (%p507) target = $region66
                $region63: #{ernie_layout_self_attention.3} parent=58 // loop_body
                  _
                $region64: #{ernie_layout_self_attention.3} parent=58 // loop_footer
                  %s510 = sadd.s32 1, %s506
                $region65: #{ernie_layout_self_attention.3} parent=58 // loop_footer_branch
                  %505 = sbr.rel target = $region61
                $region66: #{ernie_layout_self_attention.3} parent=58 // loop_exit
                  _
                loop: start=0, step=1, limit=1
                $region67: #{ernie_layout_self_attention.3} parent=58 // loop_pre_header
                  _
                $region68: #{ernie_layout_self_attention.3} parent=58 // loop_header
                  %s515 = sphi 0, %s519
                  %p516 = scmp.ge.s32.totalorder %s515, 1
                  %s520 = sphi %s455, %s455
                  %s521 = sphi %s449, %s449
                $region69: #{ernie_layout_self_attention.3} parent=58 // loop_header_branch
                  %518 = sbr.rel (%p516) target = $region73
                $region70: #{ernie_layout_self_attention.3} parent=58 // loop_body
                  %v522 = vld [vmem:[%s520] sm:$0xf]
                  %523 = vst [vmem:[%s521] sm:$0xf] %v522
                  %v524 = vld [vmem:[%s520 + $0x18] sm:$0xf]
                  %525 = vst [vmem:[%s521 + $0x4] sm:$0xf] %v524
                  %v526 = vld [vmem:[%s520 + $0x30] sm:$0xf]
                  %527 = vst [vmem:[%s521 + $0x8] sm:$0xf] %v526
                  %v528 = vld [vmem:[%s520 + $0x48] sm:$0xf]
                  %529 = vst [vmem:[%s521 + $0xc] sm:$0xf] %v528
                  %v530 = vld [vmem:[%s520 + $0x60] sm:$0xf]
                  %531 = vst [vmem:[%s521 + $0x10] sm:$0xf] %v530
                  %v532 = vld [vmem:[%s520 + $0x78] sm:$0xf]
                  %533 = vst [vmem:[%s521 + $0x14] sm:$0xf] %v532
                  %v534 = vld [vmem:[%s520 + $0x90] sm:$0xf]
                  %535 = vst [vmem:[%s521 + $0x18] sm:$0xf] %v534
                  %v536 = vld [vmem:[%s520 + $0xa8] sm:$0xf]
                  %537 = vst [vmem:[%s521 + $0x1c] sm:$0xf] %v536
                  %v538 = vld [vmem:[%s520 + $0xc0] sm:$0xf]
                  %539 = vst [vmem:[%s521 + $0x20] sm:$0xf] %v538
                  %v540 = vld [vmem:[%s520 + $0xd8] sm:$0xf]
                  %541 = vst [vmem:[%s521 + $0x24] sm:$0xf] %v540
                  %v542 = vld [vmem:[%s520 + $0xf0] sm:$0xf]
                  %543 = vst [vmem:[%s521 + $0x28] sm:$0xf] %v542
                  %v544 = vld [vmem:[%s520 + $0x108] sm:$0xf]
                  %545 = vst [vmem:[%s521 + $0x2c] sm:$0xf] %v544
                  %v546 = vld [vmem:[%s520 + $0x120] sm:$0xf]
                  %547 = vst [vmem:[%s521 + $0x30] sm:$0xf] %v546
                  %v548 = vld [vmem:[%s520 + $0x138] sm:$0xf]
                  %549 = vst [vmem:[%s521 + $0x34] sm:$0xf] %v548
                  %v550 = vld [vmem:[%s520 + $0x150] sm:$0xf]
                  %551 = vst [vmem:[%s521 + $0x38] sm:$0xf] %v550
                  %v552 = vld [vmem:[%s520 + $0x168] sm:$0xf]
                  %553 = vst [vmem:[%s521 + $0x3c] sm:$0xf] %v552
                $region71: #{ernie_layout_self_attention.3} parent=58 // loop_footer
                  %s519 = sadd.s32 1, %s515
                $region72: #{ernie_layout_self_attention.3} parent=58 // loop_footer_branch
                  %514 = sbr.rel target = $region68
                $region73: #{ernie_layout_self_attention.3} parent=58 // loop_exit
                  _
              $region59: #{ernie_layout_self_attention.3} parent=43 // pred_fallthru
                _
            $region44: #{ernie_layout_self_attention.3} parent=39 // pred_fallthru
              _
            // Predicated region
            $region45: #{ernie_layout_self_attention.3} parent=39 // pred_check
              _
            $region46: #{ernie_layout_self_attention.3} parent=39 // pred_check_branch
              %461 = sbr.rel (0) target = $region48
            $region47: #{ernie_layout_self_attention.3} parent=39 // pred_region
              loop: start=0, step=1, limit=1
              $region49: #{ernie_layout_self_attention.3} parent=47 // loop_pre_header
                _
              $region50: #{ernie_layout_self_attention.3} parent=47 // loop_header
                %s464 = sphi 0, %s468
                %p465 = scmp.ge.s32.totalorder %s464, 1
                %s469 = sphi %s455, %s455
                %s470 = sphi %s449, %s449
              $region51: #{ernie_layout_self_attention.3} parent=47 // loop_header_branch
                %467 = sbr.rel (%p465) target = $region55
              $region52: #{ernie_layout_self_attention.3} parent=47 // loop_body
                %v471 = vld [vmem:[%s469] sm:$0xf]
                %472 = vst [vmem:[%s470] sm:$0xf] %v471
                %v473 = vld [vmem:[%s469 + $0x18] sm:$0xf]
                %474 = vst [vmem:[%s470 + $0x4] sm:$0xf] %v473
                %v475 = vld [vmem:[%s469 + $0x30] sm:$0xf]
                %476 = vst [vmem:[%s470 + $0x8] sm:$0xf] %v475
                %v477 = vld [vmem:[%s469 + $0x48] sm:$0xf]
                %478 = vst [vmem:[%s470 + $0xc] sm:$0xf] %v477
                %v479 = vld [vmem:[%s469 + $0x60] sm:$0xf]
                %480 = vst [vmem:[%s470 + $0x10] sm:$0xf] %v479
                %v481 = vld [vmem:[%s469 + $0x78] sm:$0xf]
                %482 = vst [vmem:[%s470 + $0x14] sm:$0xf] %v481
                %v483 = vld [vmem:[%s469 + $0x90] sm:$0xf]
                %484 = vst [vmem:[%s470 + $0x18] sm:$0xf] %v483
                %v485 = vld [vmem:[%s469 + $0xa8] sm:$0xf]
                %486 = vst [vmem:[%s470 + $0x1c] sm:$0xf] %v485
                %v487 = vld [vmem:[%s469 + $0xc0] sm:$0xf]
                %488 = vst [vmem:[%s470 + $0x20] sm:$0xf] %v487
                %v489 = vld [vmem:[%s469 + $0xd8] sm:$0xf]
                %490 = vst [vmem:[%s470 + $0x24] sm:$0xf] %v489
                %v491 = vld [vmem:[%s469 + $0xf0] sm:$0xf]
                %492 = vst [vmem:[%s470 + $0x28] sm:$0xf] %v491
                %v493 = vld [vmem:[%s469 + $0x108] sm:$0xf]
                %494 = vst [vmem:[%s470 + $0x2c] sm:$0xf] %v493
                %v495 = vld [vmem:[%s469 + $0x120] sm:$0xf]
                %496 = vst [vmem:[%s470 + $0x30] sm:$0xf] %v495
                %v497 = vld [vmem:[%s469 + $0x138] sm:$0xf]
                %498 = vst [vmem:[%s470 + $0x34] sm:$0xf] %v497
                %v499 = vld [vmem:[%s469 + $0x150] sm:$0xf]
                %500 = vst [vmem:[%s470 + $0x38] sm:$0xf] %v499
                %v501 = vld [vmem:[%s469 + $0x168] sm:$0xf]
                %502 = vst [vmem:[%s470 + $0x3c] sm:$0xf] %v501
              $region53: #{ernie_layout_self_attention.3} parent=47 // loop_footer
                %s468 = sadd.s32 1, %s464
              $region54: #{ernie_layout_self_attention.3} parent=47 // loop_footer_branch
                %463 = sbr.rel target = $region50
              $region55: #{ernie_layout_self_attention.3} parent=47 // loop_exit
                _
            $region48: #{ernie_layout_self_attention.3} parent=39 // pred_fallthru
              _
          $region40: #{ernie_layout_self_attention.3} parent=35 // pred_fallthru
            _
          %554 = vnop
        $region36: #{ernie_layout_self_attention.3} parent=31 // pred_fallthru
          _
        // Predicated region
        $region74: #{ernie_layout_self_attention.3} parent=31 // pred_check
          %p555 = pneg %p102
        $region75: #{ernie_layout_self_attention.3} parent=31 // pred_check_branch
          %557 = sbr.rel (%p555) target = $region77
        $region76: #{ernie_layout_self_attention.3} parent=31 // pred_region
          %s558 = sand.u32 %s92, 1
          %s559 = sand.u32 %s92, 1
          %s560 = smul.addr %s559, 64
          %s561 = scalar_lea.vmem [#allocation6], %s560
          %s562 = sadd.s32 %s28, %s30
          %s563 = sadd.s32 %s27, 2
          %s564 = smul.u32 16, %s562
          %s565 = smul.addr %s564, 6
          %s566 = sadd.s32 %s563, %s565
          %s567 = smul.addr %s566, 4
          %s568 = scalar_lea.vmem %s1, %s567
          // Predicated region
          $region78: #{ernie_layout_self_attention.3} parent=76 // pred_check
            _
          $region79: #{ernie_layout_self_attention.3} parent=76 // pred_check_branch
            %570 = sbr.rel (0) target = $region81
          $region80: #{ernie_layout_self_attention.3} parent=76 // pred_region
            // Predicated region
            $region82: #{ernie_layout_self_attention.3} parent=80 // pred_check
              _
            $region83: #{ernie_layout_self_attention.3} parent=80 // pred_check_branch
              %572 = sbr.rel target = $region85
            $region84: #{ernie_layout_self_attention.3} parent=80 // pred_region
              // Predicated region
              $region97: #{ernie_layout_self_attention.3} parent=84 // pred_check
                _
              $region98: #{ernie_layout_self_attention.3} parent=84 // pred_check_branch
                %617 = sbr.rel (0) target = $region100
              $region99: #{ernie_layout_self_attention.3} parent=84 // pred_region
                loop: start=0, step=1, limit=1
                $region101: #{ernie_layout_self_attention.3} parent=99 // loop_pre_header
                  _
                $region102: #{ernie_layout_self_attention.3} parent=99 // loop_header
                  %s619 = sphi 0, %s623
                  %p620 = scmp.ge.s32.totalorder %s619, 1
                  %s624 = sphi %s568, %s568
                  %s625 = sphi %s561, %s561
                $region103: #{ernie_layout_self_attention.3} parent=99 // loop_header_branch
                  %622 = sbr.rel (%p620) target = $region107
                $region104: #{ernie_layout_self_attention.3} parent=99 // loop_body
                  _
                $region105: #{ernie_layout_self_attention.3} parent=99 // loop_footer
                  %s623 = sadd.s32 1, %s619
                $region106: #{ernie_layout_self_attention.3} parent=99 // loop_footer_branch
                  %618 = sbr.rel target = $region102
                $region107: #{ernie_layout_self_attention.3} parent=99 // loop_exit
                  _
                loop: start=0, step=1, limit=1
                $region108: #{ernie_layout_self_attention.3} parent=99 // loop_pre_header
                  _
                $region109: #{ernie_layout_self_attention.3} parent=99 // loop_header
                  %s628 = sphi 0, %s632
                  %p629 = scmp.ge.s32.totalorder %s628, 1
                  %s633 = sphi %s568, %s568
                  %s634 = sphi %s561, %s561
                $region110: #{ernie_layout_self_attention.3} parent=99 // loop_header_branch
                  %631 = sbr.rel (%p629) target = $region114
                $region111: #{ernie_layout_self_attention.3} parent=99 // loop_body
                  %v635 = vld [vmem:[%s633] sm:$0xf]
                  %636 = vst [vmem:[%s634] sm:$0xf] %v635
                  %v637 = vld [vmem:[%s633 + $0x18] sm:$0xf]
                  %638 = vst [vmem:[%s634 + $0x4] sm:$0xf] %v637
                  %v639 = vld [vmem:[%s633 + $0x30] sm:$0xf]
                  %640 = vst [vmem:[%s634 + $0x8] sm:$0xf] %v639
                  %v641 = vld [vmem:[%s633 + $0x48] sm:$0xf]
                  %642 = vst [vmem:[%s634 + $0xc] sm:$0xf] %v641
                  %v643 = vld [vmem:[%s633 + $0x60] sm:$0xf]
                  %644 = vst [vmem:[%s634 + $0x10] sm:$0xf] %v643
                  %v645 = vld [vmem:[%s633 + $0x78] sm:$0xf]
                  %646 = vst [vmem:[%s634 + $0x14] sm:$0xf] %v645
                  %v647 = vld [vmem:[%s633 + $0x90] sm:$0xf]
                  %648 = vst [vmem:[%s634 + $0x18] sm:$0xf] %v647
                  %v649 = vld [vmem:[%s633 + $0xa8] sm:$0xf]
                  %650 = vst [vmem:[%s634 + $0x1c] sm:$0xf] %v649
                  %v651 = vld [vmem:[%s633 + $0xc0] sm:$0xf]
                  %652 = vst [vmem:[%s634 + $0x20] sm:$0xf] %v651
                  %v653 = vld [vmem:[%s633 + $0xd8] sm:$0xf]
                  %654 = vst [vmem:[%s634 + $0x24] sm:$0xf] %v653
                  %v655 = vld [vmem:[%s633 + $0xf0] sm:$0xf]
                  %656 = vst [vmem:[%s634 + $0x28] sm:$0xf] %v655
                  %v657 = vld [vmem:[%s633 + $0x108] sm:$0xf]
                  %658 = vst [vmem:[%s634 + $0x2c] sm:$0xf] %v657
                  %v659 = vld [vmem:[%s633 + $0x120] sm:$0xf]
                  %660 = vst [vmem:[%s634 + $0x30] sm:$0xf] %v659
                  %v661 = vld [vmem:[%s633 + $0x138] sm:$0xf]
                  %662 = vst [vmem:[%s634 + $0x34] sm:$0xf] %v661
                  %v663 = vld [vmem:[%s633 + $0x150] sm:$0xf]
                  %664 = vst [vmem:[%s634 + $0x38] sm:$0xf] %v663
                  %v665 = vld [vmem:[%s633 + $0x168] sm:$0xf]
                  %666 = vst [vmem:[%s634 + $0x3c] sm:$0xf] %v665
                $region112: #{ernie_layout_self_attention.3} parent=99 // loop_footer
                  %s632 = sadd.s32 1, %s628
                $region113: #{ernie_layout_self_attention.3} parent=99 // loop_footer_branch
                  %627 = sbr.rel target = $region109
                $region114: #{ernie_layout_self_attention.3} parent=99 // loop_exit
                  _
              $region100: #{ernie_layout_self_attention.3} parent=84 // pred_fallthru
                _
            $region85: #{ernie_layout_self_attention.3} parent=80 // pred_fallthru
              _
            // Predicated region
            $region86: #{ernie_layout_self_attention.3} parent=80 // pred_check
              _
            $region87: #{ernie_layout_self_attention.3} parent=80 // pred_check_branch
              %574 = sbr.rel (0) target = $region89
            $region88: #{ernie_layout_self_attention.3} parent=80 // pred_region
              loop: start=0, step=1, limit=1
              $region90: #{ernie_layout_self_attention.3} parent=88 // loop_pre_header
                _
              $region91: #{ernie_layout_self_attention.3} parent=88 // loop_header
                %s577 = sphi 0, %s581
                %p578 = scmp.ge.s32.totalorder %s577, 1
                %s582 = sphi %s568, %s568
                %s583 = sphi %s561, %s561
              $region92: #{ernie_layout_self_attention.3} parent=88 // loop_header_branch
                %580 = sbr.rel (%p578) target = $region96
              $region93: #{ernie_layout_self_attention.3} parent=88 // loop_body
                %v584 = vld [vmem:[%s582] sm:$0xf]
                %585 = vst [vmem:[%s583] sm:$0xf] %v584
                %v586 = vld [vmem:[%s582 + $0x18] sm:$0xf]
                %587 = vst [vmem:[%s583 + $0x4] sm:$0xf] %v586
                %v588 = vld [vmem:[%s582 + $0x30] sm:$0xf]
                %589 = vst [vmem:[%s583 + $0x8] sm:$0xf] %v588
                %v590 = vld [vmem:[%s582 + $0x48] sm:$0xf]
                %591 = vst [vmem:[%s583 + $0xc] sm:$0xf] %v590
                %v592 = vld [vmem:[%s582 + $0x60] sm:$0xf]
                %593 = vst [vmem:[%s583 + $0x10] sm:$0xf] %v592
                %v594 = vld [vmem:[%s582 + $0x78] sm:$0xf]
                %595 = vst [vmem:[%s583 + $0x14] sm:$0xf] %v594
                %v596 = vld [vmem:[%s582 + $0x90] sm:$0xf]
                %597 = vst [vmem:[%s583 + $0x18] sm:$0xf] %v596
                %v598 = vld [vmem:[%s582 + $0xa8] sm:$0xf]
                %599 = vst [vmem:[%s583 + $0x1c] sm:$0xf] %v598
                %v600 = vld [vmem:[%s582 + $0xc0] sm:$0xf]
                %601 = vst [vmem:[%s583 + $0x20] sm:$0xf] %v600
                %v602 = vld [vmem:[%s582 + $0xd8] sm:$0xf]
                %603 = vst [vmem:[%s583 + $0x24] sm:$0xf] %v602
                %v604 = vld [vmem:[%s582 + $0xf0] sm:$0xf]
                %605 = vst [vmem:[%s583 + $0x28] sm:$0xf] %v604
                %v606 = vld [vmem:[%s582 + $0x108] sm:$0xf]
                %607 = vst [vmem:[%s583 + $0x2c] sm:$0xf] %v606
                %v608 = vld [vmem:[%s582 + $0x120] sm:$0xf]
                %609 = vst [vmem:[%s583 + $0x30] sm:$0xf] %v608
                %v610 = vld [vmem:[%s582 + $0x138] sm:$0xf]
                %611 = vst [vmem:[%s583 + $0x34] sm:$0xf] %v610
                %v612 = vld [vmem:[%s582 + $0x150] sm:$0xf]
                %613 = vst [vmem:[%s583 + $0x38] sm:$0xf] %v612
                %v614 = vld [vmem:[%s582 + $0x168] sm:$0xf]
                %615 = vst [vmem:[%s583 + $0x3c] sm:$0xf] %v614
              $region94: #{ernie_layout_self_attention.3} parent=88 // loop_footer
                %s581 = sadd.s32 1, %s577
              $region95: #{ernie_layout_self_attention.3} parent=88 // loop_footer_branch
                %576 = sbr.rel target = $region91
              $region96: #{ernie_layout_self_attention.3} parent=88 // loop_exit
                _
            $region89: #{ernie_layout_self_attention.3} parent=80 // pred_fallthru
              _
          $region81: #{ernie_layout_self_attention.3} parent=76 // pred_fallthru
            _
          %667 = vnop
        $region77: #{ernie_layout_self_attention.3} parent=31 // pred_fallthru
          _
        // Predicated region
        $region115: #{ernie_layout_self_attention.3} parent=31 // pred_check
          %p668 = pneg %p134
        $region116: #{ernie_layout_self_attention.3} parent=31 // pred_check_branch
          %670 = sbr.rel (%p668) target = $region118
        $region117: #{ernie_layout_self_attention.3} parent=31 // pred_region
          %s671 = sand.u32 %s124, 1
          %s672 = sand.u32 %s124, 1
          %s673 = smul.addr %s672, 64
          %s674 = scalar_lea.vmem [#allocation7], %s673
          %s675 = sadd.s32 %s28, %s30
          %s676 = sadd.s32 %s27, 4
          %s677 = smul.u32 16, %s675
          %s678 = smul.addr %s677, 6
          %s679 = sadd.s32 %s676, %s678
          %s680 = smul.addr %s679, 4
          %s681 = scalar_lea.vmem %s2, %s680
          // Predicated region
          $region119: #{ernie_layout_self_attention.3} parent=117 // pred_check
            _
          $region120: #{ernie_layout_self_attention.3} parent=117 // pred_check_branch
            %683 = sbr.rel (0) target = $region122
          $region121: #{ernie_layout_self_attention.3} parent=117 // pred_region
            // Predicated region
            $region123: #{ernie_layout_self_attention.3} parent=121 // pred_check
              _
            $region124: #{ernie_layout_self_attention.3} parent=121 // pred_check_branch
              %685 = sbr.rel target = $region126
            $region125: #{ernie_layout_self_attention.3} parent=121 // pred_region
              // Predicated region
              $region138: #{ernie_layout_self_attention.3} parent=125 // pred_check
                _
              $region139: #{ernie_layout_self_attention.3} parent=125 // pred_check_branch
                %730 = sbr.rel (0) target = $region141
              $region140: #{ernie_layout_self_attention.3} parent=125 // pred_region
                loop: start=0, step=1, limit=1
                $region142: #{ernie_layout_self_attention.3} parent=140 // loop_pre_header
                  _
                $region143: #{ernie_layout_self_attention.3} parent=140 // loop_header
                  %s732 = sphi 0, %s736
                  %p733 = scmp.ge.s32.totalorder %s732, 1
                  %s737 = sphi %s681, %s681
                  %s738 = sphi %s674, %s674
                $region144: #{ernie_layout_self_attention.3} parent=140 // loop_header_branch
                  %735 = sbr.rel (%p733) target = $region148
                $region145: #{ernie_layout_self_attention.3} parent=140 // loop_body
                  _
                $region146: #{ernie_layout_self_attention.3} parent=140 // loop_footer
                  %s736 = sadd.s32 1, %s732
                $region147: #{ernie_layout_self_attention.3} parent=140 // loop_footer_branch
                  %731 = sbr.rel target = $region143
                $region148: #{ernie_layout_self_attention.3} parent=140 // loop_exit
                  _
                loop: start=0, step=1, limit=1
                $region149: #{ernie_layout_self_attention.3} parent=140 // loop_pre_header
                  _
                $region150: #{ernie_layout_self_attention.3} parent=140 // loop_header
                  %s741 = sphi 0, %s745
                  %p742 = scmp.ge.s32.totalorder %s741, 1
                  %s746 = sphi %s681, %s681
                  %s747 = sphi %s674, %s674
                $region151: #{ernie_layout_self_attention.3} parent=140 // loop_header_branch
                  %744 = sbr.rel (%p742) target = $region155
                $region152: #{ernie_layout_self_attention.3} parent=140 // loop_body
                  %v748 = vld [vmem:[%s746] sm:$0xf]
                  %749 = vst [vmem:[%s747] sm:$0xf] %v748
                  %v750 = vld [vmem:[%s746 + $0x18] sm:$0xf]
                  %751 = vst [vmem:[%s747 + $0x4] sm:$0xf] %v750
                  %v752 = vld [vmem:[%s746 + $0x30] sm:$0xf]
                  %753 = vst [vmem:[%s747 + $0x8] sm:$0xf] %v752
                  %v754 = vld [vmem:[%s746 + $0x48] sm:$0xf]
                  %755 = vst [vmem:[%s747 + $0xc] sm:$0xf] %v754
                  %v756 = vld [vmem:[%s746 + $0x60] sm:$0xf]
                  %757 = vst [vmem:[%s747 + $0x10] sm:$0xf] %v756
                  %v758 = vld [vmem:[%s746 + $0x78] sm:$0xf]
                  %759 = vst [vmem:[%s747 + $0x14] sm:$0xf] %v758
                  %v760 = vld [vmem:[%s746 + $0x90] sm:$0xf]
                  %761 = vst [vmem:[%s747 + $0x18] sm:$0xf] %v760
                  %v762 = vld [vmem:[%s746 + $0xa8] sm:$0xf]
                  %763 = vst [vmem:[%s747 + $0x1c] sm:$0xf] %v762
                  %v764 = vld [vmem:[%s746 + $0xc0] sm:$0xf]
                  %765 = vst [vmem:[%s747 + $0x20] sm:$0xf] %v764
                  %v766 = vld [vmem:[%s746 + $0xd8] sm:$0xf]
                  %767 = vst [vmem:[%s747 + $0x24] sm:$0xf] %v766
                  %v768 = vld [vmem:[%s746 + $0xf0] sm:$0xf]
                  %769 = vst [vmem:[%s747 + $0x28] sm:$0xf] %v768
                  %v770 = vld [vmem:[%s746 + $0x108] sm:$0xf]
                  %771 = vst [vmem:[%s747 + $0x2c] sm:$0xf] %v770
                  %v772 = vld [vmem:[%s746 + $0x120] sm:$0xf]
                  %773 = vst [vmem:[%s747 + $0x30] sm:$0xf] %v772
                  %v774 = vld [vmem:[%s746 + $0x138] sm:$0xf]
                  %775 = vst [vmem:[%s747 + $0x34] sm:$0xf] %v774
                  %v776 = vld [vmem:[%s746 + $0x150] sm:$0xf]
                  %777 = vst [vmem:[%s747 + $0x38] sm:$0xf] %v776
                  %v778 = vld [vmem:[%s746 + $0x168] sm:$0xf]
                  %779 = vst [vmem:[%s747 + $0x3c] sm:$0xf] %v778
                $region153: #{ernie_layout_self_attention.3} parent=140 // loop_footer
                  %s745 = sadd.s32 1, %s741
                $region154: #{ernie_layout_self_attention.3} parent=140 // loop_footer_branch
                  %740 = sbr.rel target = $region150
                $region155: #{ernie_layout_self_attention.3} parent=140 // loop_exit
                  _
              $region141: #{ernie_layout_self_attention.3} parent=125 // pred_fallthru
                _
            $region126: #{ernie_layout_self_attention.3} parent=121 // pred_fallthru
              _
            // Predicated region
            $region127: #{ernie_layout_self_attention.3} parent=121 // pred_check
              _
            $region128: #{ernie_layout_self_attention.3} parent=121 // pred_check_branch
              %687 = sbr.rel (0) target = $region130
            $region129: #{ernie_layout_self_attention.3} parent=121 // pred_region
              loop: start=0, step=1, limit=1
              $region131: #{ernie_layout_self_attention.3} parent=129 // loop_pre_header
                _
              $region132: #{ernie_layout_self_attention.3} parent=129 // loop_header
                %s690 = sphi 0, %s694
                %p691 = scmp.ge.s32.totalorder %s690, 1
                %s695 = sphi %s681, %s681
                %s696 = sphi %s674, %s674
              $region133: #{ernie_layout_self_attention.3} parent=129 // loop_header_branch
                %693 = sbr.rel (%p691) target = $region137
              $region134: #{ernie_layout_self_attention.3} parent=129 // loop_body
                %v697 = vld [vmem:[%s695] sm:$0xf]
                %698 = vst [vmem:[%s696] sm:$0xf] %v697
                %v699 = vld [vmem:[%s695 + $0x18] sm:$0xf]
                %700 = vst [vmem:[%s696 + $0x4] sm:$0xf] %v699
                %v701 = vld [vmem:[%s695 + $0x30] sm:$0xf]
                %702 = vst [vmem:[%s696 + $0x8] sm:$0xf] %v701
                %v703 = vld [vmem:[%s695 + $0x48] sm:$0xf]
                %704 = vst [vmem:[%s696 + $0xc] sm:$0xf] %v703
                %v705 = vld [vmem:[%s695 + $0x60] sm:$0xf]
                %706 = vst [vmem:[%s696 + $0x10] sm:$0xf] %v705
                %v707 = vld [vmem:[%s695 + $0x78] sm:$0xf]
                %708 = vst [vmem:[%s696 + $0x14] sm:$0xf] %v707
                %v709 = vld [vmem:[%s695 + $0x90] sm:$0xf]
                %710 = vst [vmem:[%s696 + $0x18] sm:$0xf] %v709
                %v711 = vld [vmem:[%s695 + $0xa8] sm:$0xf]
                %712 = vst [vmem:[%s696 + $0x1c] sm:$0xf] %v711
                %v713 = vld [vmem:[%s695 + $0xc0] sm:$0xf]
                %714 = vst [vmem:[%s696 + $0x20] sm:$0xf] %v713
                %v715 = vld [vmem:[%s695 + $0xd8] sm:$0xf]
                %716 = vst [vmem:[%s696 + $0x24] sm:$0xf] %v715
                %v717 = vld [vmem:[%s695 + $0xf0] sm:$0xf]
                %718 = vst [vmem:[%s696 + $0x28] sm:$0xf] %v717
                %v719 = vld [vmem:[%s695 + $0x108] sm:$0xf]
                %720 = vst [vmem:[%s696 + $0x2c] sm:$0xf] %v719
                %v721 = vld [vmem:[%s695 + $0x120] sm:$0xf]
                %722 = vst [vmem:[%s696 + $0x30] sm:$0xf] %v721
                %v723 = vld [vmem:[%s695 + $0x138] sm:$0xf]
                %724 = vst [vmem:[%s696 + $0x34] sm:$0xf] %v723
                %v725 = vld [vmem:[%s695 + $0x150] sm:$0xf]
                %726 = vst [vmem:[%s696 + $0x38] sm:$0xf] %v725
                %v727 = vld [vmem:[%s695 + $0x168] sm:$0xf]
                %728 = vst [vmem:[%s696 + $0x3c] sm:$0xf] %v727
              $region135: #{ernie_layout_self_attention.3} parent=129 // loop_footer
                %s694 = sadd.s32 1, %s690
              $region136: #{ernie_layout_self_attention.3} parent=129 // loop_footer_branch
                %689 = sbr.rel target = $region132
              $region137: #{ernie_layout_self_attention.3} parent=129 // loop_exit
                _
            $region130: #{ernie_layout_self_attention.3} parent=121 // pred_fallthru
              _
          $region122: #{ernie_layout_self_attention.3} parent=117 // pred_fallthru
            _
          %780 = vnop
        $region118: #{ernie_layout_self_attention.3} parent=31 // pred_fallthru
          _
        // Predicated region
        $region156: #{ernie_layout_self_attention.3} parent=31 // pred_check
          %p781 = pneg %p164
        $region157: #{ernie_layout_self_attention.3} parent=31 // pred_check_branch
          %783 = sbr.rel (%p781) target = $region159
        $region158: #{ernie_layout_self_attention.3} parent=31 // pred_region
          %s784 = smul.u32 16, %s29
          %p785 = scmp.lt.s32.totalorder %s27, 1
          %s786 = scalar_select %p785, %s27, 1
          %p787 = scmp.lt.s32.totalorder %s784, 15
          %s788 = scalar_select %p787, %s784, 15
          %p789 = scmp.lt.s32.totalorder %s30, 0
          %s790 = scalar_select %p789, %s30, 0
          %s791 = sadd.s32 %s790, %s788
          %s792 = smul.addr %s786, 16
          %s793 = sadd.s32 %s791, %s792
          %s794 = smul.addr %s793, 8
          %s795 = scalar_lea.vmem %s3, %s794
          %s796 = smul.u32 16, %s29
        $region159: #{ernie_layout_self_attention.3} parent=31 // pred_fallthru
          _
        // Predicated region
        $region160: #{ernie_layout_self_attention.3} parent=31 // pred_check
          %p797 = pneg %p194
        $region161: #{ernie_layout_self_attention.3} parent=31 // pred_check_branch
          %799 = sbr.rel (%p797) target = $region163
        $region162: #{ernie_layout_self_attention.3} parent=31 // pred_region
          %s800 = smul.u32 16, %s29
          %p801 = scmp.lt.s32.totalorder %s27, 1
          %s802 = scalar_select %p801, %s27, 1
          %p803 = scmp.lt.s32.totalorder %s800, 15
          %s804 = scalar_select %p803, %s800, 15
          %p805 = scmp.lt.s32.totalorder %s30, 0
          %s806 = scalar_select %p805, %s30, 0
          %s807 = sadd.s32 %s806, %s804
          %s808 = smul.addr %s802, 16
          %s809 = sadd.s32 %s807, %s808
          %s810 = smul.addr %s809, 8
          %s811 = scalar_lea.vmem %s4, %s810
          %s812 = smul.u32 16, %s29
        $region163: #{ernie_layout_self_attention.3} parent=31 // pred_fallthru
          _
        // Predicated region
        $region164: #{ernie_layout_self_attention.3} parent=31 // pred_check
          %p813 = pneg %p222
        $region165: #{ernie_layout_self_attention.3} parent=31 // pred_check_branch
          %815 = sbr.rel (%p813) target = $region167
        $region166: #{ernie_layout_self_attention.3} parent=31 // pred_region
          %p816 = scmp.lt.s32.totalorder %s28, 1
          %s817 = scalar_select %p816, %s28, 1
          %p818 = scmp.lt.s32.totalorder %s30, 0
          %s819 = scalar_select %p818, %s30, 0
          %s820 = sadd.s32 %s819, %s817
          %s821 = scalar_lea.vmem %s5, %s820
        $region167: #{ernie_layout_self_attention.3} parent=31 // pred_fallthru
          _
        // Predicated region
        $region168: #{ernie_layout_self_attention.3} parent=31 // pred_check
          %p822 = pneg %p248
        $region169: #{ernie_layout_self_attention.3} parent=31 // pred_check_branch
          %824 = sbr.rel (%p822) target = $region171
        $region170: #{ernie_layout_self_attention.3} parent=31 // pred_region
          %p825 = scmp.lt.s32.totalorder %s27, 1
          %s826 = scalar_select %p825, %s27, 1
          %s827 = scalar_lea.vmem %s6, %s826
        $region171: #{ernie_layout_self_attention.3} parent=31 // pred_fallthru
          _
      $region32: #{ernie_layout_self_attention.3} parent=5 // pred_fallthru
        _
      %p828 = scmp.le.s32.totalorder 1, %s20
      %p829 = scmp.lt.s32.totalorder %s20, 5
      %p830 = pnand %p828, %p829
      %p831 = pneg %p830
      // Predicated region
      $region172: #{ernie_layout_self_attention.3} parent=5 // pred_check
        _
      $region173: #{ernie_layout_self_attention.3} parent=5 // pred_check_branch
        %833 = sbr.rel (%p830) target = $region175
      $region174: #{ernie_layout_self_attention.3} parent=5 // pred_region
        %s834 = ssub.s32 %s20, 1
        %s835 = sand.u32 %s63, 1
        %s836 = sand.u32 %s63, 1
        %s837 = smul.addr %s836, 64
        %s838 = scalar_lea.vmem [#allocation5], %s837
        // Predicated region
        $region176: #{ernie_layout_self_attention.3} parent=174 // pred_check
          %p839 = pneg %p76
        $region177: #{ernie_layout_self_attention.3} parent=174 // pred_check_branch
          %841 = sbr.rel (%p839) target = $region179
        $region178: #{ernie_layout_self_attention.3} parent=174 // pred_region
          _
        $region179: #{ernie_layout_self_attention.3} parent=174 // pred_fallthru
          _
        %s842 = sand.u32 %s95, 1
        %s843 = sand.u32 %s95, 1
        %s844 = smul.addr %s843, 64
        %s845 = scalar_lea.vmem [#allocation6], %s844
        // Predicated region
        $region180: #{ernie_layout_self_attention.3} parent=174 // pred_check
          %p846 = pneg %p108
        $region181: #{ernie_layout_self_attention.3} parent=174 // pred_check_branch
          %848 = sbr.rel (%p846) target = $region183
        $region182: #{ernie_layout_self_attention.3} parent=174 // pred_region
          _
        $region183: #{ernie_layout_self_attention.3} parent=174 // pred_fallthru
          _
        %s849 = sand.u32 %s127, 1
        %s850 = sand.u32 %s127, 1
        %s851 = smul.addr %s850, 64
        %s852 = scalar_lea.vmem [#allocation7], %s851
        // Predicated region
        $region184: #{ernie_layout_self_attention.3} parent=174 // pred_check
          %p853 = pneg %p140
        $region185: #{ernie_layout_self_attention.3} parent=174 // pred_check_branch
          %855 = sbr.rel (%p853) target = $region187
        $region186: #{ernie_layout_self_attention.3} parent=174 // pred_region
          _
        $region187: #{ernie_layout_self_attention.3} parent=174 // pred_fallthru
          _
        %s856 = sand.u32 %s63, 1
        %s857 = sand.u32 %s63, 1
        %s858 = smul.addr %s857, 64
        %s859 = scalar_lea.vmem [#allocation5], %s858
        %p860 = pneg %p76
        %p861 = pneg %p73
        %s862 = sand.u32 %s95, 1
        %s863 = sand.u32 %s95, 1
        %s864 = smul.addr %s863, 64
        %s865 = scalar_lea.vmem [#allocation6], %s864
        %p866 = pneg %p108
        %p867 = pneg %p105
        %s868 = sand.u32 %s127, 1
        %s869 = sand.u32 %s127, 1
        %s870 = smul.addr %s869, 64
        %s871 = scalar_lea.vmem [#allocation7], %s870
        %p872 = pneg %p140
        %p873 = pneg %p137
        %s874 = smul.u32 16, %s33
        %p875 = scmp.lt.s32.totalorder %s31, 1
        %s876 = scalar_select %p875, %s31, 1
        %p877 = scmp.lt.s32.totalorder %s874, 15
        %s878 = scalar_select %p877, %s874, 15
        %p879 = scmp.lt.s32.totalorder %s34, 0
        %s880 = scalar_select %p879, %s34, 0
        %s881 = sadd.s32 %s880, %s878
        %s882 = smul.addr %s876, 16
        %s883 = sadd.s32 %s881, %s882
        %s884 = smul.addr %s883, 8
        %s885 = scalar_lea.vmem %s3, %s884
        %p886 = pneg %p170
        %p887 = pneg %p167
        %s888 = smul.u32 16, %s33
        %p889 = scmp.lt.s32.totalorder %s31, 1
        %s890 = scalar_select %p889, %s31, 1
        %p891 = scmp.lt.s32.totalorder %s888, 15
        %s892 = scalar_select %p891, %s888, 15
        %p893 = scmp.lt.s32.totalorder %s34, 0
        %s894 = scalar_select %p893, %s34, 0
        %s895 = sadd.s32 %s894, %s892
        %s896 = smul.addr %s890, 16
        %s897 = sadd.s32 %s895, %s896
        %s898 = smul.addr %s897, 8
        %s899 = scalar_lea.vmem %s4, %s898
        %p900 = pneg %p200
        %p901 = pneg %p197
        %p902 = scmp.lt.s32.totalorder %s32, 1
        %s903 = scalar_select %p902, %s32, 1
        %p904 = scmp.lt.s32.totalorder %s34, 0
        %s905 = scalar_select %p904, %s34, 0
        %s906 = sadd.s32 %s905, %s903
        %s907 = scalar_lea.vmem %s5, %s906
        %p908 = pneg %p228
        %p909 = pneg %p225
        %p910 = scmp.lt.s32.totalorder %s31, 1
        %s911 = scalar_select %p910, %s31, 1
        %s912 = scalar_lea.vmem %s6, %s911
        %p913 = pneg %p254
        %p914 = pneg %p251
        %s915 = smul.u32 16, %s33
        %p916 = scmp.lt.s32.totalorder %s915, 15
        %s917 = scalar_select %p916, %s915, 15
        %s918 = smul.addr %s917, 8
        %s919 = scalar_lea.vmem %s7, %s918
        %p920 = pneg %p280
        %p921 = pneg %p277
        %s922 = smul.u32 16, %s33
        %p923 = scmp.lt.s32.totalorder %s922, 15
        %s924 = scalar_select %p923, %s922, 15
        %s925 = smul.addr %s924, 8
        %s926 = scalar_lea.vmem %s8, %s925
        %p927 = pneg %p306
        %p928 = pneg %p303
        %s929 = smul.u32 16, %s34
        %p930 = scmp.lt.s32.totalorder %s929, 15
        %s931 = scalar_select %p930, %s929, 15
        %s932 = smul.addr %s931, 8
        %s933 = scalar_lea.vmem %s9, %s932
        %p934 = pneg %p332
        %p935 = pneg %p329
        %s936 = smul.u32 16, %s34
        %p937 = scmp.lt.s32.totalorder %s936, 15
        %s938 = scalar_select %p937, %s936, 15
        %s939 = smul.addr %s938, 8
        %s940 = scalar_lea.vmem %s10, %s939
        %p941 = pneg %p358
        %p942 = pneg %p355
        %p943 = pneg %p388
        %p944 = pneg %p385
        %s945 = sand.u32 %s375, 1
        %s946 = scalar_lea.sflag [#allocation9], %s945
        %s947 = sand.u32 %s375, 1
        %s948 = smul.addr %s947, 128
        %s949 = scalar_lea.vmem [#allocation8], %s948
        %s950 = sadd.s32 %s32, %s33
        %s951 = smul.u32 16, %s950
        %s952 = sadd.s32 %s32, %s34
        %s953 = sadd.s32 %s31, 2
        %s954 = smul.u32 16, %s952
        %s955 = sadd.s32 %s32, %s34
        %s956 = sadd.s32 %s31, 4
        %s957 = smul.u32 16, %s955
        %s958 = smul.u32 16, %s33
        %p959 = scmp.lt.s32.totalorder %s31, 1
        %s960 = scalar_select %p959, %s31, 1
        %p961 = scmp.lt.s32.totalorder %s958, 15
        %s962 = scalar_select %p961, %s958, 15
        %p963 = scmp.lt.s32.totalorder %s34, 0
        %s964 = scalar_select %p963, %s34, 0
        %s965 = sadd.s32 %s964, %s962
        %s966 = smul.addr %s960, 16
        %s967 = sadd.s32 %s965, %s966
        %s968 = smul.addr %s967, 8
        %s969 = scalar_lea.vmem %s3, %s968
        %s970 = smul.u32 16, %s33
        %s971 = smul.u32 16, %s33
        %p972 = scmp.lt.s32.totalorder %s31, 1
        %s973 = scalar_select %p972, %s31, 1
        %p974 = scmp.lt.s32.totalorder %s971, 15
        %s975 = scalar_select %p974, %s971, 15
        %p976 = scmp.lt.s32.totalorder %s34, 0
        %s977 = scalar_select %p976, %s34, 0
        %s978 = sadd.s32 %s977, %s975
        %s979 = smul.addr %s973, 16
        %s980 = sadd.s32 %s978, %s979
        %s981 = smul.addr %s980, 8
        %s982 = scalar_lea.vmem %s4, %s981
        %s983 = smul.u32 16, %s33
        %p984 = scmp.lt.s32.totalorder %s32, 1
        %s985 = scalar_select %p984, %s32, 1
        %p986 = scmp.lt.s32.totalorder %s34, 0
        %s987 = scalar_select %p986, %s34, 0
        %s988 = sadd.s32 %s987, %s985
        %s989 = scalar_lea.vmem %s5, %s988
        %p990 = scmp.lt.s32.totalorder %s31, 1
        %s991 = scalar_select %p990, %s31, 1
        %s992 = scalar_lea.vmem %s6, %s991
        %s993 = smul.u32 16, %s33
        %p994 = scmp.lt.s32.totalorder %s993, 15
        %s995 = scalar_select %p994, %s993, 15
        %s996 = smul.addr %s995, 8
        %s997 = scalar_lea.vmem %s7, %s996
        %s998 = smul.u32 16, %s33
        %s999 = smul.u32 16, %s33
        %p1000 = scmp.lt.s32.totalorder %s999, 15
        %s1001 = scalar_select %p1000, %s999, 15
        %s1002 = smul.addr %s1001, 8
        %s1003 = scalar_lea.vmem %s8, %s1002
        %s1004 = smul.u32 16, %s33
        %s1005 = smul.u32 16, %s34
        %p1006 = scmp.lt.s32.totalorder %s1005, 15
        %s1007 = scalar_select %p1006, %s1005, 15
        %s1008 = smul.addr %s1007, 8
        %s1009 = scalar_lea.vmem %s9, %s1008
        %s1010 = smul.u32 16, %s34
        %s1011 = smul.u32 16, %s34
        %p1012 = scmp.lt.s32.totalorder %s1011, 15
        %s1013 = scalar_select %p1012, %s1011, 15
        %s1014 = smul.addr %s1013, 8
        %s1015 = scalar_lea.vmem %s10, %s1014
        %s1016 = smul.u32 16, %s34
        %s1017 = smul.u32 16, %s33
        %p1019 = scmp.eq.s32.totalorder %s34, 0
        // Predicated region
        $region188: #{ernie_layout_self_attention.3} parent=174 // pred_check
          %p1020 = pneg %p1019
        $region189: #{ernie_layout_self_attention.3} parent=174 // pred_check_branch
          %1022 = sbr.rel (%p1020) target = $region191
        $region190: #{ernie_layout_self_attention.3} parent=174 // pred_region
          %vm1023 = vcmask 7168
          %1024 = vst.msk [vmem:[#allocation2] sm:$0xff] %vm1023, -inf
          %1025 = vst.msk [vmem:[#allocation2 + $0x8] sm:$0xff] %vm1023, -inf
          %1026 = vst.msk [vmem:[#allocation2 + $0x10] sm:$0xff] %vm1023, -inf
          %1027 = vst.msk [vmem:[#allocation2 + $0x18] sm:$0xff] %vm1023, -inf
          %1028 = vst.msk [vmem:[#allocation2 + $0x20] sm:$0xff] %vm1023, -inf
          %1029 = vst.msk [vmem:[#allocation2 + $0x28] sm:$0xff] %vm1023, -inf
          %1030 = vst.msk [vmem:[#allocation2 + $0x30] sm:$0xff] %vm1023, -inf
          %1031 = vst.msk [vmem:[#allocation2 + $0x38] sm:$0xff] %vm1023, -inf
          %1032 = vst.msk [vmem:[#allocation2 + $0x40] sm:$0xff] %vm1023, -inf
          %1033 = vst.msk [vmem:[#allocation2 + $0x48] sm:$0xff] %vm1023, -inf
          %1034 = vst.msk [vmem:[#allocation2 + $0x50] sm:$0xff] %vm1023, -inf
          %1035 = vst.msk [vmem:[#allocation2 + $0x58] sm:$0xff] %vm1023, -inf
          %1036 = vst.msk [vmem:[#allocation2 + $0x60] sm:$0xff] %vm1023, -inf
          %1037 = vst.msk [vmem:[#allocation2 + $0x68] sm:$0xff] %vm1023, -inf
          %1038 = vst.msk [vmem:[#allocation2 + $0x70] sm:$0xff] %vm1023, -inf
          %1039 = vst.msk [vmem:[#allocation2 + $0x78] sm:$0xff] %vm1023, -inf
          %1040 = vst.msk [vmem:[#allocation3] sm:$0xff] %vm1023, 0.0
          %1041 = vst.msk [vmem:[#allocation3 + $0x8] sm:$0xff] %vm1023, 0.0
          %1042 = vst.msk [vmem:[#allocation3 + $0x10] sm:$0xff] %vm1023, 0.0
          %1043 = vst.msk [vmem:[#allocation3 + $0x18] sm:$0xff] %vm1023, 0.0
          %1044 = vst.msk [vmem:[#allocation3 + $0x20] sm:$0xff] %vm1023, 0.0
          %1045 = vst.msk [vmem:[#allocation3 + $0x28] sm:$0xff] %vm1023, 0.0
          %1046 = vst.msk [vmem:[#allocation3 + $0x30] sm:$0xff] %vm1023, 0.0
          %1047 = vst.msk [vmem:[#allocation3 + $0x38] sm:$0xff] %vm1023, 0.0
          %1048 = vst.msk [vmem:[#allocation3 + $0x40] sm:$0xff] %vm1023, 0.0
          %1049 = vst.msk [vmem:[#allocation3 + $0x48] sm:$0xff] %vm1023, 0.0
          %1050 = vst.msk [vmem:[#allocation3 + $0x50] sm:$0xff] %vm1023, 0.0
          %1051 = vst.msk [vmem:[#allocation3 + $0x58] sm:$0xff] %vm1023, 0.0
          %1052 = vst.msk [vmem:[#allocation3 + $0x60] sm:$0xff] %vm1023, 0.0
          %1053 = vst.msk [vmem:[#allocation3 + $0x68] sm:$0xff] %vm1023, 0.0
          %1054 = vst.msk [vmem:[#allocation3 + $0x70] sm:$0xff] %vm1023, 0.0
          %1055 = vst.msk [vmem:[#allocation3 + $0x78] sm:$0xff] %vm1023, 0.0
          %1056 = vst [vmem:[#allocation4] sm:$0xff] 0.0
          %1057 = vst [vmem:[#allocation4 + $0x8] sm:$0xff] 0.0
          %1058 = vst [vmem:[#allocation4 + $0x10] sm:$0xff] 0.0
          %1059 = vst [vmem:[#allocation4 + $0x18] sm:$0xff] 0.0
          %1060 = vst [vmem:[#allocation4 + $0x20] sm:$0xff] 0.0
          %1061 = vst [vmem:[#allocation4 + $0x28] sm:$0xff] 0.0
          %1062 = vst [vmem:[#allocation4 + $0x30] sm:$0xff] 0.0
          %1063 = vst [vmem:[#allocation4 + $0x38] sm:$0xff] 0.0
          %1064 = vst [vmem:[#allocation4 + $0x40] sm:$0xff] 0.0
          %1065 = vst [vmem:[#allocation4 + $0x48] sm:$0xff] 0.0
          %1066 = vst [vmem:[#allocation4 + $0x50] sm:$0xff] 0.0
          %1067 = vst [vmem:[#allocation4 + $0x58] sm:$0xff] 0.0
          %1068 = vst [vmem:[#allocation4 + $0x60] sm:$0xff] 0.0
          %1069 = vst [vmem:[#allocation4 + $0x68] sm:$0xff] 0.0
          %1070 = vst [vmem:[#allocation4 + $0x70] sm:$0xff] 0.0
          %1071 = vst [vmem:[#allocation4 + $0x78] sm:$0xff] 0.0
        $region191: #{ernie_layout_self_attention.3} parent=174 // pred_fallthru
          _
        %v1072 = vld [vmem:[%s845] sm:$0xf]
        %v1073 = vld [vmem:[%s845 + $0x4] sm:$0xf]
        %v1074 = vld [vmem:[%s845 + $0x8] sm:$0xf]
        %v1075 = vld [vmem:[%s845 + $0xc] sm:$0xf]
        %v1076 = vld [vmem:[%s845 + $0x10] sm:$0xf]
        %v1077 = vld [vmem:[%s845 + $0x14] sm:$0xf]
        %v1078 = vld [vmem:[%s845 + $0x18] sm:$0xf]
        %v1079 = vld [vmem:[%s845 + $0x1c] sm:$0xf]
        %v1080 = vld [vmem:[%s845 + $0x20] sm:$0xf]
        %v1081 = vld [vmem:[%s845 + $0x24] sm:$0xf]
        %v1082 = vld [vmem:[%s845 + $0x28] sm:$0xf]
        %v1083 = vld [vmem:[%s845 + $0x2c] sm:$0xf]
        %v1084 = vld [vmem:[%s845 + $0x30] sm:$0xf]
        %v1085 = vld [vmem:[%s845 + $0x34] sm:$0xf]
        %v1086 = vld [vmem:[%s845 + $0x38] sm:$0xf]
        %v1087 = vld [vmem:[%s845 + $0x3c] sm:$0xf]
        %v1088 = vunpack.c.l.bf16 %v1072
        %v1089 = vunpack.c.l.bf16 %v1073
        %v1090 = vunpack.c.l.bf16 %v1074
        %v1091 = vunpack.c.l.bf16 %v1075
        %v1092 = vunpack.c.l.bf16 %v1076
        %v1093 = vunpack.c.l.bf16 %v1077
        %v1094 = vunpack.c.l.bf16 %v1078
        %v1095 = vunpack.c.l.bf16 %v1079
        %v1096 = vunpack.c.l.bf16 %v1080
        %v1097 = vunpack.c.l.bf16 %v1081
        %v1098 = vunpack.c.l.bf16 %v1082
        %v1099 = vunpack.c.l.bf16 %v1083
        %v1100 = vunpack.c.l.bf16 %v1084
        %v1101 = vunpack.c.l.bf16 %v1085
        %v1102 = vunpack.c.l.bf16 %v1086
        %v1103 = vunpack.c.l.bf16 %v1087
        %v1104 = vld [vmem:[%s1009] sm:$0xff]
        %v1105 = vld [vmem:[%s1009 + $0x8] sm:$0xff]
        %v1106 = vld [vmem:[%s1009 + $0x10] sm:$0xff]
        %v1107 = vld [vmem:[%s1009 + $0x18] sm:$0xff]
        %v1108 = vld [vmem:[%s1009 + $0x20] sm:$0xff]
        %v1109 = vld [vmem:[%s1009 + $0x28] sm:$0xff]
        %v1110 = vld [vmem:[%s1009 + $0x30] sm:$0xff]
        %v1111 = vld [vmem:[%s1009 + $0x38] sm:$0xff]
        %v1112 = vld [vmem:[%s1009 + $0x40] sm:$0xff]
        %v1113 = vld [vmem:[%s1009 + $0x48] sm:$0xff]
        %v1114 = vld [vmem:[%s1009 + $0x50] sm:$0xff]
        %v1115 = vld [vmem:[%s1009 + $0x58] sm:$0xff]
        %v1116 = vld [vmem:[%s1009 + $0x60] sm:$0xff]
        %v1117 = vld [vmem:[%s1009 + $0x68] sm:$0xff]
        %v1118 = vld [vmem:[%s1009 + $0x70] sm:$0xff]
        %v1119 = vld [vmem:[%s1009 + $0x78] sm:$0xff]
        %v1120 = vmul.f32 %v1088, %v1104
        %v1121 = vmul.f32 %v1089, %v1105
        %v1122 = vmul.f32 %v1090, %v1106
        %v1123 = vmul.f32 %v1091, %v1107
        %v1124 = vmul.f32 %v1092, %v1108
        %v1125 = vmul.f32 %v1093, %v1109
        %v1126 = vmul.f32 %v1094, %v1110
        %v1127 = vmul.f32 %v1095, %v1111
        %v1128 = vmul.f32 %v1096, %v1112
        %v1129 = vmul.f32 %v1097, %v1113
        %v1130 = vmul.f32 %v1098, %v1114
        %v1131 = vmul.f32 %v1099, %v1115
        %v1132 = vmul.f32 %v1100, %v1116
        %v1133 = vmul.f32 %v1101, %v1117
        %v1134 = vmul.f32 %v1102, %v1118
        %v1135 = vmul.f32 %v1103, %v1119
        %1136 = vrot.lane.b32.xlu0 %v1088, 64
        %v1137 = vpop.permute.xlu0 %1136
        %1138 = vrot.lane.b32.xlu0 %v1089, 64
        %v1139 = vpop.permute.xlu0 %1138
        %1140 = vrot.lane.b32.xlu0 %v1090, 64
        %v1141 = vpop.permute.xlu0 %1140
        %1142 = vrot.lane.b32.xlu0 %v1091, 64
        %v1143 = vpop.permute.xlu0 %1142
        %1144 = vrot.lane.b32.xlu0 %v1092, 64
        %v1145 = vpop.permute.xlu0 %1144
        %1146 = vrot.lane.b32.xlu0 %v1093, 64
        %v1147 = vpop.permute.xlu0 %1146
        %1148 = vrot.lane.b32.xlu0 %v1094, 64
        %v1149 = vpop.permute.xlu0 %1148
        %1150 = vrot.lane.b32.xlu0 %v1095, 64
        %v1151 = vpop.permute.xlu0 %1150
        %1152 = vrot.lane.b32.xlu0 %v1096, 64
        %v1153 = vpop.permute.xlu0 %1152
        %1154 = vrot.lane.b32.xlu0 %v1097, 64
        %v1155 = vpop.permute.xlu0 %1154
        %1156 = vrot.lane.b32.xlu0 %v1098, 64
        %v1157 = vpop.permute.xlu0 %1156
        %1158 = vrot.lane.b32.xlu0 %v1099, 64
        %v1159 = vpop.permute.xlu0 %1158
        %1160 = vrot.lane.b32.xlu0 %v1100, 64
        %v1161 = vpop.permute.xlu0 %1160
        %1162 = vrot.lane.b32.xlu0 %v1101, 64
        %v1163 = vpop.permute.xlu0 %1162
        %1164 = vrot.lane.b32.xlu0 %v1102, 64
        %v1165 = vpop.permute.xlu0 %1164
        %1166 = vrot.lane.b32.xlu0 %v1103, 64
        %v1167 = vpop.permute.xlu0 %1166
        %v1168 = vld [vmem:[%s1015] sm:$0xff]
        %v1169 = vld [vmem:[%s1015 + $0x8] sm:$0xff]
        %v1170 = vld [vmem:[%s1015 + $0x10] sm:$0xff]
        %v1171 = vld [vmem:[%s1015 + $0x18] sm:$0xff]
        %v1172 = vld [vmem:[%s1015 + $0x20] sm:$0xff]
        %v1173 = vld [vmem:[%s1015 + $0x28] sm:$0xff]
        %v1174 = vld [vmem:[%s1015 + $0x30] sm:$0xff]
        %v1175 = vld [vmem:[%s1015 + $0x38] sm:$0xff]
        %v1176 = vld [vmem:[%s1015 + $0x40] sm:$0xff]
        %v1177 = vld [vmem:[%s1015 + $0x48] sm:$0xff]
        %v1178 = vld [vmem:[%s1015 + $0x50] sm:$0xff]
        %v1179 = vld [vmem:[%s1015 + $0x58] sm:$0xff]
        %v1180 = vld [vmem:[%s1015 + $0x60] sm:$0xff]
        %v1181 = vld [vmem:[%s1015 + $0x68] sm:$0xff]
        %v1182 = vld [vmem:[%s1015 + $0x70] sm:$0xff]
        %v1183 = vld [vmem:[%s1015 + $0x78] sm:$0xff]
        %v1184 = vmul.f32 %v1137, %v1168
        %v1185 = vmul.f32 %v1139, %v1169
        %v1186 = vmul.f32 %v1141, %v1170
        %v1187 = vmul.f32 %v1143, %v1171
        %v1188 = vmul.f32 %v1145, %v1172
        %v1189 = vmul.f32 %v1147, %v1173
        %v1190 = vmul.f32 %v1149, %v1174
        %v1191 = vmul.f32 %v1151, %v1175
        %v1192 = vmul.f32 %v1153, %v1176
        %v1193 = vmul.f32 %v1155, %v1177
        %v1194 = vmul.f32 %v1157, %v1178
        %v1195 = vmul.f32 %v1159, %v1179
        %v1196 = vmul.f32 %v1161, %v1180
        %v1197 = vmul.f32 %v1163, %v1181
        %v1198 = vmul.f32 %v1165, %v1182
        %v1199 = vmul.f32 %v1167, %v1183
        %v1200 = vadd.f32 %v1120, %v1184
        %v1201 = vadd.f32 %v1121, %v1185
        %v1202 = vadd.f32 %v1122, %v1186
        %v1203 = vadd.f32 %v1123, %v1187
        %v1204 = vadd.f32 %v1124, %v1188
        %v1205 = vadd.f32 %v1125, %v1189
        %v1206 = vadd.f32 %v1126, %v1190
        %v1207 = vadd.f32 %v1127, %v1191
        %v1208 = vadd.f32 %v1128, %v1192
        %v1209 = vadd.f32 %v1129, %v1193
        %v1210 = vadd.f32 %v1130, %v1194
        %v1211 = vadd.f32 %v1131, %v1195
        %v1212 = vadd.f32 %v1132, %v1196
        %v1213 = vadd.f32 %v1133, %v1197
        %v1214 = vadd.f32 %v1134, %v1198
        %v1215 = vadd.f32 %v1135, %v1199
        %v1216 = vpack.c.bf16 %v1201, %v1200
        %v1217 = vpack.c.bf16 %v1203, %v1202
        %v1218 = vpack.c.bf16 %v1205, %v1204
        %v1219 = vpack.c.bf16 %v1207, %v1206
        %v1220 = vpack.c.bf16 %v1209, %v1208
        %v1221 = vpack.c.bf16 %v1211, %v1210
        %v1222 = vpack.c.bf16 %v1213, %v1212
        %v1223 = vpack.c.bf16 %v1215, %v1214
        %v1224 = vld [vmem:[%s838] sm:$0xf]
        %v1225 = vld [vmem:[%s838 + $0x4] sm:$0xf]
        %v1226 = vld [vmem:[%s838 + $0x8] sm:$0xf]
        %v1227 = vld [vmem:[%s838 + $0xc] sm:$0xf]
        %v1228 = vld [vmem:[%s838 + $0x10] sm:$0xf]
        %v1229 = vld [vmem:[%s838 + $0x14] sm:$0xf]
        %v1230 = vld [vmem:[%s838 + $0x18] sm:$0xf]
        %v1231 = vld [vmem:[%s838 + $0x1c] sm:$0xf]
        %v1232 = vld [vmem:[%s838 + $0x20] sm:$0xf]
        %v1233 = vld [vmem:[%s838 + $0x24] sm:$0xf]
        %v1234 = vld [vmem:[%s838 + $0x28] sm:$0xf]
        %v1235 = vld [vmem:[%s838 + $0x2c] sm:$0xf]
        %v1236 = vld [vmem:[%s838 + $0x30] sm:$0xf]
        %v1237 = vld [vmem:[%s838 + $0x34] sm:$0xf]
        %v1238 = vld [vmem:[%s838 + $0x38] sm:$0xf]
        %v1239 = vld [vmem:[%s838 + $0x3c] sm:$0xf]
        %v1240 = vunpack.c.l.bf16 %v1224
        %v1241 = vunpack.c.l.bf16 %v1225
        %v1242 = vunpack.c.l.bf16 %v1226
        %v1243 = vunpack.c.l.bf16 %v1227
        %v1244 = vunpack.c.l.bf16 %v1228
        %v1245 = vunpack.c.l.bf16 %v1229
        %v1246 = vunpack.c.l.bf16 %v1230
        %v1247 = vunpack.c.l.bf16 %v1231
        %v1248 = vunpack.c.l.bf16 %v1232
        %v1249 = vunpack.c.l.bf16 %v1233
        %v1250 = vunpack.c.l.bf16 %v1234
        %v1251 = vunpack.c.l.bf16 %v1235
        %v1252 = vunpack.c.l.bf16 %v1236
        %v1253 = vunpack.c.l.bf16 %v1237
        %v1254 = vunpack.c.l.bf16 %v1238
        %v1255 = vunpack.c.l.bf16 %v1239
        %v1256 = vld [vmem:[%s997] sm:$0xff]
        %v1257 = vld [vmem:[%s997 + $0x8] sm:$0xff]
        %v1258 = vld [vmem:[%s997 + $0x10] sm:$0xff]
        %v1259 = vld [vmem:[%s997 + $0x18] sm:$0xff]
        %v1260 = vld [vmem:[%s997 + $0x20] sm:$0xff]
        %v1261 = vld [vmem:[%s997 + $0x28] sm:$0xff]
        %v1262 = vld [vmem:[%s997 + $0x30] sm:$0xff]
        %v1263 = vld [vmem:[%s997 + $0x38] sm:$0xff]
        %v1264 = vld [vmem:[%s997 + $0x40] sm:$0xff]
        %v1265 = vld [vmem:[%s997 + $0x48] sm:$0xff]
        %v1266 = vld [vmem:[%s997 + $0x50] sm:$0xff]
        %v1267 = vld [vmem:[%s997 + $0x58] sm:$0xff]
        %v1268 = vld [vmem:[%s997 + $0x60] sm:$0xff]
        %v1269 = vld [vmem:[%s997 + $0x68] sm:$0xff]
        %v1270 = vld [vmem:[%s997 + $0x70] sm:$0xff]
        %v1271 = vld [vmem:[%s997 + $0x78] sm:$0xff]
        %v1272 = vmul.f32 %v1240, %v1256
        %v1273 = vmul.f32 %v1241, %v1257
        %v1274 = vmul.f32 %v1242, %v1258
        %v1275 = vmul.f32 %v1243, %v1259
        %v1276 = vmul.f32 %v1244, %v1260
        %v1277 = vmul.f32 %v1245, %v1261
        %v1278 = vmul.f32 %v1246, %v1262
        %v1279 = vmul.f32 %v1247, %v1263
        %v1280 = vmul.f32 %v1248, %v1264
        %v1281 = vmul.f32 %v1249, %v1265
        %v1282 = vmul.f32 %v1250, %v1266
        %v1283 = vmul.f32 %v1251, %v1267
        %v1284 = vmul.f32 %v1252, %v1268
        %v1285 = vmul.f32 %v1253, %v1269
        %v1286 = vmul.f32 %v1254, %v1270
        %v1287 = vmul.f32 %v1255, %v1271
        %1288 = vrot.lane.b32.xlu0 %v1240, 64
        %v1289 = vpop.permute.xlu0 %1288
        %1290 = vrot.lane.b32.xlu0 %v1241, 64
        %v1291 = vpop.permute.xlu0 %1290
        %1292 = vrot.lane.b32.xlu0 %v1242, 64
        %v1293 = vpop.permute.xlu0 %1292
        %1294 = vrot.lane.b32.xlu0 %v1243, 64
        %v1295 = vpop.permute.xlu0 %1294
        %1296 = vrot.lane.b32.xlu0 %v1244, 64
        %v1297 = vpop.permute.xlu0 %1296
        %1298 = vrot.lane.b32.xlu0 %v1245, 64
        %v1299 = vpop.permute.xlu0 %1298
        %1300 = vrot.lane.b32.xlu0 %v1246, 64
        %v1301 = vpop.permute.xlu0 %1300
        %1302 = vrot.lane.b32.xlu0 %v1247, 64
        %v1303 = vpop.permute.xlu0 %1302
        %1304 = vrot.lane.b32.xlu0 %v1248, 64
        %v1305 = vpop.permute.xlu0 %1304
        %1306 = vrot.lane.b32.xlu0 %v1249, 64
        %v1307 = vpop.permute.xlu0 %1306
        %1308 = vrot.lane.b32.xlu0 %v1250, 64
        %v1309 = vpop.permute.xlu0 %1308
        %1310 = vrot.lane.b32.xlu0 %v1251, 64
        %v1311 = vpop.permute.xlu0 %1310
        %1312 = vrot.lane.b32.xlu0 %v1252, 64
        %v1313 = vpop.permute.xlu0 %1312
        %1314 = vrot.lane.b32.xlu0 %v1253, 64
        %v1315 = vpop.permute.xlu0 %1314
        %1316 = vrot.lane.b32.xlu0 %v1254, 64
        %v1317 = vpop.permute.xlu0 %1316
        %1318 = vrot.lane.b32.xlu0 %v1255, 64
        %v1319 = vpop.permute.xlu0 %1318
        %v1320 = vld [vmem:[%s1003] sm:$0xff]
        %v1321 = vld [vmem:[%s1003 + $0x8] sm:$0xff]
        %v1322 = vld [vmem:[%s1003 + $0x10] sm:$0xff]
        %v1323 = vld [vmem:[%s1003 + $0x18] sm:$0xff]
        %v1324 = vld [vmem:[%s1003 + $0x20] sm:$0xff]
        %v1325 = vld [vmem:[%s1003 + $0x28] sm:$0xff]
        %v1326 = vld [vmem:[%s1003 + $0x30] sm:$0xff]
        %v1327 = vld [vmem:[%s1003 + $0x38] sm:$0xff]
        %v1328 = vld [vmem:[%s1003 + $0x40] sm:$0xff]
        %v1329 = vld [vmem:[%s1003 + $0x48] sm:$0xff]
        %v1330 = vld [vmem:[%s1003 + $0x50] sm:$0xff]
        %v1331 = vld [vmem:[%s1003 + $0x58] sm:$0xff]
        %v1332 = vld [vmem:[%s1003 + $0x60] sm:$0xff]
        %v1333 = vld [vmem:[%s1003 + $0x68] sm:$0xff]
        %v1334 = vld [vmem:[%s1003 + $0x70] sm:$0xff]
        %v1335 = vld [vmem:[%s1003 + $0x78] sm:$0xff]
        %v1336 = vmul.f32 %v1289, %v1320
        %v1337 = vmul.f32 %v1291, %v1321
        %v1338 = vmul.f32 %v1293, %v1322
        %v1339 = vmul.f32 %v1295, %v1323
        %v1340 = vmul.f32 %v1297, %v1324
        %v1341 = vmul.f32 %v1299, %v1325
        %v1342 = vmul.f32 %v1301, %v1326
        %v1343 = vmul.f32 %v1303, %v1327
        %v1344 = vmul.f32 %v1305, %v1328
        %v1345 = vmul.f32 %v1307, %v1329
        %v1346 = vmul.f32 %v1309, %v1330
        %v1347 = vmul.f32 %v1311, %v1331
        %v1348 = vmul.f32 %v1313, %v1332
        %v1349 = vmul.f32 %v1315, %v1333
        %v1350 = vmul.f32 %v1317, %v1334
        %v1351 = vmul.f32 %v1319, %v1335
        %v1352 = vadd.f32 %v1272, %v1336
        %v1353 = vadd.f32 %v1273, %v1337
        %v1354 = vadd.f32 %v1274, %v1338
        %v1355 = vadd.f32 %v1275, %v1339
        %v1356 = vadd.f32 %v1276, %v1340
        %v1357 = vadd.f32 %v1277, %v1341
        %v1358 = vadd.f32 %v1278, %v1342
        %v1359 = vadd.f32 %v1279, %v1343
        %v1360 = vadd.f32 %v1280, %v1344
        %v1361 = vadd.f32 %v1281, %v1345
        %v1362 = vadd.f32 %v1282, %v1346
        %v1363 = vadd.f32 %v1283, %v1347
        %v1364 = vadd.f32 %v1284, %v1348
        %v1365 = vadd.f32 %v1285, %v1349
        %v1366 = vadd.f32 %v1286, %v1350
        %v1367 = vadd.f32 %v1287, %v1351
        %v1368 = vpack.c.bf16 %v1353, %v1352
        %v1369 = vpack.c.bf16 %v1355, %v1354
        %v1370 = vpack.c.bf16 %v1357, %v1356
        %v1371 = vpack.c.bf16 %v1359, %v1358
        %v1372 = vpack.c.bf16 %v1361, %v1360
        %v1373 = vpack.c.bf16 %v1363, %v1362
        %v1374 = vpack.c.bf16 %v1365, %v1364
        %v1375 = vpack.c.bf16 %v1367, %v1366
        %s1376 = smul.u32 %s33, 128
        %v1377 = vlaneseq
        %v1378 = vshrl.u32 %v1377, 7
        %v1379 = vadd.s32 %v1378, 8
        %v1380 = vadd.s32 %v1378, 16
        %v1381 = vadd.s32 %v1378, 24
        %v1382 = vadd.s32 %v1378, 32
        %v1383 = vadd.s32 %v1378, 40
        %v1384 = vadd.s32 %v1378, 48
        %v1385 = vadd.s32 %v1378, 56
        %v1386 = vadd.s32 %v1378, 64
        %v1387 = vadd.s32 %v1378, 72
        %v1388 = vadd.s32 %v1378, 80
        %v1389 = vadd.s32 %v1378, 88
        %v1390 = vadd.s32 %v1378, 96
        %v1391 = vadd.s32 %v1378, 104
        %v1392 = vadd.s32 %v1378, 112
        %v1393 = vadd.s32 %v1378, 120
        %v1394 = vstv %s1376
        %v1395 = vadd.s32 %v1394, %v1378
        %v1396 = vadd.s32 %v1394, %v1379
        %v1397 = vadd.s32 %v1394, %v1380
        %v1398 = vadd.s32 %v1394, %v1381
        %v1399 = vadd.s32 %v1394, %v1382
        %v1400 = vadd.s32 %v1394, %v1383
        %v1401 = vadd.s32 %v1394, %v1384
        %v1402 = vadd.s32 %v1394, %v1385
        %v1403 = vadd.s32 %v1394, %v1386
        %v1404 = vadd.s32 %v1394, %v1387
        %v1405 = vadd.s32 %v1394, %v1388
        %v1406 = vadd.s32 %v1394, %v1389
        %v1407 = vadd.s32 %v1394, %v1390
        %v1408 = vadd.s32 %v1394, %v1391
        %v1409 = vadd.s32 %v1394, %v1392
        %v1410 = vadd.s32 %v1394, %v1393
        %s1411 = smul.u32 %s34, 128
        %v1412 = vlaneseq
        %v1413 = vand.u32 %v1412, 127
        %v1414 = vstv %s1411
        %v1415 = vadd.s32 %v1414, %v1413
        %v1416 = vsub.s32 %v1415, %v1395
        %v1417 = vsub.s32 %v1415, %v1396
        %v1418 = vsub.s32 %v1415, %v1397
        %v1419 = vsub.s32 %v1415, %v1398
        %v1420 = vsub.s32 %v1415, %v1399
        %v1421 = vsub.s32 %v1415, %v1400
        %v1422 = vsub.s32 %v1415, %v1401
        %v1423 = vsub.s32 %v1415, %v1402
        %v1424 = vsub.s32 %v1415, %v1403
        %v1425 = vsub.s32 %v1415, %v1404
        %v1426 = vsub.s32 %v1415, %v1405
        %v1427 = vsub.s32 %v1415, %v1406
        %v1428 = vsub.s32 %v1415, %v1407
        %v1429 = vsub.s32 %v1415, %v1408
        %v1430 = vsub.s32 %v1415, %v1409
        %v1431 = vsub.s32 %v1415, %v1410
        %vm1432 = vcmp.lt.s32.totalorder %v1416, 0
        %v1433 = vsub.s32 0, %v1416
        %v1434 = vsel %vm1432, %v1433, %v1416
        %vm1435 = vcmp.lt.s32.totalorder %v1417, 0
        %v1436 = vsub.s32 0, %v1417
        %v1437 = vsel %vm1435, %v1436, %v1417
        %vm1438 = vcmp.lt.s32.totalorder %v1418, 0
        %v1439 = vsub.s32 0, %v1418
        %v1440 = vsel %vm1438, %v1439, %v1418
        %vm1441 = vcmp.lt.s32.totalorder %v1419, 0
        %v1442 = vsub.s32 0, %v1419
        %v1443 = vsel %vm1441, %v1442, %v1419
        %vm1444 = vcmp.lt.s32.totalorder %v1420, 0
        %v1445 = vsub.s32 0, %v1420
        %v1446 = vsel %vm1444, %v1445, %v1420
        %vm1447 = vcmp.lt.s32.totalorder %v1421, 0
        %v1448 = vsub.s32 0, %v1421
        %v1449 = vsel %vm1447, %v1448, %v1421
        %vm1450 = vcmp.lt.s32.totalorder %v1422, 0
        %v1451 = vsub.s32 0, %v1422
        %v1452 = vsel %vm1450, %v1451, %v1422
        %vm1453 = vcmp.lt.s32.totalorder %v1423, 0
        %v1454 = vsub.s32 0, %v1423
        %v1455 = vsel %vm1453, %v1454, %v1423
        %vm1456 = vcmp.lt.s32.totalorder %v1424, 0
        %v1457 = vsub.s32 0, %v1424
        %v1458 = vsel %vm1456, %v1457, %v1424
        %vm1459 = vcmp.lt.s32.totalorder %v1425, 0
        %v1460 = vsub.s32 0, %v1425
        %v1461 = vsel %vm1459, %v1460, %v1425
        %vm1462 = vcmp.lt.s32.totalorder %v1426, 0
        %v1463 = vsub.s32 0, %v1426
        %v1464 = vsel %vm1462, %v1463, %v1426
        %vm1465 = vcmp.lt.s32.totalorder %v1427, 0
        %v1466 = vsub.s32 0, %v1427
        %v1467 = vsel %vm1465, %v1466, %v1427
        %vm1468 = vcmp.lt.s32.totalorder %v1428, 0
        %v1469 = vsub.s32 0, %v1428
        %v1470 = vsel %vm1468, %v1469, %v1428
        %vm1471 = vcmp.lt.s32.totalorder %v1429, 0
        %v1472 = vsub.s32 0, %v1429
        %v1473 = vsel %vm1471, %v1472, %v1429
        %vm1474 = vcmp.lt.s32.totalorder %v1430, 0
        %v1475 = vsub.s32 0, %v1430
        %v1476 = vsel %vm1474, %v1475, %v1430
        %vm1477 = vcmp.lt.s32.totalorder %v1431, 0
        %v1478 = vsub.s32 0, %v1431
        %v1479 = vsel %vm1477, %v1478, %v1431
        %v1480 = vcvt.s32.f32 %v1434
        %v1481 = vcvt.s32.f32 %v1437
        %v1482 = vcvt.s32.f32 %v1440
        %v1483 = vcvt.s32.f32 %v1443
        %v1484 = vcvt.s32.f32 %v1446
        %v1485 = vcvt.s32.f32 %v1449
        %v1486 = vcvt.s32.f32 %v1452
        %v1487 = vcvt.s32.f32 %v1455
        %v1488 = vcvt.s32.f32 %v1458
        %v1489 = vcvt.s32.f32 %v1461
        %v1490 = vcvt.s32.f32 %v1464
        %v1491 = vcvt.s32.f32 %v1467
        %v1492 = vcvt.s32.f32 %v1470
        %v1493 = vcvt.s32.f32 %v1473
        %v1494 = vcvt.s32.f32 %v1476
        %v1495 = vcvt.s32.f32 %v1479
        %v1496 = vsub.f32 0.0, %v1480
        %v1497 = vsub.f32 0.0, %v1481
        %v1498 = vsub.f32 0.0, %v1482
        %v1499 = vsub.f32 0.0, %v1483
        %v1500 = vsub.f32 0.0, %v1484
        %v1501 = vsub.f32 0.0, %v1485
        %v1502 = vsub.f32 0.0, %v1486
        %v1503 = vsub.f32 0.0, %v1487
        %v1504 = vsub.f32 0.0, %v1488
        %v1505 = vsub.f32 0.0, %v1489
        %v1506 = vsub.f32 0.0, %v1490
        %v1507 = vsub.f32 0.0, %v1491
        %v1508 = vsub.f32 0.0, %v1492
        %v1509 = vsub.f32 0.0, %v1493
        %v1510 = vsub.f32 0.0, %v1494
        %v1511 = vsub.f32 0.0, %v1495
        %v1512 = vld [vmem:[%s992] sm:$0x1]
        %v1514 = vlaneseq
        %v1515 = vshrl.u32 %v1514, 7
        %v1516 = vsub.s32 0, %v1515
        %v1517 = vrot.slane %v1512, %v1516
        %1518 = vset.pattern.permute.xlu0 0
        %1519 = vperm.xlu0 %1518, %v1517
        %v1520 = vpop.permute.xlu0 %1519
        %v1522 = vmul.f32 %v1496, %v1520
        %v1523 = vmul.f32 %v1497, %v1520
        %v1524 = vmul.f32 %v1498, %v1520
        %v1525 = vmul.f32 %v1499, %v1520
        %v1526 = vmul.f32 %v1500, %v1520
        %v1527 = vmul.f32 %v1501, %v1520
        %v1528 = vmul.f32 %v1502, %v1520
        %v1529 = vmul.f32 %v1503, %v1520
        %v1530 = vmul.f32 %v1504, %v1520
        %v1531 = vmul.f32 %v1505, %v1520
        %v1532 = vmul.f32 %v1506, %v1520
        %v1533 = vmul.f32 %v1507, %v1520
        %v1534 = vmul.f32 %v1508, %v1520
        %v1535 = vmul.f32 %v1509, %v1520
        %v1536 = vmul.f32 %v1510, %v1520
        %v1537 = vmul.f32 %v1511, %v1520
        %v1538 = vld [vmem:[%s969] sm:$0xff]
        %v1539 = vld [vmem:[%s969 + $0x8] sm:$0xff]
        %v1540 = vld [vmem:[%s969 + $0x10] sm:$0xff]
        %v1541 = vld [vmem:[%s969 + $0x18] sm:$0xff]
        %v1542 = vld [vmem:[%s969 + $0x20] sm:$0xff]
        %v1543 = vld [vmem:[%s969 + $0x28] sm:$0xff]
        %v1544 = vld [vmem:[%s969 + $0x30] sm:$0xff]
        %v1545 = vld [vmem:[%s969 + $0x38] sm:$0xff]
        %v1546 = vld [vmem:[%s969 + $0x40] sm:$0xff]
        %v1547 = vld [vmem:[%s969 + $0x48] sm:$0xff]
        %v1548 = vld [vmem:[%s969 + $0x50] sm:$0xff]
        %v1549 = vld [vmem:[%s969 + $0x58] sm:$0xff]
        %v1550 = vld [vmem:[%s969 + $0x60] sm:$0xff]
        %v1551 = vld [vmem:[%s969 + $0x68] sm:$0xff]
        %v1552 = vld [vmem:[%s969 + $0x70] sm:$0xff]
        %v1553 = vld [vmem:[%s969 + $0x78] sm:$0xff]
        %1554 = vmatprep.subr.bf16.mxu0 0
        %1555 = vmatpush1.bf16.xpose.msra.mxu0 %v1216
        %1556 = vmatprep.subr.bf16.mxu0 0
        %1557 = vmatpush1.bf16.xpose.msra.mxu0 %v1217
        %1558 = vmatprep.subr.bf16.mxu0 0
        %1559 = vmatpush1.bf16.xpose.msra.mxu0 %v1218
        %1560 = vmatprep.subr.bf16.mxu0 0
        %1561 = vmatpush1.bf16.xpose.msra.mxu0 %v1219
        %1562 = vmatprep.subr.bf16.mxu0 0
        %1563 = vmatpush1.bf16.xpose.msra.mxu0 %v1220
        %1564 = vmatprep.subr.bf16.mxu0 0
        %1565 = vmatpush1.bf16.xpose.msra.mxu0 %v1221
        %1566 = vmatprep.subr.bf16.mxu0 0
        %1567 = vmatpush1.bf16.xpose.msra.mxu0 %v1222
        %1568 = vmatprep.subr.bf16.mxu0 0
        %1569 = vmatpush1.bf16.xpose.msra.mxu0 %v1223
        %1570 = vmatprep.subr.bf16.mxu0 0
        %1571 = vmatpush1.bf16.xpose.msra.mxu0 0
        %1572 = vmatprep.subr.bf16.mxu0 0
        %1573 = vmatpush1.bf16.xpose.msra.mxu0 0
        %1574 = vmatprep.subr.bf16.mxu0 0
        %1575 = vmatpush1.bf16.xpose.msra.mxu0 0
        %1576 = vmatprep.subr.bf16.mxu0 0
        %1577 = vmatpush1.bf16.xpose.msra.mxu0 0
        %1578 = vmatprep.subr.bf16.mxu0 0
        %1579 = vmatpush1.bf16.xpose.msra.mxu0 0
        %1580 = vmatprep.subr.bf16.mxu0 0
        %1581 = vmatpush1.bf16.xpose.msra.mxu0 0
        %1582 = vmatprep.subr.bf16.mxu0 0
        %1583 = vmatpush1.bf16.xpose.msra.mxu0 0
        %1584 = vmatprep.subr.bf16.mxu0 0
        %1585 = vmatpush1.bf16.xpose.msra.mxu0 0
        %1586 = vmatprep.mubr.bf16.mxu0 0
        %1587 = vmatmul.mubr.bf16.gmra.mrb[0].mxu0 %v1368
        %v1588 = vpop.f32.mrb[0].mxu0
        %v1589 = vadd.f32 %v1538, %v1588
        %v1590 = vpop.f32.mrb[0].mxu0
        %v1591 = vpop.f32.mrb[0].mxu0
        %v1592 = vadd.f32 %v1539, %v1591
        %v1593 = vpop.f32.mrb[0].mxu0
        %1594 = vmatprep.mubr.bf16.mxu0 0
        %1595 = vmatmul.mubr.bf16.gmra.mrb[0].mxu0 %v1369
        %v1596 = vpop.f32.mrb[0].mxu0
        %v1597 = vadd.f32 %v1540, %v1596
        %v1598 = vpop.f32.mrb[0].mxu0
        %v1599 = vpop.f32.mrb[0].mxu0
        %v1600 = vadd.f32 %v1541, %v1599
        %v1601 = vpop.f32.mrb[0].mxu0
        %1602 = vmatprep.mubr.bf16.mxu0 0
        %1603 = vmatmul.mubr.bf16.gmra.mrb[0].mxu0 %v1370
        %v1604 = vpop.f32.mrb[0].mxu0
        %v1605 = vadd.f32 %v1542, %v1604
        %v1606 = vpop.f32.mrb[0].mxu0
        %v1607 = vpop.f32.mrb[0].mxu0
        %v1608 = vadd.f32 %v1543, %v1607
        %v1609 = vpop.f32.mrb[0].mxu0
        %1610 = vmatprep.mubr.bf16.mxu0 0
        %1611 = vmatmul.mubr.bf16.gmra.mrb[0].mxu0 %v1371
        %v1612 = vpop.f32.mrb[0].mxu0
        %v1613 = vadd.f32 %v1544, %v1612
        %v1614 = vpop.f32.mrb[0].mxu0
        %v1615 = vpop.f32.mrb[0].mxu0
        %v1616 = vadd.f32 %v1545, %v1615
        %v1617 = vpop.f32.mrb[0].mxu0
        %1618 = vmatprep.mubr.bf16.mxu0 0
        %1619 = vmatmul.mubr.bf16.gmra.mrb[0].mxu0 %v1372
        %v1620 = vpop.f32.mrb[0].mxu0
        %v1621 = vadd.f32 %v1546, %v1620
        %v1622 = vpop.f32.mrb[0].mxu0
        %v1623 = vpop.f32.mrb[0].mxu0
        %v1624 = vadd.f32 %v1547, %v1623
        %v1625 = vpop.f32.mrb[0].mxu0
        %1626 = vmatprep.mubr.bf16.mxu0 0
        %1627 = vmatmul.mubr.bf16.gmra.mrb[0].mxu0 %v1373
        %v1628 = vpop.f32.mrb[0].mxu0
        %v1629 = vadd.f32 %v1548, %v1628
        %v1630 = vpop.f32.mrb[0].mxu0
        %v1631 = vpop.f32.mrb[0].mxu0
        %v1632 = vadd.f32 %v1549, %v1631
        %v1633 = vpop.f32.mrb[0].mxu0
        %1634 = vmatprep.mubr.bf16.mxu0 0
        %1635 = vmatmul.mubr.bf16.gmra.mrb[0].mxu0 %v1374
        %v1636 = vpop.f32.mrb[0].mxu0
        %v1637 = vadd.f32 %v1550, %v1636
        %v1638 = vpop.f32.mrb[0].mxu0
        %v1639 = vpop.f32.mrb[0].mxu0
        %v1640 = vadd.f32 %v1551, %v1639
        %v1641 = vpop.f32.mrb[0].mxu0
        %1642 = vmatprep.mubr.bf16.mxu0 0
        %1643 = vmatmul.mubr.bf16.gmra.mrb[0].mxu0 %v1375
        %v1644 = vpop.f32.mrb[0].mxu0
        %v1645 = vadd.f32 %v1552, %v1644
        %v1646 = vpop.f32.mrb[0].mxu0
        %v1647 = vpop.f32.mrb[0].mxu0
        %v1648 = vadd.f32 %v1553, %v1647
        %v1649 = vpop.f32.mrb[0].mxu0
        %1650 = vdwg.mxu0
        %v1651 = vld [vmem:[%s982] sm:$0xff]
        %v1652 = vld [vmem:[%s982 + $0x8] sm:$0xff]
        %v1653 = vld [vmem:[%s982 + $0x10] sm:$0xff]
        %v1654 = vld [vmem:[%s982 + $0x18] sm:$0xff]
        %v1655 = vld [vmem:[%s982 + $0x20] sm:$0xff]
        %v1656 = vld [vmem:[%s982 + $0x28] sm:$0xff]
        %v1657 = vld [vmem:[%s982 + $0x30] sm:$0xff]
        %v1658 = vld [vmem:[%s982 + $0x38] sm:$0xff]
        %v1659 = vld [vmem:[%s982 + $0x40] sm:$0xff]
        %v1660 = vld [vmem:[%s982 + $0x48] sm:$0xff]
        %v1661 = vld [vmem:[%s982 + $0x50] sm:$0xff]
        %v1662 = vld [vmem:[%s982 + $0x58] sm:$0xff]
        %v1663 = vld [vmem:[%s982 + $0x60] sm:$0xff]
        %v1664 = vld [vmem:[%s982 + $0x68] sm:$0xff]
        %v1665 = vld [vmem:[%s982 + $0x70] sm:$0xff]
        %v1666 = vld [vmem:[%s982 + $0x78] sm:$0xff]
        %v1667 = vadd.f32 %v1589, %v1651
        %v1668 = vadd.f32 %v1592, %v1652
        %v1669 = vadd.f32 %v1597, %v1653
        %v1670 = vadd.f32 %v1600, %v1654
        %v1671 = vadd.f32 %v1605, %v1655
        %v1672 = vadd.f32 %v1608, %v1656
        %v1673 = vadd.f32 %v1613, %v1657
        %v1674 = vadd.f32 %v1616, %v1658
        %v1675 = vadd.f32 %v1621, %v1659
        %v1676 = vadd.f32 %v1624, %v1660
        %v1677 = vadd.f32 %v1629, %v1661
        %v1678 = vadd.f32 %v1632, %v1662
        %v1679 = vadd.f32 %v1637, %v1663
        %v1680 = vadd.f32 %v1640, %v1664
        %v1681 = vadd.f32 %v1645, %v1665
        %v1682 = vadd.f32 %v1648, %v1666
        %v1683 = vadd.f32 %v1667, %v1522
        %v1684 = vadd.f32 %v1668, %v1523
        %v1685 = vadd.f32 %v1669, %v1524
        %v1686 = vadd.f32 %v1670, %v1525
        %v1687 = vadd.f32 %v1671, %v1526
        %v1688 = vadd.f32 %v1672, %v1527
        %v1689 = vadd.f32 %v1673, %v1528
        %v1690 = vadd.f32 %v1674, %v1529
        %v1691 = vadd.f32 %v1675, %v1530
        %v1692 = vadd.f32 %v1676, %v1531
        %v1693 = vadd.f32 %v1677, %v1532
        %v1694 = vadd.f32 %v1678, %v1533
        %v1695 = vadd.f32 %v1679, %v1534
        %v1696 = vadd.f32 %v1680, %v1535
        %v1697 = vadd.f32 %v1681, %v1536
        %v1698 = vadd.f32 %v1682, %v1537
        %v1699 = vld [vmem:[%s989] sm:$0x1]
        %vm1700 = vcmp.gt.s32.totalorder %v1699, 0
        %v1701 = vsel %vm1700, 1, 0
        %v1702 = vlaneseq
        %v1703 = vshrl.u32 %v1702, 7
        %v1704 = vsub.s32 0, %v1703
        %v1705 = vrot.slane %v1701, %v1704
        %vm1706 = vcmp.eq.s32.totalorder %v1705, 1
        %v1707 = vsel %vm1706, -3.4028235e+38, %v1683
        %v1708 = vsel %vm1706, -3.4028235e+38, %v1684
        %v1709 = vsel %vm1706, -3.4028235e+38, %v1685
        %v1710 = vsel %vm1706, -3.4028235e+38, %v1686
        %v1711 = vsel %vm1706, -3.4028235e+38, %v1687
        %v1712 = vsel %vm1706, -3.4028235e+38, %v1688
        %v1713 = vsel %vm1706, -3.4028235e+38, %v1689
        %v1714 = vsel %vm1706, -3.4028235e+38, %v1690
        %v1715 = vsel %vm1706, -3.4028235e+38, %v1691
        %v1716 = vsel %vm1706, -3.4028235e+38, %v1692
        %v1717 = vsel %vm1706, -3.4028235e+38, %v1693
        %v1718 = vsel %vm1706, -3.4028235e+38, %v1694
        %v1719 = vsel %vm1706, -3.4028235e+38, %v1695
        %v1720 = vsel %vm1706, -3.4028235e+38, %v1696
        %v1721 = vsel %vm1706, -3.4028235e+38, %v1697
        %v1722 = vsel %vm1706, -3.4028235e+38, %v1698
        %v1723 = vld [vmem:[#allocation2] sm:$0xff]
        %v1724 = vld [vmem:[#allocation2 + $0x8] sm:$0xff]
        %v1725 = vld [vmem:[#allocation2 + $0x10] sm:$0xff]
        %v1726 = vld [vmem:[#allocation2 + $0x18] sm:$0xff]
        %v1727 = vld [vmem:[#allocation2 + $0x20] sm:$0xff]
        %v1728 = vld [vmem:[#allocation2 + $0x28] sm:$0xff]
        %v1729 = vld [vmem:[#allocation2 + $0x30] sm:$0xff]
        %v1730 = vld [vmem:[#allocation2 + $0x38] sm:$0xff]
        %v1731 = vld [vmem:[#allocation2 + $0x40] sm:$0xff]
        %v1732 = vld [vmem:[#allocation2 + $0x48] sm:$0xff]
        %v1733 = vld [vmem:[#allocation2 + $0x50] sm:$0xff]
        %v1734 = vld [vmem:[#allocation2 + $0x58] sm:$0xff]
        %v1735 = vld [vmem:[#allocation2 + $0x60] sm:$0xff]
        %v1736 = vld [vmem:[#allocation2 + $0x68] sm:$0xff]
        %v1737 = vld [vmem:[#allocation2 + $0x70] sm:$0xff]
        %v1738 = vld [vmem:[#allocation2 + $0x78] sm:$0xff]
        %1739 = vmax.xlane.f32.xlu0 %v1707
        %v1740 = vpop.xlane.xlu0 %1739
        %1741 = vmax.xlane.f32.xlu0 %v1708
        %v1742 = vpop.xlane.xlu0 %1741
        %1743 = vmax.xlane.f32.xlu0 %v1709
        %v1744 = vpop.xlane.xlu0 %1743
        %1745 = vmax.xlane.f32.xlu0 %v1710
        %v1746 = vpop.xlane.xlu0 %1745
        %1747 = vmax.xlane.f32.xlu0 %v1711
        %v1748 = vpop.xlane.xlu0 %1747
        %1749 = vmax.xlane.f32.xlu0 %v1712
        %v1750 = vpop.xlane.xlu0 %1749
        %1751 = vmax.xlane.f32.xlu0 %v1713
        %v1752 = vpop.xlane.xlu0 %1751
        %1753 = vmax.xlane.f32.xlu0 %v1714
        %v1754 = vpop.xlane.xlu0 %1753
        %1755 = vmax.xlane.f32.xlu0 %v1715
        %v1756 = vpop.xlane.xlu0 %1755
        %1757 = vmax.xlane.f32.xlu0 %v1716
        %v1758 = vpop.xlane.xlu0 %1757
        %1759 = vmax.xlane.f32.xlu0 %v1717
        %v1760 = vpop.xlane.xlu0 %1759
        %1761 = vmax.xlane.f32.xlu0 %v1718
        %v1762 = vpop.xlane.xlu0 %1761
        %1763 = vmax.xlane.f32.xlu0 %v1719
        %v1764 = vpop.xlane.xlu0 %1763
        %1765 = vmax.xlane.f32.xlu0 %v1720
        %v1766 = vpop.xlane.xlu0 %1765
        %1767 = vmax.xlane.f32.xlu0 %v1721
        %v1768 = vpop.xlane.xlu0 %1767
        %1769 = vmax.xlane.f32.xlu0 %v1722
        %v1770 = vpop.xlane.xlu0 %1769
        %v1771 = vmax.f32 %v1723, %v1740
        %v1772 = vmax.f32 %v1724, %v1742
        %v1773 = vmax.f32 %v1725, %v1744
        %v1774 = vmax.f32 %v1726, %v1746
        %v1775 = vmax.f32 %v1727, %v1748
        %v1776 = vmax.f32 %v1728, %v1750
        %v1777 = vmax.f32 %v1729, %v1752
        %v1778 = vmax.f32 %v1730, %v1754
        %v1779 = vmax.f32 %v1731, %v1756
        %v1780 = vmax.f32 %v1732, %v1758
        %v1781 = vmax.f32 %v1733, %v1760
        %v1782 = vmax.f32 %v1734, %v1762
        %v1783 = vmax.f32 %v1735, %v1764
        %v1784 = vmax.f32 %v1736, %v1766
        %v1785 = vmax.f32 %v1737, %v1768
        %v1786 = vmax.f32 %v1738, %v1770
        %v1787 = vsub.f32 %v1723, %v1771
        %v1788 = vsub.f32 %v1724, %v1772
        %v1789 = vsub.f32 %v1725, %v1773
        %v1790 = vsub.f32 %v1726, %v1774
        %v1791 = vsub.f32 %v1727, %v1775
        %v1792 = vsub.f32 %v1728, %v1776
        %v1793 = vsub.f32 %v1729, %v1777
        %v1794 = vsub.f32 %v1730, %v1778
        %v1795 = vsub.f32 %v1731, %v1779
        %v1796 = vsub.f32 %v1732, %v1780
        %v1797 = vsub.f32 %v1733, %v1781
        %v1798 = vsub.f32 %v1734, %v1782
        %v1799 = vsub.f32 %v1735, %v1783
        %v1800 = vsub.f32 %v1736, %v1784
        %v1801 = vsub.f32 %v1737, %v1785
        %v1802 = vsub.f32 %v1738, %v1786
        %v1803 = vmul.f32 %v1787, 1.442695
        %v1804 = vpow.pop %v1803
        %v1805 = vmul.f32 %v1788, 1.442695
        %v1806 = vpow.pop %v1805
        %v1807 = vmul.f32 %v1789, 1.442695
        %v1808 = vpow.pop %v1807
        %v1809 = vmul.f32 %v1790, 1.442695
        %v1810 = vpow.pop %v1809
        %v1811 = vmul.f32 %v1791, 1.442695
        %v1812 = vpow.pop %v1811
        %v1813 = vmul.f32 %v1792, 1.442695
        %v1814 = vpow.pop %v1813
        %v1815 = vmul.f32 %v1793, 1.442695
        %v1816 = vpow.pop %v1815
        %v1817 = vmul.f32 %v1794, 1.442695
        %v1818 = vpow.pop %v1817
        %v1819 = vmul.f32 %v1795, 1.442695
        %v1820 = vpow.pop %v1819
        %v1821 = vmul.f32 %v1796, 1.442695
        %v1822 = vpow.pop %v1821
        %v1823 = vmul.f32 %v1797, 1.442695
        %v1824 = vpow.pop %v1823
        %v1825 = vmul.f32 %v1798, 1.442695
        %v1826 = vpow.pop %v1825
        %v1827 = vmul.f32 %v1799, 1.442695
        %v1828 = vpow.pop %v1827
        %v1829 = vmul.f32 %v1800, 1.442695
        %v1830 = vpow.pop %v1829
        %v1831 = vmul.f32 %v1801, 1.442695
        %v1832 = vpow.pop %v1831
        %v1833 = vmul.f32 %v1802, 1.442695
        %v1834 = vpow.pop %v1833
        %1836 = vset.pattern.permute.xlu0 0
        %1837 = vperm.xlu0 %1836, %v1771
        %v1838 = vpop.permute.xlu0 %1837
        %1841 = vset.pattern.permute.xlu0 0
        %1842 = vperm.xlu0 %1841, %v1772
        %v1843 = vpop.permute.xlu0 %1842
        %1846 = vset.pattern.permute.xlu0 0
        %1847 = vperm.xlu0 %1846, %v1773
        %v1848 = vpop.permute.xlu0 %1847
        %1851 = vset.pattern.permute.xlu0 0
        %1852 = vperm.xlu0 %1851, %v1774
        %v1853 = vpop.permute.xlu0 %1852
        %1856 = vset.pattern.permute.xlu0 0
        %1857 = vperm.xlu0 %1856, %v1775
        %v1858 = vpop.permute.xlu0 %1857
        %1861 = vset.pattern.permute.xlu0 0
        %1862 = vperm.xlu0 %1861, %v1776
        %v1863 = vpop.permute.xlu0 %1862
        %1866 = vset.pattern.permute.xlu0 0
        %1867 = vperm.xlu0 %1866, %v1777
        %v1868 = vpop.permute.xlu0 %1867
        %1871 = vset.pattern.permute.xlu0 0
        %1872 = vperm.xlu0 %1871, %v1778
        %v1873 = vpop.permute.xlu0 %1872
        %1876 = vset.pattern.permute.xlu0 0
        %1877 = vperm.xlu0 %1876, %v1779
        %v1878 = vpop.permute.xlu0 %1877
        %1881 = vset.pattern.permute.xlu0 0
        %1882 = vperm.xlu0 %1881, %v1780
        %v1883 = vpop.permute.xlu0 %1882
        %1886 = vset.pattern.permute.xlu0 0
        %1887 = vperm.xlu0 %1886, %v1781
        %v1888 = vpop.permute.xlu0 %1887
        %1891 = vset.pattern.permute.xlu0 0
        %1892 = vperm.xlu0 %1891, %v1782
        %v1893 = vpop.permute.xlu0 %1892
        %1896 = vset.pattern.permute.xlu0 0
        %1897 = vperm.xlu0 %1896, %v1783
        %v1898 = vpop.permute.xlu0 %1897
        %1901 = vset.pattern.permute.xlu0 0
        %1902 = vperm.xlu0 %1901, %v1784
        %v1903 = vpop.permute.xlu0 %1902
        %1906 = vset.pattern.permute.xlu0 0
        %1907 = vperm.xlu0 %1906, %v1785
        %v1908 = vpop.permute.xlu0 %1907
        %1911 = vset.pattern.permute.xlu0 0
        %1912 = vperm.xlu0 %1911, %v1786
        %v1913 = vpop.permute.xlu0 %1912
        %v1915 = vsub.f32 %v1707, %v1838
        %v1916 = vsub.f32 %v1708, %v1843
        %v1917 = vsub.f32 %v1709, %v1848
        %v1918 = vsub.f32 %v1710, %v1853
        %v1919 = vsub.f32 %v1711, %v1858
        %v1920 = vsub.f32 %v1712, %v1863
        %v1921 = vsub.f32 %v1713, %v1868
        %v1922 = vsub.f32 %v1714, %v1873
        %v1923 = vsub.f32 %v1715, %v1878
        %v1924 = vsub.f32 %v1716, %v1883
        %v1925 = vsub.f32 %v1717, %v1888
        %v1926 = vsub.f32 %v1718, %v1893
        %v1927 = vsub.f32 %v1719, %v1898
        %v1928 = vsub.f32 %v1720, %v1903
        %v1929 = vsub.f32 %v1721, %v1908
        %v1930 = vsub.f32 %v1722, %v1913
        %v1931 = vmul.f32 %v1915, 1.442695
        %v1932 = vpow.pop %v1931
        %v1933 = vmul.f32 %v1916, 1.442695
        %v1934 = vpow.pop %v1933
        %v1935 = vmul.f32 %v1917, 1.442695
        %v1936 = vpow.pop %v1935
        %v1937 = vmul.f32 %v1918, 1.442695
        %v1938 = vpow.pop %v1937
        %v1939 = vmul.f32 %v1919, 1.442695
        %v1940 = vpow.pop %v1939
        %v1941 = vmul.f32 %v1920, 1.442695
        %v1942 = vpow.pop %v1941
        %v1943 = vmul.f32 %v1921, 1.442695
        %v1944 = vpow.pop %v1943
        %v1945 = vmul.f32 %v1922, 1.442695
        %v1946 = vpow.pop %v1945
        %v1947 = vmul.f32 %v1923, 1.442695
        %v1948 = vpow.pop %v1947
        %v1949 = vmul.f32 %v1924, 1.442695
        %v1950 = vpow.pop %v1949
        %v1951 = vmul.f32 %v1925, 1.442695
        %v1952 = vpow.pop %v1951
        %v1953 = vmul.f32 %v1926, 1.442695
        %v1954 = vpow.pop %v1953
        %v1955 = vmul.f32 %v1927, 1.442695
        %v1956 = vpow.pop %v1955
        %v1957 = vmul.f32 %v1928, 1.442695
        %v1958 = vpow.pop %v1957
        %v1959 = vmul.f32 %v1929, 1.442695
        %v1960 = vpow.pop %v1959
        %v1961 = vmul.f32 %v1930, 1.442695
        %v1962 = vpow.pop %v1961
        %v1963 = vld [vmem:[#allocation3] sm:$0xff]
        %v1964 = vld [vmem:[#allocation3 + $0x8] sm:$0xff]
        %v1965 = vld [vmem:[#allocation3 + $0x10] sm:$0xff]
        %v1966 = vld [vmem:[#allocation3 + $0x18] sm:$0xff]
        %v1967 = vld [vmem:[#allocation3 + $0x20] sm:$0xff]
        %v1968 = vld [vmem:[#allocation3 + $0x28] sm:$0xff]
        %v1969 = vld [vmem:[#allocation3 + $0x30] sm:$0xff]
        %v1970 = vld [vmem:[#allocation3 + $0x38] sm:$0xff]
        %v1971 = vld [vmem:[#allocation3 + $0x40] sm:$0xff]
        %v1972 = vld [vmem:[#allocation3 + $0x48] sm:$0xff]
        %v1973 = vld [vmem:[#allocation3 + $0x50] sm:$0xff]
        %v1974 = vld [vmem:[#allocation3 + $0x58] sm:$0xff]
        %v1975 = vld [vmem:[#allocation3 + $0x60] sm:$0xff]
        %v1976 = vld [vmem:[#allocation3 + $0x68] sm:$0xff]
        %v1977 = vld [vmem:[#allocation3 + $0x70] sm:$0xff]
        %v1978 = vld [vmem:[#allocation3 + $0x78] sm:$0xff]
        %v1979 = vmul.f32 %v1804, %v1963
        %v1980 = vmul.f32 %v1806, %v1964
        %v1981 = vmul.f32 %v1808, %v1965
        %v1982 = vmul.f32 %v1810, %v1966
        %v1983 = vmul.f32 %v1812, %v1967
        %v1984 = vmul.f32 %v1814, %v1968
        %v1985 = vmul.f32 %v1816, %v1969
        %v1986 = vmul.f32 %v1818, %v1970
        %v1987 = vmul.f32 %v1820, %v1971
        %v1988 = vmul.f32 %v1822, %v1972
        %v1989 = vmul.f32 %v1824, %v1973
        %v1990 = vmul.f32 %v1826, %v1974
        %v1991 = vmul.f32 %v1828, %v1975
        %v1992 = vmul.f32 %v1830, %v1976
        %v1993 = vmul.f32 %v1832, %v1977
        %v1994 = vmul.f32 %v1834, %v1978
        %1995 = vadd.xlane.f32.xlu0 %v1932
        %v1996 = vpop.xlane.xlu0 %1995
        %1997 = vadd.xlane.f32.xlu0 %v1934
        %v1998 = vpop.xlane.xlu0 %1997
        %1999 = vadd.xlane.f32.xlu0 %v1936
        %v2000 = vpop.xlane.xlu0 %1999
        %2001 = vadd.xlane.f32.xlu0 %v1938
        %v2002 = vpop.xlane.xlu0 %2001
        %2003 = vadd.xlane.f32.xlu0 %v1940
        %v2004 = vpop.xlane.xlu0 %2003
        %2005 = vadd.xlane.f32.xlu0 %v1942
        %v2006 = vpop.xlane.xlu0 %2005
        %2007 = vadd.xlane.f32.xlu0 %v1944
        %v2008 = vpop.xlane.xlu0 %2007
        %2009 = vadd.xlane.f32.xlu0 %v1946
        %v2010 = vpop.xlane.xlu0 %2009
        %2011 = vadd.xlane.f32.xlu0 %v1948
        %v2012 = vpop.xlane.xlu0 %2011
        %2013 = vadd.xlane.f32.xlu0 %v1950
        %v2014 = vpop.xlane.xlu0 %2013
        %2015 = vadd.xlane.f32.xlu0 %v1952
        %v2016 = vpop.xlane.xlu0 %2015
        %2017 = vadd.xlane.f32.xlu0 %v1954
        %v2018 = vpop.xlane.xlu0 %2017
        %2019 = vadd.xlane.f32.xlu0 %v1956
        %v2020 = vpop.xlane.xlu0 %2019
        %2021 = vadd.xlane.f32.xlu0 %v1958
        %v2022 = vpop.xlane.xlu0 %2021
        %2023 = vadd.xlane.f32.xlu0 %v1960
        %v2024 = vpop.xlane.xlu0 %2023
        %2025 = vadd.xlane.f32.xlu0 %v1962
        %v2026 = vpop.xlane.xlu0 %2025
        %v2027 = vadd.f32 %v1979, %v1996
        %v2028 = vadd.f32 %v1980, %v1998
        %v2029 = vadd.f32 %v1981, %v2000
        %v2030 = vadd.f32 %v1982, %v2002
        %v2031 = vadd.f32 %v1983, %v2004
        %v2032 = vadd.f32 %v1984, %v2006
        %v2033 = vadd.f32 %v1985, %v2008
        %v2034 = vadd.f32 %v1986, %v2010
        %v2035 = vadd.f32 %v1987, %v2012
        %v2036 = vadd.f32 %v1988, %v2014
        %v2037 = vadd.f32 %v1989, %v2016
        %v2038 = vadd.f32 %v1990, %v2018
        %v2039 = vadd.f32 %v1991, %v2020
        %v2040 = vadd.f32 %v1992, %v2022
        %v2041 = vadd.f32 %v1993, %v2024
        %v2042 = vadd.f32 %v1994, %v2026
        %vm2043 = vcmask 7168
        %2044 = vst.msk [vmem:[#allocation3] sm:$0xff] %vm2043, %v2027
        %2045 = vst.msk [vmem:[#allocation3 + $0x8] sm:$0xff] %vm2043, %v2028
        %2046 = vst.msk [vmem:[#allocation3 + $0x10] sm:$0xff] %vm2043, %v2029
        %2047 = vst.msk [vmem:[#allocation3 + $0x18] sm:$0xff] %vm2043, %v2030
        %2048 = vst.msk [vmem:[#allocation3 + $0x20] sm:$0xff] %vm2043, %v2031
        %2049 = vst.msk [vmem:[#allocation3 + $0x28] sm:$0xff] %vm2043, %v2032
        %2050 = vst.msk [vmem:[#allocation3 + $0x30] sm:$0xff] %vm2043, %v2033
        %2051 = vst.msk [vmem:[#allocation3 + $0x38] sm:$0xff] %vm2043, %v2034
        %2052 = vst.msk [vmem:[#allocation3 + $0x40] sm:$0xff] %vm2043, %v2035
        %2053 = vst.msk [vmem:[#allocation3 + $0x48] sm:$0xff] %vm2043, %v2036
        %2054 = vst.msk [vmem:[#allocation3 + $0x50] sm:$0xff] %vm2043, %v2037
        %2055 = vst.msk [vmem:[#allocation3 + $0x58] sm:$0xff] %vm2043, %v2038
        %2056 = vst.msk [vmem:[#allocation3 + $0x60] sm:$0xff] %vm2043, %v2039
        %2057 = vst.msk [vmem:[#allocation3 + $0x68] sm:$0xff] %vm2043, %v2040
        %2058 = vst.msk [vmem:[#allocation3 + $0x70] sm:$0xff] %vm2043, %v2041
        %2059 = vst.msk [vmem:[#allocation3 + $0x78] sm:$0xff] %vm2043, %v2042
        %v2060 = vld [vmem:[#allocation4] sm:$0xff]
        %v2061 = vld [vmem:[#allocation4 + $0x8] sm:$0xff]
        %v2062 = vld [vmem:[#allocation4 + $0x10] sm:$0xff]
        %v2063 = vld [vmem:[#allocation4 + $0x18] sm:$0xff]
        %v2064 = vld [vmem:[#allocation4 + $0x20] sm:$0xff]
        %v2065 = vld [vmem:[#allocation4 + $0x28] sm:$0xff]
        %v2066 = vld [vmem:[#allocation4 + $0x30] sm:$0xff]
        %v2067 = vld [vmem:[#allocation4 + $0x38] sm:$0xff]
        %v2068 = vld [vmem:[#allocation4 + $0x40] sm:$0xff]
        %v2069 = vld [vmem:[#allocation4 + $0x48] sm:$0xff]
        %v2070 = vld [vmem:[#allocation4 + $0x50] sm:$0xff]
        %v2071 = vld [vmem:[#allocation4 + $0x58] sm:$0xff]
        %v2072 = vld [vmem:[#allocation4 + $0x60] sm:$0xff]
        %v2073 = vld [vmem:[#allocation4 + $0x68] sm:$0xff]
        %v2074 = vld [vmem:[#allocation4 + $0x70] sm:$0xff]
        %v2075 = vld [vmem:[#allocation4 + $0x78] sm:$0xff]
        %2077 = vset.pattern.permute.xlu0 0
        %2078 = vperm.xlu0 %2077, %v1804
        %v2079 = vpop.permute.xlu0 %2078
        %2082 = vset.pattern.permute.xlu0 0
        %2083 = vperm.xlu0 %2082, %v1806
        %v2084 = vpop.permute.xlu0 %2083
        %2087 = vset.pattern.permute.xlu0 0
        %2088 = vperm.xlu0 %2087, %v1808
        %v2089 = vpop.permute.xlu0 %2088
        %2092 = vset.pattern.permute.xlu0 0
        %2093 = vperm.xlu0 %2092, %v1810
        %v2094 = vpop.permute.xlu0 %2093
        %2097 = vset.pattern.permute.xlu0 0
        %2098 = vperm.xlu0 %2097, %v1812
        %v2099 = vpop.permute.xlu0 %2098
        %2102 = vset.pattern.permute.xlu0 0
        %2103 = vperm.xlu0 %2102, %v1814
        %v2104 = vpop.permute.xlu0 %2103
        %2107 = vset.pattern.permute.xlu0 0
        %2108 = vperm.xlu0 %2107, %v1816
        %v2109 = vpop.permute.xlu0 %2108
        %2112 = vset.pattern.permute.xlu0 0
        %2113 = vperm.xlu0 %2112, %v1818
        %v2114 = vpop.permute.xlu0 %2113
        %2117 = vset.pattern.permute.xlu0 0
        %2118 = vperm.xlu0 %2117, %v1820
        %v2119 = vpop.permute.xlu0 %2118
        %2122 = vset.pattern.permute.xlu0 0
        %2123 = vperm.xlu0 %2122, %v1822
        %v2124 = vpop.permute.xlu0 %2123
        %2127 = vset.pattern.permute.xlu0 0
        %2128 = vperm.xlu0 %2127, %v1824
        %v2129 = vpop.permute.xlu0 %2128
        %2132 = vset.pattern.permute.xlu0 0
        %2133 = vperm.xlu0 %2132, %v1826
        %v2134 = vpop.permute.xlu0 %2133
        %2137 = vset.pattern.permute.xlu0 0
        %2138 = vperm.xlu0 %2137, %v1828
        %v2139 = vpop.permute.xlu0 %2138
        %2142 = vset.pattern.permute.xlu0 0
        %2143 = vperm.xlu0 %2142, %v1830
        %v2144 = vpop.permute.xlu0 %2143
        %2147 = vset.pattern.permute.xlu0 0
        %2148 = vperm.xlu0 %2147, %v1832
        %v2149 = vpop.permute.xlu0 %2148
        %2152 = vset.pattern.permute.xlu0 0
        %2153 = vperm.xlu0 %2152, %v1834
        %v2154 = vpop.permute.xlu0 %2153
        %v2156 = vmul.f32 %v2079, %v2060
        %v2157 = vmul.f32 %v2084, %v2061
        %v2158 = vmul.f32 %v2089, %v2062
        %v2159 = vmul.f32 %v2094, %v2063
        %v2160 = vmul.f32 %v2099, %v2064
        %v2161 = vmul.f32 %v2104, %v2065
        %v2162 = vmul.f32 %v2109, %v2066
        %v2163 = vmul.f32 %v2114, %v2067
        %v2164 = vmul.f32 %v2119, %v2068
        %v2165 = vmul.f32 %v2124, %v2069
        %v2166 = vmul.f32 %v2129, %v2070
        %v2167 = vmul.f32 %v2134, %v2071
        %v2168 = vmul.f32 %v2139, %v2072
        %v2169 = vmul.f32 %v2144, %v2073
        %v2170 = vmul.f32 %v2149, %v2074
        %v2171 = vmul.f32 %v2154, %v2075
        %v2172 = vpack.c.bf16 %v1934, %v1932
        %v2173 = vpack.c.bf16 %v1938, %v1936
        %v2174 = vpack.c.bf16 %v1942, %v1940
        %v2175 = vpack.c.bf16 %v1946, %v1944
        %v2176 = vpack.c.bf16 %v1950, %v1948
        %v2177 = vpack.c.bf16 %v1954, %v1952
        %v2178 = vpack.c.bf16 %v1958, %v1956
        %v2179 = vpack.c.bf16 %v1962, %v1960
        %v2180 = vld [vmem:[%s852] sm:$0xf]
        %v2181 = vld [vmem:[%s852 + $0x4] sm:$0xf]
        %v2182 = vld [vmem:[%s852 + $0x8] sm:$0xf]
        %v2183 = vld [vmem:[%s852 + $0xc] sm:$0xf]
        %v2184 = vld [vmem:[%s852 + $0x10] sm:$0xf]
        %v2185 = vld [vmem:[%s852 + $0x14] sm:$0xf]
        %v2186 = vld [vmem:[%s852 + $0x18] sm:$0xf]
        %v2187 = vld [vmem:[%s852 + $0x1c] sm:$0xf]
        %v2188 = vld [vmem:[%s852 + $0x20] sm:$0xf]
        %v2189 = vld [vmem:[%s852 + $0x24] sm:$0xf]
        %v2190 = vld [vmem:[%s852 + $0x28] sm:$0xf]
        %v2191 = vld [vmem:[%s852 + $0x2c] sm:$0xf]
        %v2192 = vld [vmem:[%s852 + $0x30] sm:$0xf]
        %v2193 = vld [vmem:[%s852 + $0x34] sm:$0xf]
        %v2194 = vld [vmem:[%s852 + $0x38] sm:$0xf]
        %v2195 = vld [vmem:[%s852 + $0x3c] sm:$0xf]
        %v2212 = vunpack.c.l.b16 %v2180
        %v2213 = vunpack.c.l.b16 %v2181
        %v2214 = vunpack.c.l.b16 %v2182
        %v2215 = vunpack.c.l.b16 %v2183
        %v2216 = vunpack.c.l.b16 %v2184
        %v2217 = vunpack.c.l.b16 %v2185
        %v2218 = vunpack.c.l.b16 %v2186
        %v2219 = vunpack.c.l.b16 %v2187
        %v2220 = vunpack.c.l.b16 %v2188
        %v2221 = vunpack.c.l.b16 %v2189
        %v2222 = vunpack.c.l.b16 %v2190
        %v2223 = vunpack.c.l.b16 %v2191
        %v2224 = vunpack.c.l.b16 %v2192
        %v2225 = vunpack.c.l.b16 %v2193
        %v2226 = vunpack.c.l.b16 %v2194
        %v2227 = vunpack.c.l.b16 %v2195
        %v2228 = vpack.c.b16 %v2213, %v2212
        %v2229 = vpack.c.b16 %v2215, %v2214
        %v2230 = vpack.c.b16 %v2217, %v2216
        %v2231 = vpack.c.b16 %v2219, %v2218
        %v2232 = vpack.c.b16 %v2221, %v2220
        %v2233 = vpack.c.b16 %v2223, %v2222
        %v2234 = vpack.c.b16 %v2225, %v2224
        %v2235 = vpack.c.b16 %v2227, %v2226
        %2244 = vmatprep.subr.bf16.mxu0 0
        %2245 = vmatpush1.bf16.msra.mxu0 %v2228
        %2246 = vmatprep.subr.bf16.mxu0 0
        %2247 = vmatpush1.bf16.msra.mxu0 %v2229
        %2248 = vmatprep.subr.bf16.mxu0 0
        %2249 = vmatpush1.bf16.msra.mxu0 %v2230
        %2250 = vmatprep.subr.bf16.mxu0 0
        %2251 = vmatpush1.bf16.msra.mxu0 %v2231
        %2252 = vmatprep.subr.bf16.mxu0 0
        %2253 = vmatpush1.bf16.msra.mxu0 %v2232
        %2254 = vmatprep.subr.bf16.mxu0 0
        %2255 = vmatpush1.bf16.msra.mxu0 %v2233
        %2256 = vmatprep.subr.bf16.mxu0 0
        %2257 = vmatpush1.bf16.msra.mxu0 %v2234
        %2258 = vmatprep.subr.bf16.mxu0 0
        %2259 = vmatpush1.bf16.msra.mxu0 %v2235
        %2260 = vmatprep.subr.bf16.mxu0 0
        %2261 = vmatpush1.bf16.msra.mxu0 0
        %2262 = vmatprep.subr.bf16.mxu0 0
        %2263 = vmatpush1.bf16.msra.mxu0 0
        %2264 = vmatprep.subr.bf16.mxu0 0
        %2265 = vmatpush1.bf16.msra.mxu0 0
        %2266 = vmatprep.subr.bf16.mxu0 0
        %2267 = vmatpush1.bf16.msra.mxu0 0
        %2268 = vmatprep.subr.bf16.mxu0 0
        %2269 = vmatpush1.bf16.msra.mxu0 0
        %2270 = vmatprep.subr.bf16.mxu0 0
        %2271 = vmatpush1.bf16.msra.mxu0 0
        %2272 = vmatprep.subr.bf16.mxu0 0
        %2273 = vmatpush1.bf16.msra.mxu0 0
        %2274 = vmatprep.subr.bf16.mxu0 0
        %2275 = vmatpush1.bf16.msra.mxu0 0
        %2276 = vmatprep.mubr.bf16.mxu0 0
        %2277 = vmatmul.mubr.bf16.gmra.mrb[0].mxu0 %v2172
        %v2278 = vpop.f32.mrb[0].mxu0
        %v2279 = vadd.f32 0.0, %v2278
        %v2280 = vpop.f32.mrb[0].mxu0
        %v2281 = vpop.f32.mrb[0].mxu0
        %v2282 = vadd.f32 0.0, %v2281
        %v2283 = vpop.f32.mrb[0].mxu0
        %2284 = vmatprep.mubr.bf16.mxu0 0
        %2285 = vmatmul.mubr.bf16.gmra.mrb[0].mxu0 %v2173
        %v2286 = vpop.f32.mrb[0].mxu0
        %v2287 = vadd.f32 0.0, %v2286
        %v2288 = vpop.f32.mrb[0].mxu0
        %v2289 = vpop.f32.mrb[0].mxu0
        %v2290 = vadd.f32 0.0, %v2289
        %v2291 = vpop.f32.mrb[0].mxu0
        %2292 = vmatprep.mubr.bf16.mxu0 0
        %2293 = vmatmul.mubr.bf16.gmra.mrb[0].mxu0 %v2174
        %v2294 = vpop.f32.mrb[0].mxu0
        %v2295 = vadd.f32 0.0, %v2294
        %v2296 = vpop.f32.mrb[0].mxu0
        %v2297 = vpop.f32.mrb[0].mxu0
        %v2298 = vadd.f32 0.0, %v2297
        %v2299 = vpop.f32.mrb[0].mxu0
        %2300 = vmatprep.mubr.bf16.mxu0 0
        %2301 = vmatmul.mubr.bf16.gmra.mrb[0].mxu0 %v2175
        %v2302 = vpop.f32.mrb[0].mxu0
        %v2303 = vadd.f32 0.0, %v2302
        %v2304 = vpop.f32.mrb[0].mxu0
        %v2305 = vpop.f32.mrb[0].mxu0
        %v2306 = vadd.f32 0.0, %v2305
        %v2307 = vpop.f32.mrb[0].mxu0
        %2308 = vmatprep.mubr.bf16.mxu0 0
        %2309 = vmatmul.mubr.bf16.gmra.mrb[0].mxu0 %v2176
        %v2310 = vpop.f32.mrb[0].mxu0
        %v2311 = vadd.f32 0.0, %v2310
        %v2312 = vpop.f32.mrb[0].mxu0
        %v2313 = vpop.f32.mrb[0].mxu0
        %v2314 = vadd.f32 0.0, %v2313
        %v2315 = vpop.f32.mrb[0].mxu0
        %2316 = vmatprep.mubr.bf16.mxu0 0
        %2317 = vmatmul.mubr.bf16.gmra.mrb[0].mxu0 %v2177
        %v2318 = vpop.f32.mrb[0].mxu0
        %v2319 = vadd.f32 0.0, %v2318
        %v2320 = vpop.f32.mrb[0].mxu0
        %v2321 = vpop.f32.mrb[0].mxu0
        %v2322 = vadd.f32 0.0, %v2321
        %v2323 = vpop.f32.mrb[0].mxu0
        %2324 = vmatprep.mubr.bf16.mxu0 0
        %2325 = vmatmul.mubr.bf16.gmra.mrb[0].mxu0 %v2178
        %v2326 = vpop.f32.mrb[0].mxu0
        %v2327 = vadd.f32 0.0, %v2326
        %v2328 = vpop.f32.mrb[0].mxu0
        %v2329 = vpop.f32.mrb[0].mxu0
        %v2330 = vadd.f32 0.0, %v2329
        %v2331 = vpop.f32.mrb[0].mxu0
        %2332 = vmatprep.mubr.bf16.mxu0 0
        %2333 = vmatmul.mubr.bf16.gmra.mrb[0].mxu0 %v2179
        %v2334 = vpop.f32.mrb[0].mxu0
        %v2335 = vadd.f32 0.0, %v2334
        %v2336 = vpop.f32.mrb[0].mxu0
        %v2337 = vpop.f32.mrb[0].mxu0
        %v2338 = vadd.f32 0.0, %v2337
        %v2339 = vpop.f32.mrb[0].mxu0
        %2340 = vdwg.mxu0
        %v2341 = vadd.f32 %v2156, %v2279
        %v2342 = vadd.f32 %v2157, %v2282
        %v2343 = vadd.f32 %v2158, %v2287
        %v2344 = vadd.f32 %v2159, %v2290
        %v2345 = vadd.f32 %v2160, %v2295
        %v2346 = vadd.f32 %v2161, %v2298
        %v2347 = vadd.f32 %v2162, %v2303
        %v2348 = vadd.f32 %v2163, %v2306
        %v2349 = vadd.f32 %v2164, %v2311
        %v2350 = vadd.f32 %v2165, %v2314
        %v2351 = vadd.f32 %v2166, %v2319
        %v2352 = vadd.f32 %v2167, %v2322
        %v2353 = vadd.f32 %v2168, %v2327
        %v2354 = vadd.f32 %v2169, %v2330
        %v2355 = vadd.f32 %v2170, %v2335
        %v2356 = vadd.f32 %v2171, %v2338
        %2357 = vst [vmem:[#allocation4] sm:$0xff] %v2341
        %2358 = vst [vmem:[#allocation4 + $0x8] sm:$0xff] %v2342
        %2359 = vst [vmem:[#allocation4 + $0x10] sm:$0xff] %v2343
        %2360 = vst [vmem:[#allocation4 + $0x18] sm:$0xff] %v2344
        %2361 = vst [vmem:[#allocation4 + $0x20] sm:$0xff] %v2345
        %2362 = vst [vmem:[#allocation4 + $0x28] sm:$0xff] %v2346
        %2363 = vst [vmem:[#allocation4 + $0x30] sm:$0xff] %v2347
        %2364 = vst [vmem:[#allocation4 + $0x38] sm:$0xff] %v2348
        %2365 = vst [vmem:[#allocation4 + $0x40] sm:$0xff] %v2349
        %2366 = vst [vmem:[#allocation4 + $0x48] sm:$0xff] %v2350
        %2367 = vst [vmem:[#allocation4 + $0x50] sm:$0xff] %v2351
        %2368 = vst [vmem:[#allocation4 + $0x58] sm:$0xff] %v2352
        %2369 = vst [vmem:[#allocation4 + $0x60] sm:$0xff] %v2353
        %2370 = vst [vmem:[#allocation4 + $0x68] sm:$0xff] %v2354
        %2371 = vst [vmem:[#allocation4 + $0x70] sm:$0xff] %v2355
        %2372 = vst [vmem:[#allocation4 + $0x78] sm:$0xff] %v2356
        %2373 = vst.msk [vmem:[#allocation2] sm:$0xff] %vm2043, %v1771
        %2374 = vst.msk [vmem:[#allocation2 + $0x8] sm:$0xff] %vm2043, %v1772
        %2375 = vst.msk [vmem:[#allocation2 + $0x10] sm:$0xff] %vm2043, %v1773
        %2376 = vst.msk [vmem:[#allocation2 + $0x18] sm:$0xff] %vm2043, %v1774
        %2377 = vst.msk [vmem:[#allocation2 + $0x20] sm:$0xff] %vm2043, %v1775
        %2378 = vst.msk [vmem:[#allocation2 + $0x28] sm:$0xff] %vm2043, %v1776
        %2379 = vst.msk [vmem:[#allocation2 + $0x30] sm:$0xff] %vm2043, %v1777
        %2380 = vst.msk [vmem:[#allocation2 + $0x38] sm:$0xff] %vm2043, %v1778
        %2381 = vst.msk [vmem:[#allocation2 + $0x40] sm:$0xff] %vm2043, %v1779
        %2382 = vst.msk [vmem:[#allocation2 + $0x48] sm:$0xff] %vm2043, %v1780
        %2383 = vst.msk [vmem:[#allocation2 + $0x50] sm:$0xff] %vm2043, %v1781
        %2384 = vst.msk [vmem:[#allocation2 + $0x58] sm:$0xff] %vm2043, %v1782
        %2385 = vst.msk [vmem:[#allocation2 + $0x60] sm:$0xff] %vm2043, %v1783
        %2386 = vst.msk [vmem:[#allocation2 + $0x68] sm:$0xff] %vm2043, %v1784
        %2387 = vst.msk [vmem:[#allocation2 + $0x70] sm:$0xff] %vm2043, %v1785
        %2388 = vst.msk [vmem:[#allocation2 + $0x78] sm:$0xff] %vm2043, %v1786
        // Predicated region
        $region192: #{ernie_layout_self_attention.3} parent=174 // pred_check
          %p2389 = pneg %p1019
        $region193: #{ernie_layout_self_attention.3} parent=174 // pred_check_branch
          %2391 = sbr.rel (%p2389) target = $region195
        $region194: #{ernie_layout_self_attention.3} parent=174 // pred_region
          %v2392 = vld [vmem:[#allocation4] sm:$0xff]
          %v2393 = vld [vmem:[#allocation4 + $0x8] sm:$0xff]
          %v2394 = vld [vmem:[#allocation4 + $0x10] sm:$0xff]
          %v2395 = vld [vmem:[#allocation4 + $0x18] sm:$0xff]
          %v2396 = vld [vmem:[#allocation4 + $0x20] sm:$0xff]
          %v2397 = vld [vmem:[#allocation4 + $0x28] sm:$0xff]
          %v2398 = vld [vmem:[#allocation4 + $0x30] sm:$0xff]
          %v2399 = vld [vmem:[#allocation4 + $0x38] sm:$0xff]
          %v2400 = vld [vmem:[#allocation4 + $0x40] sm:$0xff]
          %v2401 = vld [vmem:[#allocation4 + $0x48] sm:$0xff]
          %v2402 = vld [vmem:[#allocation4 + $0x50] sm:$0xff]
          %v2403 = vld [vmem:[#allocation4 + $0x58] sm:$0xff]
          %v2404 = vld [vmem:[#allocation4 + $0x60] sm:$0xff]
          %v2405 = vld [vmem:[#allocation4 + $0x68] sm:$0xff]
          %v2406 = vld [vmem:[#allocation4 + $0x70] sm:$0xff]
          %v2407 = vld [vmem:[#allocation4 + $0x78] sm:$0xff]
          %v2408 = vld [vmem:[#allocation3] sm:$0xff]
          %v2409 = vld [vmem:[#allocation3 + $0x8] sm:$0xff]
          %v2410 = vld [vmem:[#allocation3 + $0x10] sm:$0xff]
          %v2411 = vld [vmem:[#allocation3 + $0x18] sm:$0xff]
          %v2412 = vld [vmem:[#allocation3 + $0x20] sm:$0xff]
          %v2413 = vld [vmem:[#allocation3 + $0x28] sm:$0xff]
          %v2414 = vld [vmem:[#allocation3 + $0x30] sm:$0xff]
          %v2415 = vld [vmem:[#allocation3 + $0x38] sm:$0xff]
          %v2416 = vld [vmem:[#allocation3 + $0x40] sm:$0xff]
          %v2417 = vld [vmem:[#allocation3 + $0x48] sm:$0xff]
          %v2418 = vld [vmem:[#allocation3 + $0x50] sm:$0xff]
          %v2419 = vld [vmem:[#allocation3 + $0x58] sm:$0xff]
          %v2420 = vld [vmem:[#allocation3 + $0x60] sm:$0xff]
          %v2421 = vld [vmem:[#allocation3 + $0x68] sm:$0xff]
          %v2422 = vld [vmem:[#allocation3 + $0x70] sm:$0xff]
          %v2423 = vld [vmem:[#allocation3 + $0x78] sm:$0xff]
          %v2424 = vrcp.pop %v2408
          %v2425 = vrcp.pop %v2409
          %v2426 = vrcp.pop %v2410
          %v2427 = vrcp.pop %v2411
          %v2428 = vrcp.pop %v2412
          %v2429 = vrcp.pop %v2413
          %v2430 = vrcp.pop %v2414
          %v2431 = vrcp.pop %v2415
          %v2432 = vrcp.pop %v2416
          %v2433 = vrcp.pop %v2417
          %v2434 = vrcp.pop %v2418
          %v2435 = vrcp.pop %v2419
          %v2436 = vrcp.pop %v2420
          %v2437 = vrcp.pop %v2421
          %v2438 = vrcp.pop %v2422
          %v2439 = vrcp.pop %v2423
          %2441 = vset.pattern.permute.xlu0 0
          %2442 = vperm.xlu0 %2441, %v2424
          %v2443 = vpop.permute.xlu0 %2442
          %2446 = vset.pattern.permute.xlu0 0
          %2447 = vperm.xlu0 %2446, %v2425
          %v2448 = vpop.permute.xlu0 %2447
          %2451 = vset.pattern.permute.xlu0 0
          %2452 = vperm.xlu0 %2451, %v2426
          %v2453 = vpop.permute.xlu0 %2452
          %2456 = vset.pattern.permute.xlu0 0
          %2457 = vperm.xlu0 %2456, %v2427
          %v2458 = vpop.permute.xlu0 %2457
          %2461 = vset.pattern.permute.xlu0 0
          %2462 = vperm.xlu0 %2461, %v2428
          %v2463 = vpop.permute.xlu0 %2462
          %2466 = vset.pattern.permute.xlu0 0
          %2467 = vperm.xlu0 %2466, %v2429
          %v2468 = vpop.permute.xlu0 %2467
          %2471 = vset.pattern.permute.xlu0 0
          %2472 = vperm.xlu0 %2471, %v2430
          %v2473 = vpop.permute.xlu0 %2472
          %2476 = vset.pattern.permute.xlu0 0
          %2477 = vperm.xlu0 %2476, %v2431
          %v2478 = vpop.permute.xlu0 %2477
          %2481 = vset.pattern.permute.xlu0 0
          %2482 = vperm.xlu0 %2481, %v2432
          %v2483 = vpop.permute.xlu0 %2482
          %2486 = vset.pattern.permute.xlu0 0
          %2487 = vperm.xlu0 %2486, %v2433
          %v2488 = vpop.permute.xlu0 %2487
          %2491 = vset.pattern.permute.xlu0 0
          %2492 = vperm.xlu0 %2491, %v2434
          %v2493 = vpop.permute.xlu0 %2492
          %2496 = vset.pattern.permute.xlu0 0
          %2497 = vperm.xlu0 %2496, %v2435
          %v2498 = vpop.permute.xlu0 %2497
          %2501 = vset.pattern.permute.xlu0 0
          %2502 = vperm.xlu0 %2501, %v2436
          %v2503 = vpop.permute.xlu0 %2502
          %2506 = vset.pattern.permute.xlu0 0
          %2507 = vperm.xlu0 %2506, %v2437
          %v2508 = vpop.permute.xlu0 %2507
          %2511 = vset.pattern.permute.xlu0 0
          %2512 = vperm.xlu0 %2511, %v2438
          %v2513 = vpop.permute.xlu0 %2512
          %2516 = vset.pattern.permute.xlu0 0
          %2517 = vperm.xlu0 %2516, %v2439
          %v2518 = vpop.permute.xlu0 %2517
          %v2520 = vmul.f32 %v2392, %v2443
          %v2521 = vmul.f32 %v2393, %v2448
          %v2522 = vmul.f32 %v2394, %v2453
          %v2523 = vmul.f32 %v2395, %v2458
          %v2524 = vmul.f32 %v2396, %v2463
          %v2525 = vmul.f32 %v2397, %v2468
          %v2526 = vmul.f32 %v2398, %v2473
          %v2527 = vmul.f32 %v2399, %v2478
          %v2528 = vmul.f32 %v2400, %v2483
          %v2529 = vmul.f32 %v2401, %v2488
          %v2530 = vmul.f32 %v2402, %v2493
          %v2531 = vmul.f32 %v2403, %v2498
          %v2532 = vmul.f32 %v2404, %v2503
          %v2533 = vmul.f32 %v2405, %v2508
          %v2534 = vmul.f32 %v2406, %v2513
          %v2535 = vmul.f32 %v2407, %v2518
          %2536 = vst [vmem:[%s949] sm:$0xff] %v2520
          %2537 = vst [vmem:[%s949 + $0x8] sm:$0xff] %v2521
          %2538 = vst [vmem:[%s949 + $0x10] sm:$0xff] %v2522
          %2539 = vst [vmem:[%s949 + $0x18] sm:$0xff] %v2523
          %2540 = vst [vmem:[%s949 + $0x20] sm:$0xff] %v2524
          %2541 = vst [vmem:[%s949 + $0x28] sm:$0xff] %v2525
          %2542 = vst [vmem:[%s949 + $0x30] sm:$0xff] %v2526
          %2543 = vst [vmem:[%s949 + $0x38] sm:$0xff] %v2527
          %2544 = vst [vmem:[%s949 + $0x40] sm:$0xff] %v2528
          %2545 = vst [vmem:[%s949 + $0x48] sm:$0xff] %v2529
          %2546 = vst [vmem:[%s949 + $0x50] sm:$0xff] %v2530
          %2547 = vst [vmem:[%s949 + $0x58] sm:$0xff] %v2531
          %2548 = vst [vmem:[%s949 + $0x60] sm:$0xff] %v2532
          %2549 = vst [vmem:[%s949 + $0x68] sm:$0xff] %v2533
          %2550 = vst [vmem:[%s949 + $0x70] sm:$0xff] %v2534
          %2551 = vst [vmem:[%s949 + $0x78] sm:$0xff] %v2535
        $region195: #{ernie_layout_self_attention.3} parent=174 // pred_fallthru
          _
        %s2552 = sand.u32 %s375, 1
        %s2553 = scalar_lea.sflag [#allocation9], %s2552
        %s2554 = sand.u32 %s375, 1
        %s2555 = smul.addr %s2554, 128
        %s2556 = scalar_lea.vmem [#allocation8], %s2555
        // Predicated region
        $region196: #{ernie_layout_self_attention.3} parent=174 // pred_check
          %p2557 = pneg %p385
        $region197: #{ernie_layout_self_attention.3} parent=174 // pred_check_branch
          %2559 = sbr.rel (%p2557) target = $region199
        $region198: #{ernie_layout_self_attention.3} parent=174 // pred_region
          %s2560 = smul.u32 16, %s33
          %s2562 = ssub.s32 2048, 2048
          %2563 = vsyncadd %s2553, %s2562
          %s2564 = smul.addr %s2560, 2
          %s2565 = sadd.s32 %s31, %s2564
          %s2566 = smul.addr %s32, 32
          %s2567 = sadd.s32 %s2565, %s2566
          %s2568 = smul.addr %s2567, 128
          %s2569 = scalar_lea.hbm %s11, %s2568
          %s2570 = sshll.u32 %s2556, 4
          %s2571 = int_to_ptr.vmem [resolvable:$true] %s2570
          %2576 = dma.vmem_to_hbm [thread:$0]  %s2571, 2048, %s2569, %s2553, 128, 256, 8
        $region199: #{ernie_layout_self_attention.3} parent=174 // pred_fallthru
          _
      $region175: #{ernie_layout_self_attention.3} parent=5 // pred_fallthru
        _
      %p2577 = scmp.le.s32.totalorder 2, %s20
      // Predicated region
      $region200: #{ernie_layout_self_attention.3} parent=5 // pred_check
        %p2578 = pneg %p2577
      $region201: #{ernie_layout_self_attention.3} parent=5 // pred_check_branch
        %2580 = sbr.rel (%p2578) target = $region203
      $region202: #{ernie_layout_self_attention.3} parent=5 // pred_region
        %s2581 = ssub.s32 %s20, 2
        // Predicated region
        $region204: #{ernie_layout_self_attention.3} parent=202 // pred_check
          %p2582 = pneg %p391
        $region205: #{ernie_layout_self_attention.3} parent=202 // pred_check_branch
          %2584 = sbr.rel (%p2582) target = $region207
        $region206: #{ernie_layout_self_attention.3} parent=202 // pred_region
          %s2585 = sand.u32 %s376, 1
          %s2586 = scalar_lea.sflag [#allocation9], %s2585
          %s2587 = sand.u32 %s376, 1
          %s2588 = smul.addr %s2587, 128
          %s2589 = scalar_lea.vmem [#allocation8], %s2588
          %2590 = dma.done %s2586, 2048
        $region207: #{ernie_layout_self_attention.3} parent=202 // pred_fallthru
          _
      $region203: #{ernie_layout_self_attention.3} parent=5 // pred_fallthru
        _
    $region6: #{ernie_layout_self_attention.3} parent=1 // loop_footer
      %s24 = sadd.s32 1, %s20
    $region7: #{ernie_layout_self_attention.3} parent=1 // loop_footer_branch
      %19 = sbr.rel target = $region3
    $region8: #{ernie_layout_self_attention.3} parent=1 // loop_exit
      _
    %2591 = vsyncpa [#allocation9], 1
    %s2592 = scalar_lea.sflag [#allocation9], 1
    %2593 = vsyncpa %s2592, 1

// kernel: ernie_layout_self_attention.2
$region0: #{ernie_layout_self_attention.2}
  #allocation0 [shape = 'u32[]', space=smem, size = 0x4, offset = 0x4, fixed_abs, tag = 'smem constant byte address 0x4 - core index']
  #allocation1 [shape = 'u32[144,128]{1,0:T(1,128)}', space=vmem, size = 0x12000, scoped, tag = 'internal scratch']
  %s0 = inlined_call_operand.vmem [shape: bf16[256,256], index: 0, kind: input, shape index: {}]
  %s1 = inlined_call_operand.vmem [shape: bf16[256,768], index: 1, kind: input, shape index: {}]
  %s2 = inlined_call_operand.vmem [shape: f32[1,768], index: 2, kind: input, shape index: {}]
  %s3 = inlined_call_operand.vmem [shape: bf16[256,768], index: 3, kind: output, shape index: {}]
  %s4 = sld [smem:[#allocation0]]
  $region22: #{ernie_layout_self_attention.2} parent=0
    _
  %s6 = ssub.s32 1, %s4
  %s7 = scalar_select 0, %s6, %s4
  // Predicated region
  $region2: #{ernie_layout_self_attention.2} parent=0 // pred_check
    _
  $region3: #{ernie_layout_self_attention.2} parent=0 // pred_check_branch
    %9 = sbr.rel (0) target = $region5
  $region4: #{ernie_layout_self_attention.2} parent=0 // pred_region
    _
  $region5: #{ernie_layout_self_attention.2} parent=0 // pred_fallthru
    _
  // Predicated region
  $region6: #{ernie_layout_self_attention.2} parent=0 // pred_check
    _
  $region7: #{ernie_layout_self_attention.2} parent=0 // pred_check_branch
    %11 = sbr.rel (0) target = $region9
  $region8: #{ernie_layout_self_attention.2} parent=0 // pred_region
    _
  $region9: #{ernie_layout_self_attention.2} parent=0 // pred_fallthru
    _
  // Predicated region
  $region10: #{ernie_layout_self_attention.2} parent=0 // pred_check
    _
  $region11: #{ernie_layout_self_attention.2} parent=0 // pred_check_branch
    %13 = sbr.rel (0) target = $region13
  $region12: #{ernie_layout_self_attention.2} parent=0 // pred_region
    _
  $region13: #{ernie_layout_self_attention.2} parent=0 // pred_fallthru
    _
  %v14 = vld [vmem:[%s0] sm:$0xff]
  %v15 = vld [vmem:[%s0 + $0x8] sm:$0xff]
  %v16 = vld [vmem:[%s0 + $0x10] sm:$0xff]
  %v17 = vld [vmem:[%s0 + $0x18] sm:$0xff]
  %v18 = vld [vmem:[%s0 + $0x20] sm:$0xff]
  %v19 = vld [vmem:[%s0 + $0x28] sm:$0xff]
  %v20 = vld [vmem:[%s0 + $0x30] sm:$0xff]
  %v21 = vld [vmem:[%s0 + $0x38] sm:$0xff]
  %v22 = vld [vmem:[%s0 + $0x40] sm:$0xff]
  %v23 = vld [vmem:[%s0 + $0x48] sm:$0xff]
  %v24 = vld [vmem:[%s0 + $0x50] sm:$0xff]
  %v25 = vld [vmem:[%s0 + $0x58] sm:$0xff]
  %v26 = vld [vmem:[%s0 + $0x60] sm:$0xff]
  %v27 = vld [vmem:[%s0 + $0x68] sm:$0xff]
  %v28 = vld [vmem:[%s0 + $0x70] sm:$0xff]
  %v29 = vld [vmem:[%s0 + $0x78] sm:$0xff]
  %v30 = vld [vmem:[%s0 + $0x80] sm:$0xff]
  %v31 = vld [vmem:[%s0 + $0x88] sm:$0xff]
  %v32 = vld [vmem:[%s0 + $0x90] sm:$0xff]
  %v33 = vld [vmem:[%s0 + $0x98] sm:$0xff]
  %v34 = vld [vmem:[%s0 + $0xa0] sm:$0xff]
  %v35 = vld [vmem:[%s0 + $0xa8] sm:$0xff]
  %v36 = vld [vmem:[%s0 + $0xb0] sm:$0xff]
  %v37 = vld [vmem:[%s0 + $0xb8] sm:$0xff]
  %v38 = vld [vmem:[%s0 + $0xc0] sm:$0xff]
  %v39 = vld [vmem:[%s0 + $0xc8] sm:$0xff]
  %v40 = vld [vmem:[%s0 + $0xd0] sm:$0xff]
  %v41 = vld [vmem:[%s0 + $0xd8] sm:$0xff]
  %v42 = vld [vmem:[%s0 + $0xe0] sm:$0xff]
  %v43 = vld [vmem:[%s0 + $0xe8] sm:$0xff]
  %v44 = vld [vmem:[%s0 + $0xf0] sm:$0xff]
  %v45 = vld [vmem:[%s0 + $0xf8] sm:$0xff]
  %v46 = vld [vmem:[%s1] sm:$0xff]
  %v47 = vld [vmem:[%s1 + $0x8] sm:$0xff]
  %v48 = vld [vmem:[%s1 + $0x10] sm:$0xff]
  %v49 = vld [vmem:[%s1 + $0x18] sm:$0xff]
  %v50 = vld [vmem:[%s1 + $0x20] sm:$0xff]
  %v51 = vld [vmem:[%s1 + $0x28] sm:$0xff]
  %v52 = vld [vmem:[%s1 + $0x30] sm:$0xff]
  %v53 = vld [vmem:[%s1 + $0x38] sm:$0xff]
  %v54 = vld [vmem:[%s1 + $0x40] sm:$0xff]
  %v55 = vld [vmem:[%s1 + $0x48] sm:$0xff]
  %v56 = vld [vmem:[%s1 + $0x50] sm:$0xff]
  %v57 = vld [vmem:[%s1 + $0x58] sm:$0xff]
  %v58 = vld [vmem:[%s1 + $0x60] sm:$0xff]
  %v59 = vld [vmem:[%s1 + $0x68] sm:$0xff]
  %v60 = vld [vmem:[%s1 + $0x70] sm:$0xff]
  %v61 = vld [vmem:[%s1 + $0x78] sm:$0xff]
  %v62 = vld [vmem:[%s1 + $0x80] sm:$0xff]
  %v63 = vld [vmem:[%s1 + $0x88] sm:$0xff]
  %v64 = vld [vmem:[%s1 + $0x90] sm:$0xff]
  %v65 = vld [vmem:[%s1 + $0x98] sm:$0xff]
  %v66 = vld [vmem:[%s1 + $0xa0] sm:$0xff]
  %v67 = vld [vmem:[%s1 + $0xa8] sm:$0xff]
  %v68 = vld [vmem:[%s1 + $0xb0] sm:$0xff]
  %v69 = vld [vmem:[%s1 + $0xb8] sm:$0xff]
  %v70 = vld [vmem:[%s1 + $0xc0] sm:$0xff]
  %v71 = vld [vmem:[%s1 + $0xc8] sm:$0xff]
  %v72 = vld [vmem:[%s1 + $0xd0] sm:$0xff]
  %v73 = vld [vmem:[%s1 + $0xd8] sm:$0xff]
  %v74 = vld [vmem:[%s1 + $0xe0] sm:$0xff]
  %v75 = vld [vmem:[%s1 + $0xe8] sm:$0xff]
  %v76 = vld [vmem:[%s1 + $0xf0] sm:$0xff]
  %v77 = vld [vmem:[%s1 + $0xf8] sm:$0xff]
  %v78 = vld [vmem:[%s1 + $0x100] sm:$0xff]
  %v79 = vld [vmem:[%s1 + $0x108] sm:$0xff]
  %v80 = vld [vmem:[%s1 + $0x110] sm:$0xff]
  %v81 = vld [vmem:[%s1 + $0x118] sm:$0xff]
  %v82 = vld [vmem:[%s1 + $0x120] sm:$0xff]
  %v83 = vld [vmem:[%s1 + $0x128] sm:$0xff]
  %v84 = vld [vmem:[%s1 + $0x130] sm:$0xff]
  %v85 = vld [vmem:[%s1 + $0x138] sm:$0xff]
  %v86 = vld [vmem:[%s1 + $0x140] sm:$0xff]
  %v87 = vld [vmem:[%s1 + $0x148] sm:$0xff]
  %v88 = vld [vmem:[%s1 + $0x150] sm:$0xff]
  %v89 = vld [vmem:[%s1 + $0x158] sm:$0xff]
  %v90 = vld [vmem:[%s1 + $0x160] sm:$0xff]
  %v91 = vld [vmem:[%s1 + $0x168] sm:$0xff]
  %v92 = vld [vmem:[%s1 + $0x170] sm:$0xff]
  %v93 = vld [vmem:[%s1 + $0x178] sm:$0xff]
  %v94 = vld [vmem:[%s1 + $0x180] sm:$0xff]
  %v95 = vld [vmem:[%s1 + $0x188] sm:$0xff]
  %v96 = vld [vmem:[%s1 + $0x190] sm:$0xff]
  %v97 = vld [vmem:[%s1 + $0x198] sm:$0xff]
  %v98 = vld [vmem:[%s1 + $0x1a0] sm:$0xff]
  %v99 = vld [vmem:[%s1 + $0x1a8] sm:$0xff]
  %v100 = vld [vmem:[%s1 + $0x1b0] sm:$0xff]
  %v101 = vld [vmem:[%s1 + $0x1b8] sm:$0xff]
  %v102 = vld [vmem:[%s1 + $0x1c0] sm:$0xff]
  %v103 = vld [vmem:[%s1 + $0x1c8] sm:$0xff]
  %v104 = vld [vmem:[%s1 + $0x1d0] sm:$0xff]
  %v105 = vld [vmem:[%s1 + $0x1d8] sm:$0xff]
  %v106 = vld [vmem:[%s1 + $0x1e0] sm:$0xff]
  %v107 = vld [vmem:[%s1 + $0x1e8] sm:$0xff]
  %v108 = vld [vmem:[%s1 + $0x1f0] sm:$0xff]
  %v109 = vld [vmem:[%s1 + $0x1f8] sm:$0xff]
  %v110 = vld [vmem:[%s1 + $0x200] sm:$0xff]
  %v111 = vld [vmem:[%s1 + $0x208] sm:$0xff]
  %v112 = vld [vmem:[%s1 + $0x210] sm:$0xff]
  %v113 = vld [vmem:[%s1 + $0x218] sm:$0xff]
  %v114 = vld [vmem:[%s1 + $0x220] sm:$0xff]
  %v115 = vld [vmem:[%s1 + $0x228] sm:$0xff]
  %v116 = vld [vmem:[%s1 + $0x230] sm:$0xff]
  %v117 = vld [vmem:[%s1 + $0x238] sm:$0xff]
  %v118 = vld [vmem:[%s1 + $0x240] sm:$0xff]
  %v119 = vld [vmem:[%s1 + $0x248] sm:$0xff]
  %v120 = vld [vmem:[%s1 + $0x250] sm:$0xff]
  %v121 = vld [vmem:[%s1 + $0x258] sm:$0xff]
  %v122 = vld [vmem:[%s1 + $0x260] sm:$0xff]
  %v123 = vld [vmem:[%s1 + $0x268] sm:$0xff]
  %v124 = vld [vmem:[%s1 + $0x270] sm:$0xff]
  %v125 = vld [vmem:[%s1 + $0x278] sm:$0xff]
  %v126 = vld [vmem:[%s1 + $0x280] sm:$0xff]
  %v127 = vld [vmem:[%s1 + $0x288] sm:$0xff]
  %v128 = vld [vmem:[%s1 + $0x290] sm:$0xff]
  %v129 = vld [vmem:[%s1 + $0x298] sm:$0xff]
  %v130 = vld [vmem:[%s1 + $0x2a0] sm:$0xff]
  %v131 = vld [vmem:[%s1 + $0x2a8] sm:$0xff]
  %v132 = vld [vmem:[%s1 + $0x2b0] sm:$0xff]
  %v133 = vld [vmem:[%s1 + $0x2b8] sm:$0xff]
  %v134 = vld [vmem:[%s1 + $0x2c0] sm:$0xff]
  %v135 = vld [vmem:[%s1 + $0x2c8] sm:$0xff]
  %v136 = vld [vmem:[%s1 + $0x2d0] sm:$0xff]
  %v137 = vld [vmem:[%s1 + $0x2d8] sm:$0xff]
  %v138 = vld [vmem:[%s1 + $0x2e0] sm:$0xff]
  %v139 = vld [vmem:[%s1 + $0x2e8] sm:$0xff]
  %v140 = vld [vmem:[%s1 + $0x2f0] sm:$0xff]
  %v141 = vld [vmem:[%s1 + $0x2f8] sm:$0xff]
  %v142 = vld [vmem:[%s2] sm:$0x3f]
  %v144 = vlaneseq
  %v145 = vshrl.u32 %v144, 7
  %v146 = vsub.s32 0, %v145
  %v147 = vrot.slane %v142, %v146
  %v148 = vlaneseq
  %v149 = vshrl.u32 %v148, 7
  %v150 = vsub.s32 1, %v149
  %v151 = vrot.slane %v142, %v150
  %v152 = vlaneseq
  %v153 = vshrl.u32 %v152, 7
  %v154 = vsub.s32 2, %v153
  %v155 = vrot.slane %v142, %v154
  %v156 = vlaneseq
  %v157 = vshrl.u32 %v156, 7
  %v158 = vsub.s32 3, %v157
  %v159 = vrot.slane %v142, %v158
  %v160 = vlaneseq
  %v161 = vshrl.u32 %v160, 7
  %v162 = vsub.s32 4, %v161
  %v163 = vrot.slane %v142, %v162
  %v164 = vlaneseq
  %v165 = vshrl.u32 %v164, 7
  %v166 = vsub.s32 5, %v165
  %v167 = vrot.slane %v142, %v166
  %v206 = vunpack.c.l.b16 %v14
  %v207 = vunpack.c.h.b16 %v14
  %v208 = vunpack.c.l.b16 %v15
  %v209 = vunpack.c.h.b16 %v15
  %v210 = vunpack.c.l.b16 %v16
  %v211 = vunpack.c.h.b16 %v16
  %v212 = vunpack.c.l.b16 %v17
  %v213 = vunpack.c.h.b16 %v17
  %v214 = vunpack.c.l.b16 %v18
  %v215 = vunpack.c.h.b16 %v18
  %v216 = vunpack.c.l.b16 %v19
  %v217 = vunpack.c.h.b16 %v19
  %v218 = vunpack.c.l.b16 %v20
  %v219 = vunpack.c.h.b16 %v20
  %v220 = vunpack.c.l.b16 %v21
  %v221 = vunpack.c.h.b16 %v21
  %v222 = vunpack.c.l.b16 %v22
  %v223 = vunpack.c.h.b16 %v22
  %v224 = vunpack.c.l.b16 %v23
  %v225 = vunpack.c.h.b16 %v23
  %v226 = vunpack.c.l.b16 %v24
  %v227 = vunpack.c.h.b16 %v24
  %v228 = vunpack.c.l.b16 %v25
  %v229 = vunpack.c.h.b16 %v25
  %v230 = vunpack.c.l.b16 %v26
  %v231 = vunpack.c.h.b16 %v26
  %v232 = vunpack.c.l.b16 %v27
  %v233 = vunpack.c.h.b16 %v27
  %v234 = vunpack.c.l.b16 %v28
  %v235 = vunpack.c.h.b16 %v28
  %v236 = vunpack.c.l.b16 %v29
  %v237 = vunpack.c.h.b16 %v29
  %v238 = vunpack.c.l.b16 %v30
  %v239 = vunpack.c.h.b16 %v30
  %v240 = vunpack.c.l.b16 %v31
  %v241 = vunpack.c.h.b16 %v31
  %v242 = vunpack.c.l.b16 %v32
  %v243 = vunpack.c.h.b16 %v32
  %v244 = vunpack.c.l.b16 %v33
  %v245 = vunpack.c.h.b16 %v33
  %v246 = vunpack.c.l.b16 %v34
  %v247 = vunpack.c.h.b16 %v34
  %v248 = vunpack.c.l.b16 %v35
  %v249 = vunpack.c.h.b16 %v35
  %v250 = vunpack.c.l.b16 %v36
  %v251 = vunpack.c.h.b16 %v36
  %v252 = vunpack.c.l.b16 %v37
  %v253 = vunpack.c.h.b16 %v37
  %v254 = vunpack.c.l.b16 %v38
  %v255 = vunpack.c.h.b16 %v38
  %v256 = vunpack.c.l.b16 %v39
  %v257 = vunpack.c.h.b16 %v39
  %v258 = vunpack.c.l.b16 %v40
  %v259 = vunpack.c.h.b16 %v40
  %v260 = vunpack.c.l.b16 %v41
  %v261 = vunpack.c.h.b16 %v41
  %v262 = vunpack.c.l.b16 %v42
  %v263 = vunpack.c.h.b16 %v42
  %v264 = vunpack.c.l.b16 %v43
  %v265 = vunpack.c.h.b16 %v43
  %v266 = vunpack.c.l.b16 %v44
  %v267 = vunpack.c.h.b16 %v44
  %v268 = vunpack.c.l.b16 %v45
  %v269 = vunpack.c.h.b16 %v45
  %v270 = vpack.c.b16 %v208, %v206
  %v271 = vpack.c.b16 %v209, %v207
  %v272 = vpack.c.b16 %v212, %v210
  %v273 = vpack.c.b16 %v213, %v211
  %v274 = vpack.c.b16 %v216, %v214
  %v275 = vpack.c.b16 %v217, %v215
  %v276 = vpack.c.b16 %v220, %v218
  %v277 = vpack.c.b16 %v221, %v219
  %v278 = vpack.c.b16 %v224, %v222
  %v279 = vpack.c.b16 %v225, %v223
  %v280 = vpack.c.b16 %v228, %v226
  %v281 = vpack.c.b16 %v229, %v227
  %v282 = vpack.c.b16 %v232, %v230
  %v283 = vpack.c.b16 %v233, %v231
  %v284 = vpack.c.b16 %v236, %v234
  %v285 = vpack.c.b16 %v237, %v235
  %v286 = vpack.c.b16 %v240, %v238
  %v287 = vpack.c.b16 %v241, %v239
  %v288 = vpack.c.b16 %v244, %v242
  %v289 = vpack.c.b16 %v245, %v243
  %v290 = vpack.c.b16 %v248, %v246
  %v291 = vpack.c.b16 %v249, %v247
  %v292 = vpack.c.b16 %v252, %v250
  %v293 = vpack.c.b16 %v253, %v251
  %v294 = vpack.c.b16 %v256, %v254
  %v295 = vpack.c.b16 %v257, %v255
  %v296 = vpack.c.b16 %v260, %v258
  %v297 = vpack.c.b16 %v261, %v259
  %v298 = vpack.c.b16 %v264, %v262
  %v299 = vpack.c.b16 %v265, %v263
  %v300 = vpack.c.b16 %v268, %v266
  %v301 = vpack.c.b16 %v269, %v267
  %v430 = vunpack.c.l.b16 %v46
  %v431 = vunpack.c.h.b16 %v46
  %v432 = vunpack.c.l.b16 %v47
  %v433 = vunpack.c.h.b16 %v47
  %v434 = vunpack.c.l.b16 %v48
  %v435 = vunpack.c.h.b16 %v48
  %v436 = vunpack.c.l.b16 %v49
  %v437 = vunpack.c.h.b16 %v49
  %v438 = vunpack.c.l.b16 %v50
  %v439 = vunpack.c.h.b16 %v50
  %v440 = vunpack.c.l.b16 %v51
  %v441 = vunpack.c.h.b16 %v51
  %v442 = vunpack.c.l.b16 %v52
  %v443 = vunpack.c.h.b16 %v52
  %v444 = vunpack.c.l.b16 %v53
  %v445 = vunpack.c.h.b16 %v53
  %v446 = vunpack.c.l.b16 %v54
  %v447 = vunpack.c.h.b16 %v54
  %v448 = vunpack.c.l.b16 %v55
  %v449 = vunpack.c.h.b16 %v55
  %v450 = vunpack.c.l.b16 %v56
  %v451 = vunpack.c.h.b16 %v56
  %v452 = vunpack.c.l.b16 %v57
  %v453 = vunpack.c.h.b16 %v57
  %v454 = vunpack.c.l.b16 %v58
  %v455 = vunpack.c.h.b16 %v58
  %v456 = vunpack.c.l.b16 %v59
  %v457 = vunpack.c.h.b16 %v59
  %v458 = vunpack.c.l.b16 %v60
  %v459 = vunpack.c.h.b16 %v60
  %v460 = vunpack.c.l.b16 %v61
  %v461 = vunpack.c.h.b16 %v61
  %v462 = vunpack.c.l.b16 %v62
  %v463 = vunpack.c.h.b16 %v62
  %v464 = vunpack.c.l.b16 %v63
  %v465 = vunpack.c.h.b16 %v63
  %v466 = vunpack.c.l.b16 %v64
  %v467 = vunpack.c.h.b16 %v64
  %v468 = vunpack.c.l.b16 %v65
  %v469 = vunpack.c.h.b16 %v65
  %v470 = vunpack.c.l.b16 %v66
  %v471 = vunpack.c.h.b16 %v66
  %v472 = vunpack.c.l.b16 %v67
  %v473 = vunpack.c.h.b16 %v67
  %v474 = vunpack.c.l.b16 %v68
  %v475 = vunpack.c.h.b16 %v68
  %v476 = vunpack.c.l.b16 %v69
  %v477 = vunpack.c.h.b16 %v69
  %v478 = vunpack.c.l.b16 %v70
  %v479 = vunpack.c.h.b16 %v70
  %v480 = vunpack.c.l.b16 %v71
  %v481 = vunpack.c.h.b16 %v71
  %v482 = vunpack.c.l.b16 %v72
  %v483 = vunpack.c.h.b16 %v72
  %v484 = vunpack.c.l.b16 %v73
  %v485 = vunpack.c.h.b16 %v73
  %v486 = vunpack.c.l.b16 %v74
  %v487 = vunpack.c.h.b16 %v74
  %v488 = vunpack.c.l.b16 %v75
  %v489 = vunpack.c.h.b16 %v75
  %v490 = vunpack.c.l.b16 %v76
  %v491 = vunpack.c.h.b16 %v76
  %v492 = vunpack.c.l.b16 %v77
  %v493 = vunpack.c.h.b16 %v77
  %v494 = vunpack.c.l.b16 %v78
  %v495 = vunpack.c.h.b16 %v78
  %v496 = vunpack.c.l.b16 %v79
  %v497 = vunpack.c.h.b16 %v79
  %v498 = vunpack.c.l.b16 %v80
  %v499 = vunpack.c.h.b16 %v80
  %v500 = vunpack.c.l.b16 %v81
  %v501 = vunpack.c.h.b16 %v81
  %v502 = vunpack.c.l.b16 %v82
  %v503 = vunpack.c.h.b16 %v82
  %v504 = vunpack.c.l.b16 %v83
  %v505 = vunpack.c.h.b16 %v83
  %v506 = vunpack.c.l.b16 %v84
  %v507 = vunpack.c.h.b16 %v84
  %v508 = vunpack.c.l.b16 %v85
  %v509 = vunpack.c.h.b16 %v85
  %v510 = vunpack.c.l.b16 %v86
  %v511 = vunpack.c.h.b16 %v86
  %v512 = vunpack.c.l.b16 %v87
  %v513 = vunpack.c.h.b16 %v87
  %v514 = vunpack.c.l.b16 %v88
  %v515 = vunpack.c.h.b16 %v88
  %v516 = vunpack.c.l.b16 %v89
  %v517 = vunpack.c.h.b16 %v89
  %v518 = vunpack.c.l.b16 %v90
  %v519 = vunpack.c.h.b16 %v90
  %v520 = vunpack.c.l.b16 %v91
  %v521 = vunpack.c.h.b16 %v91
  %v522 = vunpack.c.l.b16 %v92
  %v523 = vunpack.c.h.b16 %v92
  %v524 = vunpack.c.l.b16 %v93
  %v525 = vunpack.c.h.b16 %v93
  %v526 = vunpack.c.l.b16 %v94
  %v527 = vunpack.c.h.b16 %v94
  %v528 = vunpack.c.l.b16 %v95
  %v529 = vunpack.c.h.b16 %v95
  %v530 = vunpack.c.l.b16 %v96
  %v531 = vunpack.c.h.b16 %v96
  %v532 = vunpack.c.l.b16 %v97
  %v533 = vunpack.c.h.b16 %v97
  %v534 = vunpack.c.l.b16 %v98
  %v535 = vunpack.c.h.b16 %v98
  %v536 = vunpack.c.l.b16 %v99
  %v537 = vunpack.c.h.b16 %v99
  %v538 = vunpack.c.l.b16 %v100
  %v539 = vunpack.c.h.b16 %v100
  %v540 = vunpack.c.l.b16 %v101
  %v541 = vunpack.c.h.b16 %v101
  %v542 = vunpack.c.l.b16 %v102
  %v543 = vunpack.c.h.b16 %v102
  %v544 = vunpack.c.l.b16 %v103
  %v545 = vunpack.c.h.b16 %v103
  %v546 = vunpack.c.l.b16 %v104
  %v547 = vunpack.c.h.b16 %v104
  %v548 = vunpack.c.l.b16 %v105
  %v549 = vunpack.c.h.b16 %v105
  %v550 = vunpack.c.l.b16 %v106
  %v551 = vunpack.c.h.b16 %v106
  %v552 = vunpack.c.l.b16 %v107
  %v553 = vunpack.c.h.b16 %v107
  %v554 = vunpack.c.l.b16 %v108
  %v555 = vunpack.c.h.b16 %v108
  %v556 = vunpack.c.l.b16 %v109
  %v557 = vunpack.c.h.b16 %v109
  %v558 = vunpack.c.l.b16 %v110
  %v559 = vunpack.c.h.b16 %v110
  %v560 = vunpack.c.l.b16 %v111
  %v561 = vunpack.c.h.b16 %v111
  %v562 = vunpack.c.l.b16 %v112
  %v563 = vunpack.c.h.b16 %v112
  %v564 = vunpack.c.l.b16 %v113
  %v565 = vunpack.c.h.b16 %v113
  %v566 = vunpack.c.l.b16 %v114
  %v567 = vunpack.c.h.b16 %v114
  %v568 = vunpack.c.l.b16 %v115
  %v569 = vunpack.c.h.b16 %v115
  %v570 = vunpack.c.l.b16 %v116
  %v571 = vunpack.c.h.b16 %v116
  %v572 = vunpack.c.l.b16 %v117
  %v573 = vunpack.c.h.b16 %v117
  %v574 = vunpack.c.l.b16 %v118
  %v575 = vunpack.c.h.b16 %v118
  %v576 = vunpack.c.l.b16 %v119
  %v577 = vunpack.c.h.b16 %v119
  %v578 = vunpack.c.l.b16 %v120
  %v579 = vunpack.c.h.b16 %v120
  %v580 = vunpack.c.l.b16 %v121
  %v581 = vunpack.c.h.b16 %v121
  %v582 = vunpack.c.l.b16 %v122
  %v583 = vunpack.c.h.b16 %v122
  %v584 = vunpack.c.l.b16 %v123
  %v585 = vunpack.c.h.b16 %v123
  %v586 = vunpack.c.l.b16 %v124
  %v587 = vunpack.c.h.b16 %v124
  %v588 = vunpack.c.l.b16 %v125
  %v589 = vunpack.c.h.b16 %v125
  %v590 = vunpack.c.l.b16 %v126
  %v591 = vunpack.c.h.b16 %v126
  %v592 = vunpack.c.l.b16 %v127
  %v593 = vunpack.c.h.b16 %v127
  %v594 = vunpack.c.l.b16 %v128
  %v595 = vunpack.c.h.b16 %v128
  %v596 = vunpack.c.l.b16 %v129
  %v597 = vunpack.c.h.b16 %v129
  %v598 = vunpack.c.l.b16 %v130
  %v599 = vunpack.c.h.b16 %v130
  %v600 = vunpack.c.l.b16 %v131
  %v601 = vunpack.c.h.b16 %v131
  %v602 = vunpack.c.l.b16 %v132
  %v603 = vunpack.c.h.b16 %v132
  %v604 = vunpack.c.l.b16 %v133
  %v605 = vunpack.c.h.b16 %v133
  %v606 = vunpack.c.l.b16 %v134
  %v607 = vunpack.c.h.b16 %v134
  %v608 = vunpack.c.l.b16 %v135
  %v609 = vunpack.c.h.b16 %v135
  %v610 = vunpack.c.l.b16 %v136
  %v611 = vunpack.c.h.b16 %v136
  %v612 = vunpack.c.l.b16 %v137
  %v613 = vunpack.c.h.b16 %v137
  %v614 = vunpack.c.l.b16 %v138
  %v615 = vunpack.c.h.b16 %v138
  %v616 = vunpack.c.l.b16 %v139
  %v617 = vunpack.c.h.b16 %v139
  %v618 = vunpack.c.l.b16 %v140
  %v619 = vunpack.c.h.b16 %v140
  %v620 = vunpack.c.l.b16 %v141
  %v621 = vunpack.c.h.b16 %v141
  %v622 = vpack.c.b16 %v436, %v430
  %v623 = vpack.c.b16 %v437, %v431
  %v624 = vpack.c.b16 %v438, %v432
  %v625 = vpack.c.b16 %v439, %v433
  %v626 = vpack.c.b16 %v440, %v434
  %v627 = vpack.c.b16 %v441, %v435
  %v628 = vpack.c.b16 %v448, %v442
  %v629 = vpack.c.b16 %v449, %v443
  %v630 = vpack.c.b16 %v450, %v444
  %v631 = vpack.c.b16 %v451, %v445
  %v632 = vpack.c.b16 %v452, %v446
  %v633 = vpack.c.b16 %v453, %v447
  %v634 = vpack.c.b16 %v460, %v454
  %v635 = vpack.c.b16 %v461, %v455
  %v636 = vpack.c.b16 %v462, %v456
  %v637 = vpack.c.b16 %v463, %v457
  %v638 = vpack.c.b16 %v464, %v458
  %v639 = vpack.c.b16 %v465, %v459
  %v640 = vpack.c.b16 %v472, %v466
  %v641 = vpack.c.b16 %v473, %v467
  %v642 = vpack.c.b16 %v474, %v468
  %v643 = vpack.c.b16 %v475, %v469
  %v644 = vpack.c.b16 %v476, %v470
  %v645 = vpack.c.b16 %v477, %v471
  %v646 = vpack.c.b16 %v484, %v478
  %v647 = vpack.c.b16 %v485, %v479
  %v648 = vpack.c.b16 %v486, %v480
  %v649 = vpack.c.b16 %v487, %v481
  %v650 = vpack.c.b16 %v488, %v482
  %v651 = vpack.c.b16 %v489, %v483
  %v652 = vpack.c.b16 %v496, %v490
  %v653 = vpack.c.b16 %v497, %v491
  %v654 = vpack.c.b16 %v498, %v492
  %v655 = vpack.c.b16 %v499, %v493
  %v656 = vpack.c.b16 %v500, %v494
  %v657 = vpack.c.b16 %v501, %v495
  %v658 = vpack.c.b16 %v508, %v502
  %v659 = vpack.c.b16 %v509, %v503
  %v660 = vpack.c.b16 %v510, %v504
  %v661 = vpack.c.b16 %v511, %v505
  %v662 = vpack.c.b16 %v512, %v506
  %v663 = vpack.c.b16 %v513, %v507
  %v664 = vpack.c.b16 %v520, %v514
  %v665 = vpack.c.b16 %v521, %v515
  %v666 = vpack.c.b16 %v522, %v516
  %v667 = vpack.c.b16 %v523, %v517
  %v668 = vpack.c.b16 %v524, %v518
  %v669 = vpack.c.b16 %v525, %v519
  %v670 = vpack.c.b16 %v532, %v526
  %v671 = vpack.c.b16 %v533, %v527
  %v672 = vpack.c.b16 %v534, %v528
  %v673 = vpack.c.b16 %v535, %v529
  %v674 = vpack.c.b16 %v536, %v530
  %v675 = vpack.c.b16 %v537, %v531
  %v676 = vpack.c.b16 %v544, %v538
  %v677 = vpack.c.b16 %v545, %v539
  %v678 = vpack.c.b16 %v546, %v540
  %v679 = vpack.c.b16 %v547, %v541
  %v680 = vpack.c.b16 %v548, %v542
  %v681 = vpack.c.b16 %v549, %v543
  %v682 = vpack.c.b16 %v556, %v550
  %v683 = vpack.c.b16 %v557, %v551
  %v684 = vpack.c.b16 %v558, %v552
  %v685 = vpack.c.b16 %v559, %v553
  %v686 = vpack.c.b16 %v560, %v554
  %v687 = vpack.c.b16 %v561, %v555
  %v688 = vpack.c.b16 %v568, %v562
  %v689 = vpack.c.b16 %v569, %v563
  %v690 = vpack.c.b16 %v570, %v564
  %v691 = vpack.c.b16 %v571, %v565
  %v692 = vpack.c.b16 %v572, %v566
  %v693 = vpack.c.b16 %v573, %v567
  %v694 = vpack.c.b16 %v580, %v574
  %v695 = vpack.c.b16 %v581, %v575
  %v696 = vpack.c.b16 %v582, %v576
  %v697 = vpack.c.b16 %v583, %v577
  %v698 = vpack.c.b16 %v584, %v578
  %v699 = vpack.c.b16 %v585, %v579
  %v700 = vpack.c.b16 %v592, %v586
  %v701 = vpack.c.b16 %v593, %v587
  %v702 = vpack.c.b16 %v594, %v588
  %v703 = vpack.c.b16 %v595, %v589
  %v704 = vpack.c.b16 %v596, %v590
  %v705 = vpack.c.b16 %v597, %v591
  %v706 = vpack.c.b16 %v604, %v598
  %v707 = vpack.c.b16 %v605, %v599
  %v708 = vpack.c.b16 %v606, %v600
  %v709 = vpack.c.b16 %v607, %v601
  %v710 = vpack.c.b16 %v608, %v602
  %v711 = vpack.c.b16 %v609, %v603
  %v712 = vpack.c.b16 %v616, %v610
  %v713 = vpack.c.b16 %v617, %v611
  %v714 = vpack.c.b16 %v618, %v612
  %v715 = vpack.c.b16 %v619, %v613
  %v716 = vpack.c.b16 %v620, %v614
  %v717 = vpack.c.b16 %v621, %v615
  %814 = vmatprep.subr.bf16.mxu0 %v623
  %815 = vmatpush1.bf16.msra.mxu0 %v622
  %816 = vmatprep.subr.bf16.mxu0 %v629
  %817 = vmatpush1.bf16.msra.mxu0 %v628
  %818 = vmatprep.subr.bf16.mxu0 %v635
  %819 = vmatpush1.bf16.msra.mxu0 %v634
  %820 = vmatprep.subr.bf16.mxu0 %v641
  %821 = vmatpush1.bf16.msra.mxu0 %v640
  %822 = vmatprep.subr.bf16.mxu0 %v647
  %823 = vmatpush1.bf16.msra.mxu0 %v646
  %824 = vmatprep.subr.bf16.mxu0 %v653
  %825 = vmatpush1.bf16.msra.mxu0 %v652
  %826 = vmatprep.subr.bf16.mxu0 %v659
  %827 = vmatpush1.bf16.msra.mxu0 %v658
  %828 = vmatprep.subr.bf16.mxu0 %v665
  %829 = vmatpush1.bf16.msra.mxu0 %v664
  %830 = vmatprep.subr.bf16.mxu0 %v671
  %831 = vmatpush1.bf16.msra.mxu0 %v670
  %832 = vmatprep.subr.bf16.mxu0 %v677
  %833 = vmatpush1.bf16.msra.mxu0 %v676
  %834 = vmatprep.subr.bf16.mxu0 %v683
  %835 = vmatpush1.bf16.msra.mxu0 %v682
  %836 = vmatprep.subr.bf16.mxu0 %v689
  %837 = vmatpush1.bf16.msra.mxu0 %v688
  %838 = vmatprep.subr.bf16.mxu0 %v695
  %839 = vmatpush1.bf16.msra.mxu0 %v694
  %840 = vmatprep.subr.bf16.mxu0 %v701
  %841 = vmatpush1.bf16.msra.mxu0 %v700
  %842 = vmatprep.subr.bf16.mxu0 %v707
  %843 = vmatpush1.bf16.msra.mxu0 %v706
  %844 = vmatprep.subr.bf16.mxu0 %v713
  %845 = vmatpush1.bf16.msra.mxu0 %v712
  %846 = vmatprep.mubr.bf16.mxu0 %v271
  %847 = vmatmul.mubr.bf16.gmra.mrb[0].mxu0 %v270
  %v848 = vpop.f32.mrb[0].mxu0
  %v849 = vadd.f32 %v147, %v848
  %v850 = vpop.f32.mrb[0].mxu0
  %v851 = vadd.f32 %v151, %v850
  %v852 = vpop.f32.mrb[0].mxu0
  %v853 = vadd.f32 %v147, %v852
  %v854 = vpop.f32.mrb[0].mxu0
  %v855 = vadd.f32 %v151, %v854
  %856 = vmatprep.mubr.bf16.mxu0 %v273
  %857 = vmatmul.mubr.bf16.gmra.mrb[0].mxu0 %v272
  %v858 = vpop.f32.mrb[0].mxu0
  %v859 = vadd.f32 %v147, %v858
  %v860 = vpop.f32.mrb[0].mxu0
  %v861 = vadd.f32 %v151, %v860
  %v862 = vpop.f32.mrb[0].mxu0
  %v863 = vadd.f32 %v147, %v862
  %v864 = vpop.f32.mrb[0].mxu0
  %v865 = vadd.f32 %v151, %v864
  %866 = vmatprep.mubr.bf16.mxu0 %v275
  %867 = vmatmul.mubr.bf16.gmra.mrb[0].mxu0 %v274
  %v868 = vpop.f32.mrb[0].mxu0
  %v869 = vadd.f32 %v147, %v868
  %v870 = vpop.f32.mrb[0].mxu0
  %v871 = vadd.f32 %v151, %v870
  %v872 = vpop.f32.mrb[0].mxu0
  %v873 = vadd.f32 %v147, %v872
  %v874 = vpop.f32.mrb[0].mxu0
  %v875 = vadd.f32 %v151, %v874
  %876 = vmatprep.mubr.bf16.mxu0 %v277
  %877 = vmatmul.mubr.bf16.gmra.mrb[0].mxu0 %v276
  %v878 = vpop.f32.mrb[0].mxu0
  %v879 = vadd.f32 %v147, %v878
  %v880 = vpop.f32.mrb[0].mxu0
  %v881 = vadd.f32 %v151, %v880
  %v882 = vpop.f32.mrb[0].mxu0
  %v883 = vadd.f32 %v147, %v882
  %v884 = vpop.f32.mrb[0].mxu0
  %v885 = vadd.f32 %v151, %v884
  %886 = vmatprep.mubr.bf16.mxu0 %v279
  %887 = vmatmul.mubr.bf16.gmra.mrb[0].mxu0 %v278
  %v888 = vpop.f32.mrb[0].mxu0
  %v889 = vadd.f32 %v147, %v888
  %v890 = vpop.f32.mrb[0].mxu0
  %v891 = vadd.f32 %v151, %v890
  %v892 = vpop.f32.mrb[0].mxu0
  %v893 = vadd.f32 %v147, %v892
  %v894 = vpop.f32.mrb[0].mxu0
  %v895 = vadd.f32 %v151, %v894
  %896 = vmatprep.mubr.bf16.mxu0 %v281
  %897 = vmatmul.mubr.bf16.gmra.mrb[0].mxu0 %v280
  %v898 = vpop.f32.mrb[0].mxu0
  %v899 = vadd.f32 %v147, %v898
  %v900 = vpop.f32.mrb[0].mxu0
  %v901 = vadd.f32 %v151, %v900
  %v902 = vpop.f32.mrb[0].mxu0
  %v903 = vadd.f32 %v147, %v902
  %v904 = vpop.f32.mrb[0].mxu0
  %v905 = vadd.f32 %v151, %v904
  %906 = vmatprep.mubr.bf16.mxu0 %v283
  %907 = vmatmul.mubr.bf16.gmra.mrb[0].mxu0 %v282
  %v908 = vpop.f32.mrb[0].mxu0
  %v909 = vadd.f32 %v147, %v908
  %v910 = vpop.f32.mrb[0].mxu0
  %v911 = vadd.f32 %v151, %v910
  %v912 = vpop.f32.mrb[0].mxu0
  %v913 = vadd.f32 %v147, %v912
  %v914 = vpop.f32.mrb[0].mxu0
  %v915 = vadd.f32 %v151, %v914
  %916 = vmatprep.mubr.bf16.mxu0 %v285
  %917 = vmatmul.mubr.bf16.gmra.mrb[0].mxu0 %v284
  %v918 = vpop.f32.mrb[0].mxu0
  %v919 = vadd.f32 %v147, %v918
  %v920 = vpop.f32.mrb[0].mxu0
  %v921 = vadd.f32 %v151, %v920
  %v922 = vpop.f32.mrb[0].mxu0
  %v923 = vadd.f32 %v147, %v922
  %v924 = vpop.f32.mrb[0].mxu0
  %v925 = vadd.f32 %v151, %v924
  %926 = vmatprep.mubr.bf16.mxu0 %v287
  %927 = vmatmul.mubr.bf16.gmra.mrb[0].mxu0 %v286
  %v928 = vpop.f32.mrb[0].mxu0
  %v929 = vadd.f32 %v147, %v928
  %v930 = vpop.f32.mrb[0].mxu0
  %v931 = vadd.f32 %v151, %v930
  %v932 = vpop.f32.mrb[0].mxu0
  %v933 = vadd.f32 %v147, %v932
  %v934 = vpop.f32.mrb[0].mxu0
  %v935 = vadd.f32 %v151, %v934
  %936 = vmatprep.mubr.bf16.mxu0 %v289
  %937 = vmatmul.mubr.bf16.gmra.mrb[0].mxu0 %v288
  %v938 = vpop.f32.mrb[0].mxu0
  %v939 = vadd.f32 %v147, %v938
  %v940 = vpop.f32.mrb[0].mxu0
  %v941 = vadd.f32 %v151, %v940
  %v942 = vpop.f32.mrb[0].mxu0
  %v943 = vadd.f32 %v147, %v942
  %v944 = vpop.f32.mrb[0].mxu0
  %v945 = vadd.f32 %v151, %v944
  %946 = vmatprep.mubr.bf16.mxu0 %v291
  %947 = vmatmul.mubr.bf16.gmra.mrb[0].mxu0 %v290
  %v948 = vpop.f32.mrb[0].mxu0
  %v949 = vadd.f32 %v147, %v948
  %v950 = vpop.f32.mrb[0].mxu0
  %v951 = vadd.f32 %v151, %v950
  %v952 = vpop.f32.mrb[0].mxu0
  %v953 = vadd.f32 %v147, %v952
  %v954 = vpop.f32.mrb[0].mxu0
  %v955 = vadd.f32 %v151, %v954
  %956 = vmatprep.mubr.bf16.mxu0 %v293
  %957 = vmatmul.mubr.bf16.gmra.mrb[0].mxu0 %v292
  %v958 = vpop.f32.mrb[0].mxu0
  %v959 = vadd.f32 %v147, %v958
  %v960 = vpop.f32.mrb[0].mxu0
  %v961 = vadd.f32 %v151, %v960
  %v962 = vpop.f32.mrb[0].mxu0
  %v963 = vadd.f32 %v147, %v962
  %v964 = vpop.f32.mrb[0].mxu0
  %v965 = vadd.f32 %v151, %v964
  %966 = vmatprep.mubr.bf16.mxu0 %v295
  %967 = vmatmul.mubr.bf16.gmra.mrb[0].mxu0 %v294
  %v968 = vpop.f32.mrb[0].mxu0
  %v969 = vadd.f32 %v147, %v968
  %v970 = vpop.f32.mrb[0].mxu0
  %v971 = vadd.f32 %v151, %v970
  %v972 = vpop.f32.mrb[0].mxu0
  %v973 = vadd.f32 %v147, %v972
  %v974 = vpop.f32.mrb[0].mxu0
  %v975 = vadd.f32 %v151, %v974
  %976 = vmatprep.mubr.bf16.mxu0 %v297
  %977 = vmatmul.mubr.bf16.gmra.mrb[0].mxu0 %v296
  %v978 = vpop.f32.mrb[0].mxu0
  %v979 = vadd.f32 %v147, %v978
  %v980 = vpop.f32.mrb[0].mxu0
  %v981 = vadd.f32 %v151, %v980
  %v982 = vpop.f32.mrb[0].mxu0
  %v983 = vadd.f32 %v147, %v982
  %v984 = vpop.f32.mrb[0].mxu0
  %v985 = vadd.f32 %v151, %v984
  %986 = vmatprep.mubr.bf16.mxu0 %v299
  %987 = vmatmul.mubr.bf16.gmra.mrb[0].mxu0 %v298
  %v988 = vpop.f32.mrb[0].mxu0
  %v989 = vadd.f32 %v147, %v988
  %v990 = vpop.f32.mrb[0].mxu0
  %v991 = vadd.f32 %v151, %v990
  %v992 = vpop.f32.mrb[0].mxu0
  %v993 = vadd.f32 %v147, %v992
  %v994 = vpop.f32.mrb[0].mxu0
  %v995 = vadd.f32 %v151, %v994
  %996 = vmatprep.mubr.bf16.mxu0 %v301
  %997 = vmatmul.mubr.bf16.gmra.mrb[0].mxu0 %v300
  %v998 = vpop.f32.mrb[0].mxu0
  %v999 = vadd.f32 %v147, %v998
  %v1000 = vpop.f32.mrb[0].mxu0
  %v1001 = vadd.f32 %v151, %v1000
  %v1002 = vpop.f32.mrb[0].mxu0
  %v1003 = vadd.f32 %v147, %v1002
  %v1004 = vpop.f32.mrb[0].mxu0
  %v1005 = vadd.f32 %v151, %v1004
  %1006 = vdwg.mxu0
  %1007 = vmatprep.subr.bf16.mxu0 %v625
  %1008 = vmatpush1.bf16.msra.mxu0 %v624
  %1009 = vmatprep.subr.bf16.mxu0 %v631
  %1010 = vmatpush1.bf16.msra.mxu0 %v630
  %1011 = vmatprep.subr.bf16.mxu0 %v637
  %1012 = vmatpush1.bf16.msra.mxu0 %v636
  %1013 = vmatprep.subr.bf16.mxu0 %v643
  %1014 = vmatpush1.bf16.msra.mxu0 %v642
  %1015 = vmatprep.subr.bf16.mxu0 %v649
  %1016 = vmatpush1.bf16.msra.mxu0 %v648
  %1017 = vmatprep.subr.bf16.mxu0 %v655
  %1018 = vmatpush1.bf16.msra.mxu0 %v654
  %1019 = vmatprep.subr.bf16.mxu0 %v661
  %1020 = vmatpush1.bf16.msra.mxu0 %v660
  %1021 = vmatprep.subr.bf16.mxu0 %v667
  %1022 = vmatpush1.bf16.msra.mxu0 %v666
  %1023 = vmatprep.subr.bf16.mxu0 %v673
  %1024 = vmatpush1.bf16.msra.mxu0 %v672
  %1025 = vmatprep.subr.bf16.mxu0 %v679
  %1026 = vmatpush1.bf16.msra.mxu0 %v678
  %1027 = vmatprep.subr.bf16.mxu0 %v685
  %1028 = vmatpush1.bf16.msra.mxu0 %v684
  %1029 = vmatprep.subr.bf16.mxu0 %v691
  %1030 = vmatpush1.bf16.msra.mxu0 %v690
  %1031 = vmatprep.subr.bf16.mxu0 %v697
  %1032 = vmatpush1.bf16.msra.mxu0 %v696
  %1033 = vmatprep.subr.bf16.mxu0 %v703
  %1034 = vmatpush1.bf16.msra.mxu0 %v702
  %1035 = vmatprep.subr.bf16.mxu0 %v709
  %1036 = vmatpush1.bf16.msra.mxu0 %v708
  %1037 = vmatprep.subr.bf16.mxu0 %v715
  %1038 = vmatpush1.bf16.msra.mxu0 %v714
  %1039 = vmatprep.mubr.bf16.mxu0 %v271
  %1040 = vmatmul.mubr.bf16.gmra.mrb[0].mxu0 %v270
  %v1041 = vpop.f32.mrb[0].mxu0
  %v1042 = vadd.f32 %v155, %v1041
  %v1043 = vpop.f32.mrb[0].mxu0
  %v1044 = vadd.f32 %v159, %v1043
  %v1045 = vpop.f32.mrb[0].mxu0
  %v1046 = vadd.f32 %v155, %v1045
  %v1047 = vpop.f32.mrb[0].mxu0
  %v1048 = vadd.f32 %v159, %v1047
  %1049 = vmatprep.mubr.bf16.mxu0 %v273
  %1050 = vmatmul.mubr.bf16.gmra.mrb[0].mxu0 %v272
  %v1051 = vpop.f32.mrb[0].mxu0
  %v1052 = vadd.f32 %v155, %v1051
  %v1053 = vpop.f32.mrb[0].mxu0
  %v1054 = vadd.f32 %v159, %v1053
  %v1055 = vpop.f32.mrb[0].mxu0
  %v1056 = vadd.f32 %v155, %v1055
  %v1057 = vpop.f32.mrb[0].mxu0
  %v1058 = vadd.f32 %v159, %v1057
  %1059 = vmatprep.mubr.bf16.mxu0 %v275
  %1060 = vmatmul.mubr.bf16.gmra.mrb[0].mxu0 %v274
  %v1061 = vpop.f32.mrb[0].mxu0
  %v1062 = vadd.f32 %v155, %v1061
  %v1063 = vpop.f32.mrb[0].mxu0
  %v1064 = vadd.f32 %v159, %v1063
  %v1065 = vpop.f32.mrb[0].mxu0
  %v1066 = vadd.f32 %v155, %v1065
  %v1067 = vpop.f32.mrb[0].mxu0
  %v1068 = vadd.f32 %v159, %v1067
  %1069 = vmatprep.mubr.bf16.mxu0 %v277
  %1070 = vmatmul.mubr.bf16.gmra.mrb[0].mxu0 %v276
  %v1071 = vpop.f32.mrb[0].mxu0
  %v1072 = vadd.f32 %v155, %v1071
  %v1073 = vpop.f32.mrb[0].mxu0
  %v1074 = vadd.f32 %v159, %v1073
  %v1075 = vpop.f32.mrb[0].mxu0
  %v1076 = vadd.f32 %v155, %v1075
  %v1077 = vpop.f32.mrb[0].mxu0
  %v1078 = vadd.f32 %v159, %v1077
  %1079 = vmatprep.mubr.bf16.mxu0 %v279
  %1080 = vmatmul.mubr.bf16.gmra.mrb[0].mxu0 %v278
  %v1081 = vpop.f32.mrb[0].mxu0
  %v1082 = vadd.f32 %v155, %v1081
  %v1083 = vpop.f32.mrb[0].mxu0
  %v1084 = vadd.f32 %v159, %v1083
  %v1085 = vpop.f32.mrb[0].mxu0
  %v1086 = vadd.f32 %v155, %v1085
  %v1087 = vpop.f32.mrb[0].mxu0
  %v1088 = vadd.f32 %v159, %v1087
  %1089 = vmatprep.mubr.bf16.mxu0 %v281
  %1090 = vmatmul.mubr.bf16.gmra.mrb[0].mxu0 %v280
  %v1091 = vpop.f32.mrb[0].mxu0
  %v1092 = vadd.f32 %v155, %v1091
  %v1093 = vpop.f32.mrb[0].mxu0
  %v1094 = vadd.f32 %v159, %v1093
  %v1095 = vpop.f32.mrb[0].mxu0
  %v1096 = vadd.f32 %v155, %v1095
  %v1097 = vpop.f32.mrb[0].mxu0
  %v1098 = vadd.f32 %v159, %v1097
  %1099 = vmatprep.mubr.bf16.mxu0 %v283
  %1100 = vmatmul.mubr.bf16.gmra.mrb[0].mxu0 %v282
  %v1101 = vpop.f32.mrb[0].mxu0
  %v1102 = vadd.f32 %v155, %v1101
  %v1103 = vpop.f32.mrb[0].mxu0
  %v1104 = vadd.f32 %v159, %v1103
  %v1105 = vpop.f32.mrb[0].mxu0
  %v1106 = vadd.f32 %v155, %v1105
  %v1107 = vpop.f32.mrb[0].mxu0
  %v1108 = vadd.f32 %v159, %v1107
  %1109 = vmatprep.mubr.bf16.mxu0 %v285
  %1110 = vmatmul.mubr.bf16.gmra.mrb[0].mxu0 %v284
  %v1111 = vpop.f32.mrb[0].mxu0
  %v1112 = vadd.f32 %v155, %v1111
  %v1113 = vpop.f32.mrb[0].mxu0
  %v1114 = vadd.f32 %v159, %v1113
  %v1115 = vpop.f32.mrb[0].mxu0
  %v1116 = vadd.f32 %v155, %v1115
  %v1117 = vpop.f32.mrb[0].mxu0
  %v1118 = vadd.f32 %v159, %v1117
  %1119 = vmatprep.mubr.bf16.mxu0 %v287
  %1120 = vmatmul.mubr.bf16.gmra.mrb[0].mxu0 %v286
  %v1121 = vpop.f32.mrb[0].mxu0
  %v1122 = vadd.f32 %v155, %v1121
  %v1123 = vpop.f32.mrb[0].mxu0
  %v1124 = vadd.f32 %v159, %v1123
  %v1125 = vpop.f32.mrb[0].mxu0
  %v1126 = vadd.f32 %v155, %v1125
  %v1127 = vpop.f32.mrb[0].mxu0
  %v1128 = vadd.f32 %v159, %v1127
  %1129 = vmatprep.mubr.bf16.mxu0 %v289
  %1130 = vmatmul.mubr.bf16.gmra.mrb[0].mxu0 %v288
  %v1131 = vpop.f32.mrb[0].mxu0
  %v1132 = vadd.f32 %v155, %v1131
  %v1133 = vpop.f32.mrb[0].mxu0
  %v1134 = vadd.f32 %v159, %v1133
  %v1135 = vpop.f32.mrb[0].mxu0
  %v1136 = vadd.f32 %v155, %v1135
  %v1137 = vpop.f32.mrb[0].mxu0
  %v1138 = vadd.f32 %v159, %v1137
  %1139 = vmatprep.mubr.bf16.mxu0 %v291
  %1140 = vmatmul.mubr.bf16.gmra.mrb[0].mxu0 %v290
  %v1141 = vpop.f32.mrb[0].mxu0
  %v1142 = vadd.f32 %v155, %v1141
  %v1143 = vpop.f32.mrb[0].mxu0
  %v1144 = vadd.f32 %v159, %v1143
  %v1145 = vpop.f32.mrb[0].mxu0
  %v1146 = vadd.f32 %v155, %v1145
  %v1147 = vpop.f32.mrb[0].mxu0
  %v1148 = vadd.f32 %v159, %v1147
  %1149 = vmatprep.mubr.bf16.mxu0 %v293
  %1150 = vmatmul.mubr.bf16.gmra.mrb[0].mxu0 %v292
  %v1151 = vpop.f32.mrb[0].mxu0
  %v1152 = vadd.f32 %v155, %v1151
  %v1153 = vpop.f32.mrb[0].mxu0
  %v1154 = vadd.f32 %v159, %v1153
  %v1155 = vpop.f32.mrb[0].mxu0
  %v1156 = vadd.f32 %v155, %v1155
  %v1157 = vpop.f32.mrb[0].mxu0
  %v1158 = vadd.f32 %v159, %v1157
  %1159 = vmatprep.mubr.bf16.mxu0 %v295
  %1160 = vmatmul.mubr.bf16.gmra.mrb[0].mxu0 %v294
  %v1161 = vpop.f32.mrb[0].mxu0
  %v1162 = vadd.f32 %v155, %v1161
  %v1163 = vpop.f32.mrb[0].mxu0
  %v1164 = vadd.f32 %v159, %v1163
  %v1165 = vpop.f32.mrb[0].mxu0
  %v1166 = vadd.f32 %v155, %v1165
  %v1167 = vpop.f32.mrb[0].mxu0
  %v1168 = vadd.f32 %v159, %v1167
  %1169 = vmatprep.mubr.bf16.mxu0 %v297
  %1170 = vmatmul.mubr.bf16.gmra.mrb[0].mxu0 %v296
  %v1171 = vpop.f32.mrb[0].mxu0
  %v1172 = vadd.f32 %v155, %v1171
  %v1173 = vpop.f32.mrb[0].mxu0
  %v1174 = vadd.f32 %v159, %v1173
  %v1175 = vpop.f32.mrb[0].mxu0
  %v1176 = vadd.f32 %v155, %v1175
  %v1177 = vpop.f32.mrb[0].mxu0
  %v1178 = vadd.f32 %v159, %v1177
  %1179 = vmatprep.mubr.bf16.mxu0 %v299
  %1180 = vmatmul.mubr.bf16.gmra.mrb[0].mxu0 %v298
  %v1181 = vpop.f32.mrb[0].mxu0
  %v1182 = vadd.f32 %v155, %v1181
  %v1183 = vpop.f32.mrb[0].mxu0
  %v1184 = vadd.f32 %v159, %v1183
  %v1185 = vpop.f32.mrb[0].mxu0
  %v1186 = vadd.f32 %v155, %v1185
  %v1187 = vpop.f32.mrb[0].mxu0
  %v1188 = vadd.f32 %v159, %v1187
  %1189 = vmatprep.mubr.bf16.mxu0 %v301
  %1190 = vmatmul.mubr.bf16.gmra.mrb[0].mxu0 %v300
  %v1191 = vpop.f32.mrb[0].mxu0
  %v1192 = vadd.f32 %v155, %v1191
  %v1193 = vpop.f32.mrb[0].mxu0
  %v1194 = vadd.f32 %v159, %v1193
  %v1195 = vpop.f32.mrb[0].mxu0
  %v1196 = vadd.f32 %v155, %v1195
  %v1197 = vpop.f32.mrb[0].mxu0
  %v1198 = vadd.f32 %v159, %v1197
  %1199 = vdwg.mxu0
  %1200 = vmatprep.subr.bf16.mxu0 %v627
  %1201 = vmatpush1.bf16.msra.mxu0 %v626
  %1202 = vmatprep.subr.bf16.mxu0 %v633
  %1203 = vmatpush1.bf16.msra.mxu0 %v632
  %1204 = vmatprep.subr.bf16.mxu0 %v639
  %1205 = vmatpush1.bf16.msra.mxu0 %v638
  %1206 = vmatprep.subr.bf16.mxu0 %v645
  %1207 = vmatpush1.bf16.msra.mxu0 %v644
  %1208 = vmatprep.subr.bf16.mxu0 %v651
  %1209 = vmatpush1.bf16.msra.mxu0 %v650
  %1210 = vmatprep.subr.bf16.mxu0 %v657
  %1211 = vmatpush1.bf16.msra.mxu0 %v656
  %1212 = vmatprep.subr.bf16.mxu0 %v663
  %1213 = vmatpush1.bf16.msra.mxu0 %v662
  %1214 = vmatprep.subr.bf16.mxu0 %v669
  %1215 = vmatpush1.bf16.msra.mxu0 %v668
  %1216 = vmatprep.subr.bf16.mxu0 %v675
  %1217 = vmatpush1.bf16.msra.mxu0 %v674
  %1218 = vmatprep.subr.bf16.mxu0 %v681
  %1219 = vmatpush1.bf16.msra.mxu0 %v680
  %1220 = vmatprep.subr.bf16.mxu0 %v687
  %1221 = vmatpush1.bf16.msra.mxu0 %v686
  %1222 = vmatprep.subr.bf16.mxu0 %v693
  %1223 = vmatpush1.bf16.msra.mxu0 %v692
  %1224 = vmatprep.subr.bf16.mxu0 %v699
  %1225 = vmatpush1.bf16.msra.mxu0 %v698
  %1226 = vmatprep.subr.bf16.mxu0 %v705
  %1227 = vmatpush1.bf16.msra.mxu0 %v704
  %1228 = vmatprep.subr.bf16.mxu0 %v711
  %1229 = vmatpush1.bf16.msra.mxu0 %v710
  %1230 = vmatprep.subr.bf16.mxu0 %v717
  %1231 = vmatpush1.bf16.msra.mxu0 %v716
  %1232 = vmatprep.mubr.bf16.mxu0 %v271
  %1233 = vmatmul.mubr.bf16.gmra.mrb[0].mxu0 %v270
  %v1234 = vpop.f32.mrb[0].mxu0
  %v1235 = vadd.f32 %v163, %v1234
  %v1236 = vpop.f32.mrb[0].mxu0
  %v1237 = vadd.f32 %v167, %v1236
  %v1238 = vpop.f32.mrb[0].mxu0
  %v1239 = vadd.f32 %v163, %v1238
  %v1240 = vpop.f32.mrb[0].mxu0
  %v1241 = vadd.f32 %v167, %v1240
  %1242 = vmatprep.mubr.bf16.mxu0 %v273
  %1243 = vmatmul.mubr.bf16.gmra.mrb[0].mxu0 %v272
  %v1244 = vpop.f32.mrb[0].mxu0
  %v1245 = vadd.f32 %v163, %v1244
  %v1246 = vpop.f32.mrb[0].mxu0
  %v1247 = vadd.f32 %v167, %v1246
  %v1248 = vpop.f32.mrb[0].mxu0
  %v1249 = vadd.f32 %v163, %v1248
  %v1250 = vpop.f32.mrb[0].mxu0
  %v1251 = vadd.f32 %v167, %v1250
  %1252 = vmatprep.mubr.bf16.mxu0 %v275
  %1253 = vmatmul.mubr.bf16.gmra.mrb[0].mxu0 %v274
  %v1254 = vpop.f32.mrb[0].mxu0
  %v1255 = vadd.f32 %v163, %v1254
  %v1256 = vpop.f32.mrb[0].mxu0
  %v1257 = vadd.f32 %v167, %v1256
  %v1258 = vpop.f32.mrb[0].mxu0
  %v1259 = vadd.f32 %v163, %v1258
  %v1260 = vpop.f32.mrb[0].mxu0
  %v1261 = vadd.f32 %v167, %v1260
  %1262 = vmatprep.mubr.bf16.mxu0 %v277
  %1263 = vmatmul.mubr.bf16.gmra.mrb[0].mxu0 %v276
  %v1264 = vpop.f32.mrb[0].mxu0
  %v1265 = vadd.f32 %v163, %v1264
  %v1266 = vpop.f32.mrb[0].mxu0
  %v1267 = vadd.f32 %v167, %v1266
  %v1268 = vpop.f32.mrb[0].mxu0
  %v1269 = vadd.f32 %v163, %v1268
  %v1270 = vpop.f32.mrb[0].mxu0
  %v1271 = vadd.f32 %v167, %v1270
  %1272 = vmatprep.mubr.bf16.mxu0 %v279
  %1273 = vmatmul.mubr.bf16.gmra.mrb[0].mxu0 %v278
  %v1274 = vpop.f32.mrb[0].mxu0
  %v1275 = vadd.f32 %v163, %v1274
  %v1276 = vpop.f32.mrb[0].mxu0
  %v1277 = vadd.f32 %v167, %v1276
  %v1278 = vpop.f32.mrb[0].mxu0
  %v1279 = vadd.f32 %v163, %v1278
  %v1280 = vpop.f32.mrb[0].mxu0
  %v1281 = vadd.f32 %v167, %v1280
  %1282 = vmatprep.mubr.bf16.mxu0 %v281
  %1283 = vmatmul.mubr.bf16.gmra.mrb[0].mxu0 %v280
  %v1284 = vpop.f32.mrb[0].mxu0
  %v1285 = vadd.f32 %v163, %v1284
  %v1286 = vpop.f32.mrb[0].mxu0
  %v1287 = vadd.f32 %v167, %v1286
  %v1288 = vpop.f32.mrb[0].mxu0
  %v1289 = vadd.f32 %v163, %v1288
  %v1290 = vpop.f32.mrb[0].mxu0
  %v1291 = vadd.f32 %v167, %v1290
  %1292 = vmatprep.mubr.bf16.mxu0 %v283
  %1293 = vmatmul.mubr.bf16.gmra.mrb[0].mxu0 %v282
  %v1294 = vpop.f32.mrb[0].mxu0
  %v1295 = vadd.f32 %v163, %v1294
  %v1296 = vpop.f32.mrb[0].mxu0
  %v1297 = vadd.f32 %v167, %v1296
  %v1298 = vpop.f32.mrb[0].mxu0
  %v1299 = vadd.f32 %v163, %v1298
  %v1300 = vpop.f32.mrb[0].mxu0
  %v1301 = vadd.f32 %v167, %v1300
  %1302 = vmatprep.mubr.bf16.mxu0 %v285
  %1303 = vmatmul.mubr.bf16.gmra.mrb[0].mxu0 %v284
  %v1304 = vpop.f32.mrb[0].mxu0
  %v1305 = vadd.f32 %v163, %v1304
  %v1306 = vpop.f32.mrb[0].mxu0
  %v1307 = vadd.f32 %v167, %v1306
  %v1308 = vpop.f32.mrb[0].mxu0
  %v1309 = vadd.f32 %v163, %v1308
  %v1310 = vpop.f32.mrb[0].mxu0
  %v1311 = vadd.f32 %v167, %v1310
  %1312 = vmatprep.mubr.bf16.mxu0 %v287
  %1313 = vmatmul.mubr.bf16.gmra.mrb[0].mxu0 %v286
  %v1314 = vpop.f32.mrb[0].mxu0
  %v1315 = vadd.f32 %v163, %v1314
  %v1316 = vpop.f32.mrb[0].mxu0
  %v1317 = vadd.f32 %v167, %v1316
  %v1318 = vpop.f32.mrb[0].mxu0
  %v1319 = vadd.f32 %v163, %v1318
  %v1320 = vpop.f32.mrb[0].mxu0
  %v1321 = vadd.f32 %v167, %v1320
  %1322 = vmatprep.mubr.bf16.mxu0 %v289
  %1323 = vmatmul.mubr.bf16.gmra.mrb[0].mxu0 %v288
  %v1324 = vpop.f32.mrb[0].mxu0
  %v1325 = vadd.f32 %v163, %v1324
  %v1326 = vpop.f32.mrb[0].mxu0
  %v1327 = vadd.f32 %v167, %v1326
  %v1328 = vpop.f32.mrb[0].mxu0
  %v1329 = vadd.f32 %v163, %v1328
  %v1330 = vpop.f32.mrb[0].mxu0
  %v1331 = vadd.f32 %v167, %v1330
  %1332 = vmatprep.mubr.bf16.mxu0 %v291
  %1333 = vmatmul.mubr.bf16.gmra.mrb[0].mxu0 %v290
  %v1334 = vpop.f32.mrb[0].mxu0
  %v1335 = vadd.f32 %v163, %v1334
  %v1336 = vpop.f32.mrb[0].mxu0
  %v1337 = vadd.f32 %v167, %v1336
  %v1338 = vpop.f32.mrb[0].mxu0
  %v1339 = vadd.f32 %v163, %v1338
  %v1340 = vpop.f32.mrb[0].mxu0
  %v1341 = vadd.f32 %v167, %v1340
  %1342 = vmatprep.mubr.bf16.mxu0 %v293
  %1343 = vmatmul.mubr.bf16.gmra.mrb[0].mxu0 %v292
  %v1344 = vpop.f32.mrb[0].mxu0
  %v1345 = vadd.f32 %v163, %v1344
  %v1346 = vpop.f32.mrb[0].mxu0
  %v1347 = vadd.f32 %v167, %v1346
  %v1348 = vpop.f32.mrb[0].mxu0
  %v1349 = vadd.f32 %v163, %v1348
  %v1350 = vpop.f32.mrb[0].mxu0
  %v1351 = vadd.f32 %v167, %v1350
  %1352 = vmatprep.mubr.bf16.mxu0 %v295
  %1353 = vmatmul.mubr.bf16.gmra.mrb[0].mxu0 %v294
  %v1354 = vpop.f32.mrb[0].mxu0
  %v1355 = vadd.f32 %v163, %v1354
  %v1356 = vpop.f32.mrb[0].mxu0
  %v1357 = vadd.f32 %v167, %v1356
  %v1358 = vpop.f32.mrb[0].mxu0
  %v1359 = vadd.f32 %v163, %v1358
  %v1360 = vpop.f32.mrb[0].mxu0
  %v1361 = vadd.f32 %v167, %v1360
  %1362 = vmatprep.mubr.bf16.mxu0 %v297
  %1363 = vmatmul.mubr.bf16.gmra.mrb[0].mxu0 %v296
  %v1364 = vpop.f32.mrb[0].mxu0
  %v1365 = vadd.f32 %v163, %v1364
  %v1366 = vpop.f32.mrb[0].mxu0
  %v1367 = vadd.f32 %v167, %v1366
  %v1368 = vpop.f32.mrb[0].mxu0
  %v1369 = vadd.f32 %v163, %v1368
  %v1370 = vpop.f32.mrb[0].mxu0
  %v1371 = vadd.f32 %v167, %v1370
  %1372 = vmatprep.mubr.bf16.mxu0 %v299
  %1373 = vmatmul.mubr.bf16.gmra.mrb[0].mxu0 %v298
  %v1374 = vpop.f32.mrb[0].mxu0
  %v1375 = vadd.f32 %v163, %v1374
  %v1376 = vpop.f32.mrb[0].mxu0
  %v1377 = vadd.f32 %v167, %v1376
  %v1378 = vpop.f32.mrb[0].mxu0
  %v1379 = vadd.f32 %v163, %v1378
  %v1380 = vpop.f32.mrb[0].mxu0
  %v1381 = vadd.f32 %v167, %v1380
  %1382 = vmatprep.mubr.bf16.mxu0 %v301
  %1383 = vmatmul.mubr.bf16.gmra.mrb[0].mxu0 %v300
  %v1384 = vpop.f32.mrb[0].mxu0
  %v1385 = vadd.f32 %v163, %v1384
  %v1386 = vpop.f32.mrb[0].mxu0
  %v1387 = vadd.f32 %v167, %v1386
  %v1388 = vpop.f32.mrb[0].mxu0
  %v1389 = vadd.f32 %v163, %v1388
  %v1390 = vpop.f32.mrb[0].mxu0
  %v1391 = vadd.f32 %v167, %v1390
  %1392 = vdwg.mxu0
  %v1393 = vpack.c.bf16 %v853, %v849
  %v1394 = vpack.c.bf16 %v855, %v851
  %v1395 = vpack.c.bf16 %v1046, %v1042
  %v1396 = vpack.c.bf16 %v1048, %v1044
  %v1397 = vpack.c.bf16 %v1239, %v1235
  %v1398 = vpack.c.bf16 %v1241, %v1237
  %v1399 = vpack.c.bf16 %v863, %v859
  %v1400 = vpack.c.bf16 %v865, %v861
  %v1401 = vpack.c.bf16 %v1056, %v1052
  %v1402 = vpack.c.bf16 %v1058, %v1054
  %v1403 = vpack.c.bf16 %v1249, %v1245
  %v1404 = vpack.c.bf16 %v1251, %v1247
  %v1405 = vpack.c.bf16 %v873, %v869
  %v1406 = vpack.c.bf16 %v875, %v871
  %v1407 = vpack.c.bf16 %v1066, %v1062
  %v1408 = vpack.c.bf16 %v1068, %v1064
  %v1409 = vpack.c.bf16 %v1259, %v1255
  %v1410 = vpack.c.bf16 %v1261, %v1257
  %v1411 = vpack.c.bf16 %v883, %v879
  %v1412 = vpack.c.bf16 %v885, %v881
  %v1413 = vpack.c.bf16 %v1076, %v1072
  %v1414 = vpack.c.bf16 %v1078, %v1074
  %v1415 = vpack.c.bf16 %v1269, %v1265
  %v1416 = vpack.c.bf16 %v1271, %v1267
  %v1417 = vpack.c.bf16 %v893, %v889
  %v1418 = vpack.c.bf16 %v895, %v891
  %v1419 = vpack.c.bf16 %v1086, %v1082
  %v1420 = vpack.c.bf16 %v1088, %v1084
  %v1421 = vpack.c.bf16 %v1279, %v1275
  %v1422 = vpack.c.bf16 %v1281, %v1277
  %v1423 = vpack.c.bf16 %v903, %v899
  %v1424 = vpack.c.bf16 %v905, %v901
  %v1425 = vpack.c.bf16 %v1096, %v1092
  %v1426 = vpack.c.bf16 %v1098, %v1094
  %v1427 = vpack.c.bf16 %v1289, %v1285
  %v1428 = vpack.c.bf16 %v1291, %v1287
  %v1429 = vpack.c.bf16 %v913, %v909
  %v1430 = vpack.c.bf16 %v915, %v911
  %v1431 = vpack.c.bf16 %v1106, %v1102
  %v1432 = vpack.c.bf16 %v1108, %v1104
  %v1433 = vpack.c.bf16 %v1299, %v1295
  %v1434 = vpack.c.bf16 %v1301, %v1297
  %v1435 = vpack.c.bf16 %v923, %v919
  %v1436 = vpack.c.bf16 %v925, %v921
  %v1437 = vpack.c.bf16 %v1116, %v1112
  %v1438 = vpack.c.bf16 %v1118, %v1114
  %v1439 = vpack.c.bf16 %v1309, %v1305
  %v1440 = vpack.c.bf16 %v1311, %v1307
  %v1441 = vpack.c.bf16 %v933, %v929
  %v1442 = vpack.c.bf16 %v935, %v931
  %v1443 = vpack.c.bf16 %v1126, %v1122
  %v1444 = vpack.c.bf16 %v1128, %v1124
  %v1445 = vpack.c.bf16 %v1319, %v1315
  %v1446 = vpack.c.bf16 %v1321, %v1317
  %v1447 = vpack.c.bf16 %v943, %v939
  %v1448 = vpack.c.bf16 %v945, %v941
  %v1449 = vpack.c.bf16 %v1136, %v1132
  %v1450 = vpack.c.bf16 %v1138, %v1134
  %v1451 = vpack.c.bf16 %v1329, %v1325
  %v1452 = vpack.c.bf16 %v1331, %v1327
  %v1453 = vpack.c.bf16 %v953, %v949
  %v1454 = vpack.c.bf16 %v955, %v951
  %v1455 = vpack.c.bf16 %v1146, %v1142
  %v1456 = vpack.c.bf16 %v1148, %v1144
  %v1457 = vpack.c.bf16 %v1339, %v1335
  %v1458 = vpack.c.bf16 %v1341, %v1337
  %v1459 = vpack.c.bf16 %v963, %v959
  %v1460 = vpack.c.bf16 %v965, %v961
  %v1461 = vpack.c.bf16 %v1156, %v1152
  %v1462 = vpack.c.bf16 %v1158, %v1154
  %v1463 = vpack.c.bf16 %v1349, %v1345
  %v1464 = vpack.c.bf16 %v1351, %v1347
  %v1465 = vpack.c.bf16 %v973, %v969
  %v1466 = vpack.c.bf16 %v975, %v971
  %v1467 = vpack.c.bf16 %v1166, %v1162
  %v1468 = vpack.c.bf16 %v1168, %v1164
  %v1469 = vpack.c.bf16 %v1359, %v1355
  %v1470 = vpack.c.bf16 %v1361, %v1357
  %v1471 = vpack.c.bf16 %v983, %v979
  %v1472 = vpack.c.bf16 %v985, %v981
  %v1473 = vpack.c.bf16 %v1176, %v1172
  %v1474 = vpack.c.bf16 %v1178, %v1174
  %v1475 = vpack.c.bf16 %v1369, %v1365
  %v1476 = vpack.c.bf16 %v1371, %v1367
  %v1477 = vpack.c.bf16 %v993, %v989
  %v1478 = vpack.c.bf16 %v995, %v991
  %v1479 = vpack.c.bf16 %v1186, %v1182
  %v1480 = vpack.c.bf16 %v1188, %v1184
  %v1481 = vpack.c.bf16 %v1379, %v1375
  %v1482 = vpack.c.bf16 %v1381, %v1377
  %v1483 = vpack.c.bf16 %v1003, %v999
  %v1484 = vpack.c.bf16 %v1005, %v1001
  %v1485 = vpack.c.bf16 %v1196, %v1192
  %v1486 = vpack.c.bf16 %v1198, %v1194
  %v1487 = vpack.c.bf16 %v1389, %v1385
  %v1488 = vpack.c.bf16 %v1391, %v1387
  %v1585 = vunpack.c.l.b16 %v1393
  %v1586 = vunpack.c.l.b16 %v1394
  %v1587 = vunpack.c.l.b16 %v1395
  %v1588 = vunpack.c.l.b16 %v1396
  %v1589 = vunpack.c.l.b16 %v1397
  %v1590 = vunpack.c.l.b16 %v1398
  %v1591 = vunpack.c.h.b16 %v1393
  %v1592 = vunpack.c.h.b16 %v1394
  %v1593 = vunpack.c.h.b16 %v1395
  %v1594 = vunpack.c.h.b16 %v1396
  %v1595 = vunpack.c.h.b16 %v1397
  %v1596 = vunpack.c.h.b16 %v1398
  %v1597 = vunpack.c.l.b16 %v1399
  %v1598 = vunpack.c.l.b16 %v1400
  %v1599 = vunpack.c.l.b16 %v1401
  %v1600 = vunpack.c.l.b16 %v1402
  %v1601 = vunpack.c.l.b16 %v1403
  %v1602 = vunpack.c.l.b16 %v1404
  %v1603 = vunpack.c.h.b16 %v1399
  %v1604 = vunpack.c.h.b16 %v1400
  %v1605 = vunpack.c.h.b16 %v1401
  %v1606 = vunpack.c.h.b16 %v1402
  %v1607 = vunpack.c.h.b16 %v1403
  %v1608 = vunpack.c.h.b16 %v1404
  %v1609 = vunpack.c.l.b16 %v1405
  %v1610 = vunpack.c.l.b16 %v1406
  %v1611 = vunpack.c.l.b16 %v1407
  %v1612 = vunpack.c.l.b16 %v1408
  %v1613 = vunpack.c.l.b16 %v1409
  %v1614 = vunpack.c.l.b16 %v1410
  %v1615 = vunpack.c.h.b16 %v1405
  %v1616 = vunpack.c.h.b16 %v1406
  %v1617 = vunpack.c.h.b16 %v1407
  %v1618 = vunpack.c.h.b16 %v1408
  %v1619 = vunpack.c.h.b16 %v1409
  %v1620 = vunpack.c.h.b16 %v1410
  %v1621 = vunpack.c.l.b16 %v1411
  %v1622 = vunpack.c.l.b16 %v1412
  %v1623 = vunpack.c.l.b16 %v1413
  %v1624 = vunpack.c.l.b16 %v1414
  %v1625 = vunpack.c.l.b16 %v1415
  %v1626 = vunpack.c.l.b16 %v1416
  %v1627 = vunpack.c.h.b16 %v1411
  %v1628 = vunpack.c.h.b16 %v1412
  %v1629 = vunpack.c.h.b16 %v1413
  %v1630 = vunpack.c.h.b16 %v1414
  %v1631 = vunpack.c.h.b16 %v1415
  %v1632 = vunpack.c.h.b16 %v1416
  %v1633 = vunpack.c.l.b16 %v1417
  %v1634 = vunpack.c.l.b16 %v1418
  %v1635 = vunpack.c.l.b16 %v1419
  %v1636 = vunpack.c.l.b16 %v1420
  %v1637 = vunpack.c.l.b16 %v1421
  %v1638 = vunpack.c.l.b16 %v1422
  %v1639 = vunpack.c.h.b16 %v1417
  %v1640 = vunpack.c.h.b16 %v1418
  %v1641 = vunpack.c.h.b16 %v1419
  %v1642 = vunpack.c.h.b16 %v1420
  %v1643 = vunpack.c.h.b16 %v1421
  %v1644 = vunpack.c.h.b16 %v1422
  %v1645 = vunpack.c.l.b16 %v1423
  %v1646 = vunpack.c.l.b16 %v1424
  %v1647 = vunpack.c.l.b16 %v1425
  %v1648 = vunpack.c.l.b16 %v1426
  %v1649 = vunpack.c.l.b16 %v1427
  %v1650 = vunpack.c.l.b16 %v1428
  %v1651 = vunpack.c.h.b16 %v1423
  %v1652 = vunpack.c.h.b16 %v1424
  %v1653 = vunpack.c.h.b16 %v1425
  %v1654 = vunpack.c.h.b16 %v1426
  %v1655 = vunpack.c.h.b16 %v1427
  %v1656 = vunpack.c.h.b16 %v1428
  %v1657 = vunpack.c.l.b16 %v1429
  %v1658 = vunpack.c.l.b16 %v1430
  %v1659 = vunpack.c.l.b16 %v1431
  %v1660 = vunpack.c.l.b16 %v1432
  %v1661 = vunpack.c.l.b16 %v1433
  %v1662 = vunpack.c.l.b16 %v1434
  %v1663 = vunpack.c.h.b16 %v1429
  %v1664 = vunpack.c.h.b16 %v1430
  %v1665 = vunpack.c.h.b16 %v1431
  %v1666 = vunpack.c.h.b16 %v1432
  %v1667 = vunpack.c.h.b16 %v1433
  %v1668 = vunpack.c.h.b16 %v1434
  %v1669 = vunpack.c.l.b16 %v1435
  %v1670 = vunpack.c.l.b16 %v1436
  %v1671 = vunpack.c.l.b16 %v1437
  %v1672 = vunpack.c.l.b16 %v1438
  %v1673 = vunpack.c.l.b16 %v1439
  %v1674 = vunpack.c.l.b16 %v1440
  %v1675 = vunpack.c.h.b16 %v1435
  %v1676 = vunpack.c.h.b16 %v1436
  %v1677 = vunpack.c.h.b16 %v1437
  %v1678 = vunpack.c.h.b16 %v1438
  %v1679 = vunpack.c.h.b16 %v1439
  %v1680 = vunpack.c.h.b16 %v1440
  %v1681 = vunpack.c.l.b16 %v1441
  %v1682 = vunpack.c.l.b16 %v1442
  %v1683 = vunpack.c.l.b16 %v1443
  %v1684 = vunpack.c.l.b16 %v1444
  %v1685 = vunpack.c.l.b16 %v1445
  %v1686 = vunpack.c.l.b16 %v1446
  %v1687 = vunpack.c.h.b16 %v1441
  %v1688 = vunpack.c.h.b16 %v1442
  %v1689 = vunpack.c.h.b16 %v1443
  %v1690 = vunpack.c.h.b16 %v1444
  %v1691 = vunpack.c.h.b16 %v1445
  %v1692 = vunpack.c.h.b16 %v1446
  %v1693 = vunpack.c.l.b16 %v1447
  %v1694 = vunpack.c.l.b16 %v1448
  %v1695 = vunpack.c.l.b16 %v1449
  %v1696 = vunpack.c.l.b16 %v1450
  %v1697 = vunpack.c.l.b16 %v1451
  %v1698 = vunpack.c.l.b16 %v1452
  %v1699 = vunpack.c.h.b16 %v1447
  %v1700 = vunpack.c.h.b16 %v1448
  %v1701 = vunpack.c.h.b16 %v1449
  %v1702 = vunpack.c.h.b16 %v1450
  %v1703 = vunpack.c.h.b16 %v1451
  %v1704 = vunpack.c.h.b16 %v1452
  %v1705 = vunpack.c.l.b16 %v1453
  %v1706 = vunpack.c.l.b16 %v1454
  %v1707 = vunpack.c.l.b16 %v1455
  %v1708 = vunpack.c.l.b16 %v1456
  %v1709 = vunpack.c.l.b16 %v1457
  %v1710 = vunpack.c.l.b16 %v1458
  %v1711 = vunpack.c.h.b16 %v1453
  %v1712 = vunpack.c.h.b16 %v1454
  %v1713 = vunpack.c.h.b16 %v1455
  %v1714 = vunpack.c.h.b16 %v1456
  %v1715 = vunpack.c.h.b16 %v1457
  %v1716 = vunpack.c.h.b16 %v1458
  %v1717 = vunpack.c.l.b16 %v1459
  %v1718 = vunpack.c.l.b16 %v1460
  %v1719 = vunpack.c.l.b16 %v1461
  %v1720 = vunpack.c.l.b16 %v1462
  %v1721 = vunpack.c.l.b16 %v1463
  %v1722 = vunpack.c.l.b16 %v1464
  %v1723 = vunpack.c.h.b16 %v1459
  %v1724 = vunpack.c.h.b16 %v1460
  %v1725 = vunpack.c.h.b16 %v1461
  %v1726 = vunpack.c.h.b16 %v1462
  %v1727 = vunpack.c.h.b16 %v1463
  %v1728 = vunpack.c.h.b16 %v1464
  %v1729 = vunpack.c.l.b16 %v1465
  %v1730 = vunpack.c.l.b16 %v1466
  %v1731 = vunpack.c.l.b16 %v1467
  %v1732 = vunpack.c.l.b16 %v1468
  %v1733 = vunpack.c.l.b16 %v1469
  %v1734 = vunpack.c.l.b16 %v1470
  %v1735 = vunpack.c.h.b16 %v1465
  %v1736 = vunpack.c.h.b16 %v1466
  %v1737 = vunpack.c.h.b16 %v1467
  %v1738 = vunpack.c.h.b16 %v1468
  %v1739 = vunpack.c.h.b16 %v1469
  %v1740 = vunpack.c.h.b16 %v1470
  %v1741 = vunpack.c.l.b16 %v1471
  %v1742 = vunpack.c.l.b16 %v1472
  %v1743 = vunpack.c.l.b16 %v1473
  %v1744 = vunpack.c.l.b16 %v1474
  %v1745 = vunpack.c.l.b16 %v1475
  %v1746 = vunpack.c.l.b16 %v1476
  %v1747 = vunpack.c.h.b16 %v1471
  %v1748 = vunpack.c.h.b16 %v1472
  %v1749 = vunpack.c.h.b16 %v1473
  %v1750 = vunpack.c.h.b16 %v1474
  %v1751 = vunpack.c.h.b16 %v1475
  %v1752 = vunpack.c.h.b16 %v1476
  %v1753 = vunpack.c.l.b16 %v1477
  %v1754 = vunpack.c.l.b16 %v1478
  %v1755 = vunpack.c.l.b16 %v1479
  %v1756 = vunpack.c.l.b16 %v1480
  %v1757 = vunpack.c.l.b16 %v1481
  %v1758 = vunpack.c.l.b16 %v1482
  %v1759 = vunpack.c.h.b16 %v1477
  %v1760 = vunpack.c.h.b16 %v1478
  %v1761 = vunpack.c.h.b16 %v1479
  %v1762 = vunpack.c.h.b16 %v1480
  %v1763 = vunpack.c.h.b16 %v1481
  %v1764 = vunpack.c.h.b16 %v1482
  %v1765 = vunpack.c.l.b16 %v1483
  %v1766 = vunpack.c.l.b16 %v1484
  %v1767 = vunpack.c.l.b16 %v1485
  %v1768 = vunpack.c.l.b16 %v1486
  %v1769 = vunpack.c.l.b16 %v1487
  %v1770 = vunpack.c.l.b16 %v1488
  %v1771 = vunpack.c.h.b16 %v1483
  %v1772 = vunpack.c.h.b16 %v1484
  %v1773 = vunpack.c.h.b16 %v1485
  %v1774 = vunpack.c.h.b16 %v1486
  %v1775 = vunpack.c.h.b16 %v1487
  %v1776 = vunpack.c.h.b16 %v1488
  %v1777 = vpack.c.b16 %v1586, %v1585
  %v1778 = vpack.c.b16 %v1588, %v1587
  %v1779 = vpack.c.b16 %v1590, %v1589
  %v1780 = vpack.c.b16 %v1592, %v1591
  %v1781 = vpack.c.b16 %v1594, %v1593
  %v1782 = vpack.c.b16 %v1596, %v1595
  %v1783 = vpack.c.b16 %v1598, %v1597
  %v1784 = vpack.c.b16 %v1600, %v1599
  %v1785 = vpack.c.b16 %v1602, %v1601
  %v1786 = vpack.c.b16 %v1604, %v1603
  %v1787 = vpack.c.b16 %v1606, %v1605
  %v1788 = vpack.c.b16 %v1608, %v1607
  %v1789 = vpack.c.b16 %v1610, %v1609
  %v1790 = vpack.c.b16 %v1612, %v1611
  %v1791 = vpack.c.b16 %v1614, %v1613
  %v1792 = vpack.c.b16 %v1616, %v1615
  %v1793 = vpack.c.b16 %v1618, %v1617
  %v1794 = vpack.c.b16 %v1620, %v1619
  %v1795 = vpack.c.b16 %v1622, %v1621
  %v1796 = vpack.c.b16 %v1624, %v1623
  %v1797 = vpack.c.b16 %v1626, %v1625
  %v1798 = vpack.c.b16 %v1628, %v1627
  %v1799 = vpack.c.b16 %v1630, %v1629
  %v1800 = vpack.c.b16 %v1632, %v1631
  %v1801 = vpack.c.b16 %v1634, %v1633
  %v1802 = vpack.c.b16 %v1636, %v1635
  %v1803 = vpack.c.b16 %v1638, %v1637
  %v1804 = vpack.c.b16 %v1640, %v1639
  %v1805 = vpack.c.b16 %v1642, %v1641
  %v1806 = vpack.c.b16 %v1644, %v1643
  %v1807 = vpack.c.b16 %v1646, %v1645
  %v1808 = vpack.c.b16 %v1648, %v1647
  %v1809 = vpack.c.b16 %v1650, %v1649
  %v1810 = vpack.c.b16 %v1652, %v1651
  %v1811 = vpack.c.b16 %v1654, %v1653
  %v1812 = vpack.c.b16 %v1656, %v1655
  %v1813 = vpack.c.b16 %v1658, %v1657
  %v1814 = vpack.c.b16 %v1660, %v1659
  %v1815 = vpack.c.b16 %v1662, %v1661
  %v1816 = vpack.c.b16 %v1664, %v1663
  %v1817 = vpack.c.b16 %v1666, %v1665
  %v1818 = vpack.c.b16 %v1668, %v1667
  %v1819 = vpack.c.b16 %v1670, %v1669
  %v1820 = vpack.c.b16 %v1672, %v1671
  %v1821 = vpack.c.b16 %v1674, %v1673
  %v1822 = vpack.c.b16 %v1676, %v1675
  %v1823 = vpack.c.b16 %v1678, %v1677
  %v1824 = vpack.c.b16 %v1680, %v1679
  %v1825 = vpack.c.b16 %v1682, %v1681
  %v1826 = vpack.c.b16 %v1684, %v1683
  %v1827 = vpack.c.b16 %v1686, %v1685
  %v1828 = vpack.c.b16 %v1688, %v1687
  %v1829 = vpack.c.b16 %v1690, %v1689
  %v1830 = vpack.c.b16 %v1692, %v1691
  %v1831 = vpack.c.b16 %v1694, %v1693
  %v1832 = vpack.c.b16 %v1696, %v1695
  %v1833 = vpack.c.b16 %v1698, %v1697
  %v1834 = vpack.c.b16 %v1700, %v1699
  %v1835 = vpack.c.b16 %v1702, %v1701
  %v1836 = vpack.c.b16 %v1704, %v1703
  %v1837 = vpack.c.b16 %v1706, %v1705
  %v1838 = vpack.c.b16 %v1708, %v1707
  %v1839 = vpack.c.b16 %v1710, %v1709
  %v1840 = vpack.c.b16 %v1712, %v1711
  %v1841 = vpack.c.b16 %v1714, %v1713
  %v1842 = vpack.c.b16 %v1716, %v1715
  %v1843 = vpack.c.b16 %v1718, %v1717
  %v1844 = vpack.c.b16 %v1720, %v1719
  %v1845 = vpack.c.b16 %v1722, %v1721
  %v1846 = vpack.c.b16 %v1724, %v1723
  %v1847 = vpack.c.b16 %v1726, %v1725
  %v1848 = vpack.c.b16 %v1728, %v1727
  %v1849 = vpack.c.b16 %v1730, %v1729
  %v1850 = vpack.c.b16 %v1732, %v1731
  %v1851 = vpack.c.b16 %v1734, %v1733
  %v1852 = vpack.c.b16 %v1736, %v1735
  %v1853 = vpack.c.b16 %v1738, %v1737
  %v1854 = vpack.c.b16 %v1740, %v1739
  %v1855 = vpack.c.b16 %v1742, %v1741
  %v1856 = vpack.c.b16 %v1744, %v1743
  %v1857 = vpack.c.b16 %v1746, %v1745
  %v1858 = vpack.c.b16 %v1748, %v1747
  %v1859 = vpack.c.b16 %v1750, %v1749
  %v1860 = vpack.c.b16 %v1752, %v1751
  %v1861 = vpack.c.b16 %v1754, %v1753
  %v1862 = vpack.c.b16 %v1756, %v1755
  %v1863 = vpack.c.b16 %v1758, %v1757
  %v1864 = vpack.c.b16 %v1760, %v1759
  %v1865 = vpack.c.b16 %v1762, %v1761
  %v1866 = vpack.c.b16 %v1764, %v1763
  %v1867 = vpack.c.b16 %v1766, %v1765
  %v1868 = vpack.c.b16 %v1768, %v1767
  %v1869 = vpack.c.b16 %v1770, %v1769
  %v1870 = vpack.c.b16 %v1772, %v1771
  %v1871 = vpack.c.b16 %v1774, %v1773
  %v1872 = vpack.c.b16 %v1776, %v1775
  %1969 = vst [vmem:[%s3] sm:$0xff] %v1777
  %1970 = vst [vmem:[%s3 + $0x8] sm:$0xff] %v1778
  %1971 = vst [vmem:[%s3 + $0x10] sm:$0xff] %v1779
  %1972 = vst [vmem:[%s3 + $0x18] sm:$0xff] %v1780
  %1973 = vst [vmem:[%s3 + $0x20] sm:$0xff] %v1781
  %1974 = vst [vmem:[%s3 + $0x28] sm:$0xff] %v1782
  %1975 = vst [vmem:[%s3 + $0x30] sm:$0xff] %v1783
  %1976 = vst [vmem:[%s3 + $0x38] sm:$0xff] %v1784
  %1977 = vst [vmem:[%s3 + $0x40] sm:$0xff] %v1785
  %1978 = vst [vmem:[%s3 + $0x48] sm:$0xff] %v1786
  %1979 = vst [vmem:[%s3 + $0x50] sm:$0xff] %v1787
  %1980 = vst [vmem:[%s3 + $0x58] sm:$0xff] %v1788
  %1981 = vst [vmem:[%s3 + $0x60] sm:$0xff] %v1789
  %1982 = vst [vmem:[%s3 + $0x68] sm:$0xff] %v1790
  %1983 = vst [vmem:[%s3 + $0x70] sm:$0xff] %v1791
  %1984 = vst [vmem:[%s3 + $0x78] sm:$0xff] %v1792
  %1985 = vst [vmem:[%s3 + $0x80] sm:$0xff] %v1793
  %1986 = vst [vmem:[%s3 + $0x88] sm:$0xff] %v1794
  %1987 = vst [vmem:[%s3 + $0x90] sm:$0xff] %v1795
  %1988 = vst [vmem:[%s3 + $0x98] sm:$0xff] %v1796
  %1989 = vst [vmem:[%s3 + $0xa0] sm:$0xff] %v1797
  %1990 = vst [vmem:[%s3 + $0xa8] sm:$0xff] %v1798
  %1991 = vst [vmem:[%s3 + $0xb0] sm:$0xff] %v1799
  %1992 = vst [vmem:[%s3 + $0xb8] sm:$0xff] %v1800
  %1993 = vst [vmem:[%s3 + $0xc0] sm:$0xff] %v1801
  %1994 = vst [vmem:[%s3 + $0xc8] sm:$0xff] %v1802
  %1995 = vst [vmem:[%s3 + $0xd0] sm:$0xff] %v1803
  %1996 = vst [vmem:[%s3 + $0xd8] sm:$0xff] %v1804
  %1997 = vst [vmem:[%s3 + $0xe0] sm:$0xff] %v1805
  %1998 = vst [vmem:[%s3 + $0xe8] sm:$0xff] %v1806
  %1999 = vst [vmem:[%s3 + $0xf0] sm:$0xff] %v1807
  %2000 = vst [vmem:[%s3 + $0xf8] sm:$0xff] %v1808
  %2001 = vst [vmem:[%s3 + $0x100] sm:$0xff] %v1809
  %2002 = vst [vmem:[%s3 + $0x108] sm:$0xff] %v1810
  %2003 = vst [vmem:[%s3 + $0x110] sm:$0xff] %v1811
  %2004 = vst [vmem:[%s3 + $0x118] sm:$0xff] %v1812
  %2005 = vst [vmem:[%s3 + $0x120] sm:$0xff] %v1813
  %2006 = vst [vmem:[%s3 + $0x128] sm:$0xff] %v1814
  %2007 = vst [vmem:[%s3 + $0x130] sm:$0xff] %v1815
  %2008 = vst [vmem:[%s3 + $0x138] sm:$0xff] %v1816
  %2009 = vst [vmem:[%s3 + $0x140] sm:$0xff] %v1817
  %2010 = vst [vmem:[%s3 + $0x148] sm:$0xff] %v1818
  %2011 = vst [vmem:[%s3 + $0x150] sm:$0xff] %v1819
  %2012 = vst [vmem:[%s3 + $0x158] sm:$0xff] %v1820
  %2013 = vst [vmem:[%s3 + $0x160] sm:$0xff] %v1821
  %2014 = vst [vmem:[%s3 + $0x168] sm:$0xff] %v1822
  %2015 = vst [vmem:[%s3 + $0x170] sm:$0xff] %v1823
  %2016 = vst [vmem:[%s3 + $0x178] sm:$0xff] %v1824
  %2017 = vst [vmem:[%s3 + $0x180] sm:$0xff] %v1825
  %2018 = vst [vmem:[%s3 + $0x188] sm:$0xff] %v1826
  %2019 = vst [vmem:[%s3 + $0x190] sm:$0xff] %v1827
  %2020 = vst [vmem:[%s3 + $0x198] sm:$0xff] %v1828
  %2021 = vst [vmem:[%s3 + $0x1a0] sm:$0xff] %v1829
  %2022 = vst [vmem:[%s3 + $0x1a8] sm:$0xff] %v1830
  %2023 = vst [vmem:[%s3 + $0x1b0] sm:$0xff] %v1831
  %2024 = vst [vmem:[%s3 + $0x1b8] sm:$0xff] %v1832
  %2025 = vst [vmem:[%s3 + $0x1c0] sm:$0xff] %v1833
  %2026 = vst [vmem:[%s3 + $0x1c8] sm:$0xff] %v1834
  %2027 = vst [vmem:[%s3 + $0x1d0] sm:$0xff] %v1835
  %2028 = vst [vmem:[%s3 + $0x1d8] sm:$0xff] %v1836
  %2029 = vst [vmem:[%s3 + $0x1e0] sm:$0xff] %v1837
  %2030 = vst [vmem:[%s3 + $0x1e8] sm:$0xff] %v1838
  %2031 = vst [vmem:[%s3 + $0x1f0] sm:$0xff] %v1839
  %2032 = vst [vmem:[%s3 + $0x1f8] sm:$0xff] %v1840
  %2033 = vst [vmem:[%s3 + $0x200] sm:$0xff] %v1841
  %2034 = vst [vmem:[%s3 + $0x208] sm:$0xff] %v1842
  %2035 = vst [vmem:[%s3 + $0x210] sm:$0xff] %v1843
  %2036 = vst [vmem:[%s3 + $0x218] sm:$0xff] %v1844
  %2037 = vst [vmem:[%s3 + $0x220] sm:$0xff] %v1845
  %2038 = vst [vmem:[%s3 + $0x228] sm:$0xff] %v1846
  %2039 = vst [vmem:[%s3 + $0x230] sm:$0xff] %v1847
  %2040 = vst [vmem:[%s3 + $0x238] sm:$0xff] %v1848
  %2041 = vst [vmem:[%s3 + $0x240] sm:$0xff] %v1849
  %2042 = vst [vmem:[%s3 + $0x248] sm:$0xff] %v1850
  %2043 = vst [vmem:[%s3 + $0x250] sm:$0xff] %v1851
  %2044 = vst [vmem:[%s3 + $0x258] sm:$0xff] %v1852
  %2045 = vst [vmem:[%s3 + $0x260] sm:$0xff] %v1853
  %2046 = vst [vmem:[%s3 + $0x268] sm:$0xff] %v1854
  %2047 = vst [vmem:[%s3 + $0x270] sm:$0xff] %v1855
  %2048 = vst [vmem:[%s3 + $0x278] sm:$0xff] %v1856
  %2049 = vst [vmem:[%s3 + $0x280] sm:$0xff] %v1857
  %2050 = vst [vmem:[%s3 + $0x288] sm:$0xff] %v1858
  %2051 = vst [vmem:[%s3 + $0x290] sm:$0xff] %v1859
  %2052 = vst [vmem:[%s3 + $0x298] sm:$0xff] %v1860
  %2053 = vst [vmem:[%s3 + $0x2a0] sm:$0xff] %v1861
  %2054 = vst [vmem:[%s3 + $0x2a8] sm:$0xff] %v1862
  %2055 = vst [vmem:[%s3 + $0x2b0] sm:$0xff] %v1863
  %2056 = vst [vmem:[%s3 + $0x2b8] sm:$0xff] %v1864
  %2057 = vst [vmem:[%s3 + $0x2c0] sm:$0xff] %v1865
  %2058 = vst [vmem:[%s3 + $0x2c8] sm:$0xff] %v1866
  %2059 = vst [vmem:[%s3 + $0x2d0] sm:$0xff] %v1867
  %2060 = vst [vmem:[%s3 + $0x2d8] sm:$0xff] %v1868
  %2061 = vst [vmem:[%s3 + $0x2e0] sm:$0xff] %v1869
  %2062 = vst [vmem:[%s3 + $0x2e8] sm:$0xff] %v1870
  %2063 = vst [vmem:[%s3 + $0x2f0] sm:$0xff] %v1871
  %2064 = vst [vmem:[%s3 + $0x2f8] sm:$0xff] %v1872
  // Predicated region
  $region14: #{ernie_layout_self_attention.2} parent=0 // pred_check
    _
  $region15: #{ernie_layout_self_attention.2} parent=0 // pred_check_branch
    %2066 = sbr.rel (0) target = $region17
  $region16: #{ernie_layout_self_attention.2} parent=0 // pred_region
    _
  $region17: #{ernie_layout_self_attention.2} parent=0 // pred_fallthru
    _
  // Predicated region
  $region18: #{ernie_layout_self_attention.2} parent=0 // pred_check
    _
  $region19: #{ernie_layout_self_attention.2} parent=0 // pred_check_branch
    %2068 = sbr.rel (0) target = $region21
  $region20: #{ernie_layout_self_attention.2} parent=0 // pred_region
    _
  $region21: #{ernie_layout_self_attention.2} parent=0 // pred_fallthru
    _

</llo_original>
